<compile_context>
chip_gen: v7x
topology: tpu7x:2x2x1
jax: 0.10.0
libtpu: 0.0.40
codegen_flags: <defaults>
</compile_context>

<pallas_src>
import math

import numpy as np

import jax
import jax.numpy as jnp
from jax.experimental import pallas as pl
from jax.experimental.pallas import tpu as pltpu


# ---------------------------------------------------------------------------
# Wrapper-side operator builders (pure JAX / numpy, tiny, run outside the kernel)
# ---------------------------------------------------------------------------
def build_temporal_operator(w_conv, b_conv, c_in, c_out, T_in, Kt,
                            align_w=None, align_b=None):
    """CausalConv2d((Kt,1)) as a Toeplitz matrix with the Align residual + bias folded in.

    Row layout: [ p-half (c_out*T_out rows) | pad to 8 | q-half | pad to 8 ]
    so that both GLU halves start at sublane-aligned offsets.
    For X of shape (c_in*T_in, L) with rows ci*T_in + t:
        acc = A @ X + bias ;  GLU = acc[:half] * sigmoid(acc[half_p:half_p+half])
    """
    f32 = jnp.float32
    T_out = T_in - Kt + 1
    half = c_out * T_out
    half_p = ((half + 7) // 8) * 8

    w = w_conv.reshape(2 * c_out, c_in, Kt).astype(f32)
    shifts = jnp.stack([jnp.eye(T_out, T_in, k=k, dtype=f32) for k in range(Kt)])
    conv_part = jnp.einsum("jck,kts->jtcs", w, shifts)          # (2c_out, T_out, c_in, T_in)

    if c_in <= c_out:
        a_align = jnp.eye(c_out, c_in, dtype=f32)               # zero-pad / identity alignment
        b_align = jnp.zeros((c_out,), f32)
    else:
        if align_w is None:
            raise NotImplementedError("c_in > c_out requires the 1x1 align conv weights")
        a_align = align_w.reshape(c_out, c_in).astype(f32)
        b_align = (align_b if align_b is not None else jnp.zeros((c_out,))).astype(f32)

    res_part = jnp.einsum("jc,ts->jtcs", a_align,
                          jnp.eye(T_out, T_in, k=Kt - 1, dtype=f32))
    p_block = (conv_part[:c_out] + res_part).reshape(half, c_in * T_in)
    q_block = conv_part[c_out:].reshape(half, c_in * T_in)
    rpad = jnp.zeros((half_p - half, c_in * T_in), f32)
    A = jnp.concatenate([p_block, rpad, q_block, rpad], axis=0)   # (2*half_p, c_in*T_in)

    bias_p = jnp.repeat(b_conv[:c_out].astype(f32), T_out) + jnp.repeat(b_align, T_out)
    bias_q = jnp.repeat(b_conv[c_out:].astype(f32), T_out)
    zpad = jnp.zeros((half_p - half,), f32)
    bias = jnp.concatenate([bias_p, zpad, bias_q, zpad])
    return A, bias[:, None], half_p


def build_spatial_constants(H, W, Bt):
    """Block-diagonal pooling / gate-expansion operators, 3x3 boundary masks and the
    shared per-batch-segment mean operator, all lane-packed over Bt batch elements."""
    HW = H * W
    L = Bt * HW
    HpW = H + W

    pool = np.zeros((L, Bt * HpW), np.float32)       # [pool_h | pool_w] per batch block
    ehw = np.zeros((Bt * HpW, 2 * L), np.float32)    # [expand h-gate | expand w-gate]
    for b in range(Bt):
        for h in range(H):
            for w in range(W):
                n = b * HW + h * W + w
                pool[n, b * HpW + h] += 1.0 / W
                pool[n, b * HpW + H + w] += 1.0 / H
                ehw[b * HpW + h, n] = 1.0
                ehw[b * HpW + H + w, L + n] = 1.0

    masks = np.zeros((9, L), np.float32)             # in-bounds masks per 3x3 tap
    t = 0
    for dh in (-1, 0, 1):
        for dw in (-1, 0, 1):
            for b in range(Bt):
                for h in range(H):
                    for w in range(W):
                        if 0 <= h + dh < H and 0 <= w + dw < W:
                            masks[t, b * HW + h * W + w] = 1.0
            t += 1

    emean = np.zeros((L, L), np.float32)             # segment mean over HW lanes per batch
    for b in range(Bt):
        emean[b * HW:(b + 1) * HW, b * HW:(b + 1) * HW] = 1.0 / HW

    return (jnp.asarray(pool), jnp.asarray(ehw),
            jnp.asarray(masks), jnp.asarray(emean))


def build_w3_stack(w3_torch, Cs, CsP):
    """conv3x3 weight (Cs, Cs, 3, 3) -> stacked, row-padded (9*CsP, Cs) channel-mix matrix."""
    w3 = jnp.transpose(w3_torch, (2, 3, 0, 1)).reshape(9, Cs, Cs).astype(jnp.float32)
    if CsP != Cs:
        w3 = jnp.pad(w3, ((0, 0), (0, CsP - Cs), (0, 0)))
    return w3.reshape(9 * CsP, Cs)


def build_layernorm_constants(ln_w, ln_b, C2, T2, N, Bt):
    """Row-averaging operator (1/C2 per matching t2) plus lane-tiled affine params."""
    Ro = C2 * T2
    t_id = np.arange(Ro) % T2
    Mrow = (t_id[:, None] == t_id[None, :]).astype(np.float32) / float(C2)
    lnw_rows = jnp.tile(jnp.repeat(ln_w.T.astype(jnp.float32), T2, axis=0), (1, Bt))
    lnb_rows = jnp.tile(jnp.repeat(ln_b.T.astype(jnp.float32), T2, axis=0), (1, Bt))
    return jnp.asarray(Mrow), lnw_rows, lnb_rows


# ---------------------------------------------------------------------------
# STConvBlock forward
# ---------------------------------------------------------------------------
def st_conv_block(x, params, Kt):
    f32 = jnp.float32
    B, C_in, T0, N = x.shape
    H = math.isqrt(N)
    W = H
    assert H * W == N, "n_vertex must be a perfect square"
    HW = N

    tc1_w, tc1_b = params["tc1_w"], params["tc1_b"]
    tc2_w, tc2_b = params["tc2_w"], params["tc2_b"]
    C1 = tc1_w.shape[0] // 2
    C2 = tc2_w.shape[0] // 2
    T1 = T0 - Kt + 1
    T2 = T1 - Kt + 1
    Cs = params["sp_w1"].shape[0]
    assert tc1_w.shape[1] == C_in
    assert tc2_w.shape[1] == C1, "channels[1] must equal channels[0]"
    assert Cs == C1 * T1, "spatial channel count must equal channels[0] * T1"

    # --- lane-pack the batch: Bt elements per grid step, last dim Bt*N (>=128 when possible)
    Bt = max(1, 128 // N)
    if (Bt * N) % 128 != 0:
        Bt = B                      # single lane block; block == full array dims (still valid)
    B_pad = ((B + Bt - 1) // Bt) * Bt
    G = B_pad // Bt
    L = Bt * N

    # --- operators (all built once in the wrapper)
    A1, b1c, half1p = build_temporal_operator(tc1_w, tc1_b, C_in, C1, T0, Kt,
                                              params.get("align1_w"), params.get("align1_b"))
    A2, b2c, half2p = build_temporal_operator(tc2_w, tc2_b, C1, C2, T1, Kt,
                                              params.get("align2_w"), params.get("align2_b"))
    pool_bd, ehw, masks, emean = build_spatial_constants(H, W, Bt)
    CsP = ((Cs + 7) // 8) * 8
    w3s = build_w3_stack(params["sp_w3"], Cs, CsP)                       # (9*CsP, Cs)
    w1 = params["sp_w1"].reshape(Cs, Cs).astype(f32)                     # conv1x1 weight
    p4 = jnp.stack([params["sp_b1"], params["sp_b3"],
                    params["gn_w"], params["gn_b"]], axis=1).astype(f32)  # (Cs, 4)
    Mrow, lnw_t, lnb_t = build_layernorm_constants(params["ln_w"], params["ln_b"],
                                                   C2, T2, N, Bt)

    # --- pack input: (B, C_in, T0, N) -> (C_in*T0, B_pad*N), batch in the lane axis
    if B_pad != B:
        x = jnp.concatenate(
            [x, jnp.zeros((B_pad - B,) + x.shape[1:], x.dtype)], axis=0)
    x_packed = jnp.transpose(x, (1, 2, 0, 3)).reshape(C_in * T0, B_pad * N)

    R_in = C_in * T0
    R1 = 2 * half1p
    R2 = 2 * half2p
    Ro = C2 * T2
    taps = [(kh - 1, kw - 1) for kh in range(3) for kw in range(3)]

    # -----------------------------------------------------------------------
    # The fused kernel (one grid step == Bt lane-packed batch elements)
    # -----------------------------------------------------------------------
    def kernel(x_ref, a1_ref, b1_ref, a2_ref, b2_ref, w1_ref, w3s_ref,
               pool_ref, ehw_ref, mask_ref, em_ref, p4_ref, mrow_ref,
               lnw_ref, lnb_ref, o_ref):
        xf = x_ref[...]                                                   # (R_in, L)
        em = em_ref[...]                                                  # (L, L) segment mean

        # ---- temporal conv #1 (Toeplitz conv + aligned residual folded) + bias + GLU
        acc1 = jnp.dot(a1_ref[...], xf, preferred_element_type=f32) + b1_ref[...]
        x_sp = acc1[:Cs] * jax.nn.sigmoid(acc1[half1p:half1p + Cs])      # (Cs, L)

        p4v = p4_ref[...]
        b1 = p4v[:, 0:1]      # conv1x1 bias
        b3 = p4v[:, 1:2]      # conv3x3 bias
        gnw = p4v[:, 2:3]     # GroupNorm weight
        gnb = p4v[:, 3:4]     # GroupNorm bias

        # ---- directional pooling + shared 1x1 conv + sigmoid gates (one fused expansion)
        pooled = jnp.dot(x_sp, pool_ref[...], preferred_element_type=f32)  # (Cs, Bt*(H+W))
        g = jax.nn.sigmoid(jnp.dot(w1_ref[...], pooled,
                                   preferred_element_type=f32) + b1)
        ghw = jnp.dot(g, ehw_ref[...], preferred_element_type=f32)         # (Cs, 2L)
        gated = x_sp * ghw[:, :L] * ghw[:, L:]

        # ---- GroupNorm(num_groups = Cs): per-channel, per-batch-block stats over HW lanes
        mu = jnp.dot(gated, em, preferred_element_type=f32)
        d = gated - mu
        var = jnp.dot(d * d, em, preferred_element_type=f32)
        x1 = d * jax.lax.rsqrt(var + 1e-5) * gnw + gnb

        # ---- 3x3 conv (padding=1): ONE channel-mix matmul, taps via roll + boundary masks
        U = jnp.dot(w3s_ref[...], x_sp, preferred_element_type=f32)        # (9*CsP, L)
        m9 = mask_ref[...]                                                  # (9, L)
        x2p = None
        for t, (dh, dw) in enumerate(taps):
            s = dh * W + dw
            u = U[t * CsP:(t + 1) * CsP]
            if s != 0:
                u = pltpu.roll(u, shift=(-s) % L, axis=1)                   # out[n] = in[n+s]
            term = u * m9[t:t + 1, :]
            x2p = term if x2p is None else x2p + term
        x2 = x2p[:Cs] + b3                                                  # (Cs, L)

        # ---- cross-branch channel attention (softmax over channels of pooled branches)
        v1 = jnp.dot(x1, em, preferred_element_type=f32)   # per-batch channel means (bcast)
        v2 = jnp.dot(x2, em, preferred_element_type=f32)

        def _csoft(v):                                     # softmax over rows per lane column
            e = jnp.exp(v - jnp.max(v, axis=0, keepdims=True))
            return e * pl.reciprocal(jnp.sum(e, axis=0, keepdims=True), approx=True)

        att1 = _csoft(v1)
        att2 = _csoft(v2)
        w_att = jnp.sum(att1 * x2 + att2 * x1, axis=0, keepdims=True)       # (1, L)
        sp_out = jnp.maximum(x_sp * jax.nn.sigmoid(w_att), 0.0)             # ReLU fused

        # ---- temporal conv #2 + bias + GLU
        acc2 = jnp.dot(a2_ref[...], sp_out, preferred_element_type=f32) + b2_ref[...]
        y = acc2[:Ro] * jax.nn.sigmoid(acc2[half2p:half2p + Ro])            # (Ro, L)

        # ---- LayerNorm([n_vertex, C2]): stats over (C2, N) per (batch block, t2), one-pass
        yy = jnp.concatenate([y, y * y], axis=0)                             # (2*Ro, L)
        emed = jnp.dot(yy, em, preferred_element_type=f32)
        mrow = mrow_ref[...]
        mu_ln = jnp.dot(mrow, emed[:Ro], preferred_element_type=f32)
        ex2 = jnp.dot(mrow, emed[Ro:], preferred_element_type=f32)
        var_ln = jnp.maximum(ex2 - mu_ln * mu_ln, 0.0)
        y = (y - mu_ln) * jax.lax.rsqrt(var_ln + 1e-5)
        o_ref[...] = (y * lnw_ref[...] + lnb_ref[...]).astype(o_ref.dtype)

    # -----------------------------------------------------------------------
    grid_spec = pltpu.PrefetchScalarGridSpec(
        num_scalar_prefetch=0,
        grid=(G,),
        in_specs=[
            pl.BlockSpec((R_in, L), lambda g: (0, g)),                 # x (lane-blocked)
            pl.BlockSpec((R1, R_in), lambda g: (0, 0)),                # A1
            pl.BlockSpec((R1, 1), lambda g: (0, 0)),                   # b1c
            pl.BlockSpec((R2, Cs), lambda g: (0, 0)),                  # A2
            pl.BlockSpec((R2, 1), lambda g: (0, 0)),                   # b2c
            pl.BlockSpec((Cs, Cs), lambda g: (0, 0)),                  # conv1x1 weight
            pl.BlockSpec((9 * CsP, Cs), lambda g: (0, 0)),             # stacked conv3x3 weight
            pl.BlockSpec((L, Bt * (H + W)), lambda g: (0, 0)),         # directional pooling
            pl.BlockSpec((Bt * (H + W), 2 * L), lambda g: (0, 0)),     # gate expansion
            pl.BlockSpec((9, L), lambda g: (0, 0)),                    # 3x3 boundary masks
            pl.BlockSpec((L, L), lambda g: (0, 0)),                    # segment mean operator
            pl.BlockSpec((Cs, 4), lambda g: (0, 0)),                   # per-channel params
            pl.BlockSpec((Ro, Ro), lambda g: (0, 0)),                  # LayerNorm row-average
            pl.BlockSpec((Ro, L), lambda g: (0, 0)),                   # LayerNorm weight
            pl.BlockSpec((Ro, L), lambda g: (0, 0)),                   # LayerNorm bias
        ],
        out_specs=pl.BlockSpec((Ro, L), lambda g: (0, g)),
    )

    out2d = pl.pallas_call(
        kernel,
        out_shape=jax.ShapeDtypeStruct((Ro, B_pad * N), x.dtype),
        grid_spec=grid_spec,
        compiler_params=pltpu.CompilerParams(dimension_semantics=("parallel",)),
    )(x_packed.astype(f32), A1, b1c, A2, b2c, w1, w3s, pool_bd, ehw, masks,
      emean, p4, Mrow, lnw_t, lnb_t)

    # TODO(synk): nn.Dropout treated as identity (inference semantics).
    out = jnp.transpose(out2d.reshape(C2, T2, B_pad, N), (2, 0, 1, 3))[:B]
    return out


# ---------------------------------------------------------------------------
if __name__ == "__main__":
    Kt = 3
    n_vertex = 16                       # viewed as H x W = 4 x 4
    last_block_channel = 2
    channels = [4, 4, 8]                # channels[1] must equal channels[0] (module constraint)
    B = 16                              # lane-packed 8 per grid step -> 2 parallel grid steps
    T_in = 13 + (Kt - 1)                # spatial layer requires C*T == channels[0]*13 after conv1
    Cs = channels[0] * 13               # spatial-layer channel count

    key = jax.random.PRNGKey(0)
    ks = jax.random.split(key, 10)

    def init(kk, shape, scale=0.1):
        return (scale * jax.random.normal(kk, shape)).astype(jnp.float32)

    # Parameters kept in PyTorch layouts; the wrapper re-lays them out for the kernel.
    params = {
        "tc1_w": init(ks[0], (2 * channels[0], last_block_channel, Kt, 1)),
        "tc1_b": init(ks[1], (2 * channels[0],)),
        "sp_w1": init(ks[2], (Cs, Cs, 1, 1)),
        "sp_b1": init(ks[3], (Cs,)),
        "sp_w3": init(ks[4], (Cs, Cs, 3, 3), scale=0.05),
        "sp_b3": init(ks[5], (Cs,)),
        "gn_w": jnp.ones((Cs,), jnp.float32),                      # GroupNorm default affine
        "gn_b": jnp.zeros((Cs,), jnp.float32),
        "tc2_w": init(ks[6], (2 * channels[2], channels[1], Kt, 1)),
        "tc2_b": init(ks[7], (2 * channels[2],)),
        "ln_w": jnp.ones((n_vertex, channels[2]), jnp.float32),    # LayerNorm default affine
        "ln_b": jnp.zeros((n_vertex, channels[2]), jnp.float32),
    }

    x = jax.random.normal(ks[8], (B, last_block_channel, T_in, n_vertex), jnp.float32)

    y = st_conv_block(x, params, Kt)
    y = jax.block_until_ready(y)
    assert y.shape == (B, channels[2], T_in - 2 * (Kt - 1), n_vertex), y.shape
    assert bool(jnp.all(jnp.isfinite(y)))
    print("KERNEL_OK")
</pallas_src>

<mosaic_0001>
module attributes {stable_mosaic.version = 11 : i64} {
  func.func @kernel(%arg0: i32, %arg1: memref<30x128xf32, #tpu.memory_space<vmem>>, %arg2: memref<112x30xf32, #tpu.memory_space<vmem>>, %arg3: memref<112x1xf32, #tpu.memory_space<vmem>>, %arg4: memref<176x52xf32, #tpu.memory_space<vmem>>, %arg5: memref<176x1xf32, #tpu.memory_space<vmem>>, %arg6: memref<52x52xf32, #tpu.memory_space<vmem>>, %arg7: memref<504x52xf32, #tpu.memory_space<vmem>>, %arg8: memref<128x64xf32, #tpu.memory_space<vmem>>, %arg9: memref<64x256xf32, #tpu.memory_space<vmem>>, %arg10: memref<9x128xf32, #tpu.memory_space<vmem>>, %arg11: memref<128x128xf32, #tpu.memory_space<vmem>>, %arg12: memref<52x4xf32, #tpu.memory_space<vmem>>, %arg13: memref<88x88xf32, #tpu.memory_space<vmem>>, %arg14: memref<88x128xf32, #tpu.memory_space<vmem>>, %arg15: memref<88x128xf32, #tpu.memory_space<vmem>>, %arg16: memref<88x128xf32, #tpu.memory_space<vmem>>) attributes {dimension_semantics = [#tpu.dimension_semantics<parallel>], iteration_bounds = array<i64: 2>, scalar_prefetch = 0 : i64, scratch_operands = 0 : i64, tpu.core_type = #tpu.core_type<tc>, window_params = [{transform_indices = @transform_0, window_bounds = array<i64: 30, 128>}, {pipeline_mode = #tpu.pipeline_mode<synchronous>, transform_indices = @transform_1, window_bounds = array<i64: 112, 30>}, {pipeline_mode = #tpu.pipeline_mode<synchronous>, transform_indices = @transform_2, window_bounds = array<i64: 112, 1>}, {pipeline_mode = #tpu.pipeline_mode<synchronous>, transform_indices = @transform_3, window_bounds = array<i64: 176, 52>}, {pipeline_mode = #tpu.pipeline_mode<synchronous>, transform_indices = @transform_4, window_bounds = array<i64: 176, 1>}, {pipeline_mode = #tpu.pipeline_mode<synchronous>, transform_indices = @transform_5, window_bounds = array<i64: 52, 52>}, {pipeline_mode = #tpu.pipeline_mode<synchronous>, transform_indices = @transform_6, window_bounds = array<i64: 504, 52>}, {pipeline_mode = #tpu.pipeline_mode<synchronous>, transform_indices = @transform_7, window_bounds = array<i64: 128, 64>}, {pipeline_mode = #tpu.pipeline_mode<synchronous>, transform_indices = @transform_8, window_bounds = array<i64: 64, 256>}, {pipeline_mode = #tpu.pipeline_mode<synchronous>, transform_indices = @transform_9, window_bounds = array<i64: 9, 128>}, {pipeline_mode = #tpu.pipeline_mode<synchronous>, transform_indices = @transform_10, window_bounds = array<i64: 128, 128>}, {pipeline_mode = #tpu.pipeline_mode<synchronous>, transform_indices = @transform_11, window_bounds = array<i64: 52, 4>}, {pipeline_mode = #tpu.pipeline_mode<synchronous>, transform_indices = @transform_12, window_bounds = array<i64: 88, 88>}, {pipeline_mode = #tpu.pipeline_mode<synchronous>, transform_indices = @transform_13, window_bounds = array<i64: 88, 128>}, {pipeline_mode = #tpu.pipeline_mode<synchronous>, transform_indices = @transform_14, window_bounds = array<i64: 88, 128>}, {transform_indices = @transform_15, window_bounds = array<i64: 88, 128>}]} {
    %c0 = arith.constant 0 : index
    %c0_0 = arith.constant 0 : index
    %0 = vector.load %arg1[%c0, %c0_0] : memref<30x128xf32, #tpu.memory_space<vmem>>, vector<30x128xf32>
    %c0_1 = arith.constant 0 : index
    %c0_2 = arith.constant 0 : index
    %1 = vector.load %arg11[%c0_1, %c0_2] : memref<128x128xf32, #tpu.memory_space<vmem>>, vector<128x128xf32>
    %c0_3 = arith.constant 0 : index
    %c0_4 = arith.constant 0 : index
    %2 = vector.load %arg2[%c0_3, %c0_4] : memref<112x30xf32, #tpu.memory_space<vmem>>, vector<112x30xf32>
    %cst = arith.constant dense<0.000000e+00> : vector<112x128xf32>
    %3 = tpu.matmul %2, %0, %cst {dimension_numbers = #tpu.dot_dimension_numbers<[1], [0], [0], [1], [0, 0, 1, 1], [], []>} : vector<112x30xf32>, vector<30x128xf32>, vector<112x128xf32> -> vector<112x128xf32>
    %c0_5 = arith.constant 0 : index
    %c0_6 = arith.constant 0 : index
    %4 = vector.load %arg3[%c0_5, %c0_6] : memref<112x1xf32, #tpu.memory_space<vmem>>, vector<112x1xf32>
    %5 = vector.broadcast %4 : vector<112x1xf32> to vector<112x128xf32>
    %6 = arith.addf %3, %5 : vector<112x128xf32>
    %7 = vector.extract_strided_slice %6 {offsets = [0, 0], sizes = [52, 128], strides = [1, 1]} : vector<112x128xf32> to vector<52x128xf32>
    %8 = vector.extract_strided_slice %6 {offsets = [56, 0], sizes = [52, 128], strides = [1, 1]} : vector<112x128xf32> to vector<52x128xf32>
    %9 = arith.negf %8 : vector<52x128xf32>
    %10 = math.exp %9 : vector<52x128xf32>
    %cst_7 = arith.constant 1.000000e+00 : f32
    %11 = vector.broadcast %cst_7 : f32 to vector<52x128xf32>
    %12 = arith.addf %11, %10 : vector<52x128xf32>
    %13 = arith.divf %11, %12 : vector<52x128xf32>
    %14 = arith.mulf %7, %13 : vector<52x128xf32>
    %c0_8 = arith.constant 0 : index
    %c0_9 = arith.constant 0 : index
    %15 = vector.load %arg12[%c0_8, %c0_9] : memref<52x4xf32, #tpu.memory_space<vmem>>, vector<52x4xf32>
    %16 = vector.extract_strided_slice %15 {offsets = [0, 0], sizes = [52, 1], strides = [1, 1]} : vector<52x4xf32> to vector<52x1xf32>
    %17 = vector.extract_strided_slice %15 {offsets = [0, 1], sizes = [52, 1], strides = [1, 1]} : vector<52x4xf32> to vector<52x1xf32>
    %18 = vector.extract_strided_slice %15 {offsets = [0, 2], sizes = [52, 1], strides = [1, 1]} : vector<52x4xf32> to vector<52x1xf32>
    %19 = vector.extract_strided_slice %15 {offsets = [0, 3], sizes = [52, 1], strides = [1, 1]} : vector<52x4xf32> to vector<52x1xf32>
    %c0_10 = arith.constant 0 : index
    %c0_11 = arith.constant 0 : index
    %20 = vector.load %arg8[%c0_10, %c0_11] : memref<128x64xf32, #tpu.memory_space<vmem>>, vector<128x64xf32>
    %cst_12 = arith.constant dense<0.000000e+00> : vector<52x64xf32>
    %21 = tpu.matmul %14, %20, %cst_12 {dimension_numbers = #tpu.dot_dimension_numbers<[1], [0], [0], [1], [0, 0, 1, 1], [], []>} : vector<52x128xf32>, vector<128x64xf32>, vector<52x64xf32> -> vector<52x64xf32>
    %c0_13 = arith.constant 0 : index
    %c0_14 = arith.constant 0 : index
    %22 = vector.load %arg6[%c0_13, %c0_14] : memref<52x52xf32, #tpu.memory_space<vmem>>, vector<52x52xf32>
    %cst_15 = arith.constant dense<0.000000e+00> : vector<52x64xf32>
    %23 = tpu.matmul %22, %21, %cst_15 {dimension_numbers = #tpu.dot_dimension_numbers<[1], [0], [0], [1], [0, 0, 1, 1], [], []>} : vector<52x52xf32>, vector<52x64xf32>, vector<52x64xf32> -> vector<52x64xf32>
    %24 = vector.broadcast %16 : vector<52x1xf32> to vector<52x64xf32>
    %25 = arith.addf %23, %24 : vector<52x64xf32>
    %26 = arith.negf %25 : vector<52x64xf32>
    %27 = math.exp %26 : vector<52x64xf32>
    %cst_16 = arith.constant 1.000000e+00 : f32
    %28 = vector.broadcast %cst_16 : f32 to vector<52x64xf32>
    %29 = arith.addf %28, %27 : vector<52x64xf32>
    %30 = arith.divf %28, %29 : vector<52x64xf32>
    %c0_17 = arith.constant 0 : index
    %c0_18 = arith.constant 0 : index
    %31 = vector.load %arg9[%c0_17, %c0_18] : memref<64x256xf32, #tpu.memory_space<vmem>>, vector<64x256xf32>
    %cst_19 = arith.constant dense<0.000000e+00> : vector<52x256xf32>
    %32 = tpu.matmul %30, %31, %cst_19 {dimension_numbers = #tpu.dot_dimension_numbers<[1], [0], [0], [1], [0, 0, 1, 1], [], []>} : vector<52x64xf32>, vector<64x256xf32>, vector<52x256xf32> -> vector<52x256xf32>
    %33 = vector.extract_strided_slice %32 {offsets = [0, 0], sizes = [52, 128], strides = [1, 1]} : vector<52x256xf32> to vector<52x128xf32>
    %34 = arith.mulf %14, %33 : vector<52x128xf32>
    %35 = vector.extract_strided_slice %32 {offsets = [0, 128], sizes = [52, 128], strides = [1, 1]} : vector<52x256xf32> to vector<52x128xf32>
    %36 = arith.mulf %34, %35 : vector<52x128xf32>
    %cst_20 = arith.constant dense<0.000000e+00> : vector<52x128xf32>
    %37 = tpu.matmul %36, %1, %cst_20 {dimension_numbers = #tpu.dot_dimension_numbers<[1], [0], [0], [1], [0, 0, 1, 1], [], []>} : vector<52x128xf32>, vector<128x128xf32>, vector<52x128xf32> -> vector<52x128xf32>
    %38 = arith.subf %36, %37 : vector<52x128xf32>
    %39 = arith.mulf %38, %38 : vector<52x128xf32>
    %cst_21 = arith.constant dense<0.000000e+00> : vector<52x128xf32>
    %40 = tpu.matmul %39, %1, %cst_21 {dimension_numbers = #tpu.dot_dimension_numbers<[1], [0], [0], [1], [0, 0, 1, 1], [], []>} : vector<52x128xf32>, vector<128x128xf32>, vector<52x128xf32> -> vector<52x128xf32>
    %cst_22 = arith.constant 9.99999974E-6 : f32
    %41 = vector.broadcast %cst_22 : f32 to vector<52x128xf32>
    %42 = arith.addf %40, %41 : vector<52x128xf32>
    %43 = math.rsqrt %42 : vector<52x128xf32>
    %44 = arith.mulf %38, %43 : vector<52x128xf32>
    %45 = vector.broadcast %18 : vector<52x1xf32> to vector<52x128xf32>
    %46 = arith.mulf %44, %45 : vector<52x128xf32>
    %47 = vector.broadcast %19 : vector<52x1xf32> to vector<52x128xf32>
    %48 = arith.addf %46, %47 : vector<52x128xf32>
    %c0_23 = arith.constant 0 : index
    %c0_24 = arith.constant 0 : index
    %49 = vector.load %arg7[%c0_23, %c0_24] : memref<504x52xf32, #tpu.memory_space<vmem>>, vector<504x52xf32>
    %cst_25 = arith.constant dense<0.000000e+00> : vector<504x128xf32>
    %50 = tpu.matmul %49, %14, %cst_25 {dimension_numbers = #tpu.dot_dimension_numbers<[1], [0], [0], [1], [0, 0, 1, 1], [], []>} : vector<504x52xf32>, vector<52x128xf32>, vector<504x128xf32> -> vector<504x128xf32>
    %c0_26 = arith.constant 0 : index
    %c0_27 = arith.constant 0 : index
    %51 = vector.load %arg10[%c0_26, %c0_27] : memref<9x128xf32, #tpu.memory_space<vmem>>, vector<9x128xf32>
    %52 = vector.extract_strided_slice %50 {offsets = [0, 0], sizes = [56, 128], strides = [1, 1]} : vector<504x128xf32> to vector<56x128xf32>
    %c5_i32 = arith.constant 5 : i32
    %53 = tpu.dynamic_rotate %52 by %c5_i32 dim 1 : vector<56x128xf32>, i32 -> vector<56x128xf32>
    %54 = vector.extract_strided_slice %51 {offsets = [0, 0], sizes = [1, 128], strides = [1, 1]} : vector<9x128xf32> to vector<1x128xf32>
    %55 = vector.broadcast %54 : vector<1x128xf32> to vector<56x128xf32>
    %56 = arith.mulf %53, %55 : vector<56x128xf32>
    %57 = vector.extract_strided_slice %50 {offsets = [56, 0], sizes = [56, 128], strides = [1, 1]} : vector<504x128xf32> to vector<56x128xf32>
    %c4_i32 = arith.constant 4 : i32
    %58 = tpu.dynamic_rotate %57 by %c4_i32 dim 1 : vector<56x128xf32>, i32 -> vector<56x128xf32>
    %59 = vector.extract_strided_slice %51 {offsets = [1, 0], sizes = [1, 128], strides = [1, 1]} : vector<9x128xf32> to vector<1x128xf32>
    %60 = vector.broadcast %59 : vector<1x128xf32> to vector<56x128xf32>
    %61 = arith.mulf %58, %60 : vector<56x128xf32>
    %62 = arith.addf %56, %61 : vector<56x128xf32>
    %63 = vector.extract_strided_slice %50 {offsets = [112, 0], sizes = [56, 128], strides = [1, 1]} : vector<504x128xf32> to vector<56x128xf32>
    %c3_i32 = arith.constant 3 : i32
    %64 = tpu.dynamic_rotate %63 by %c3_i32 dim 1 : vector<56x128xf32>, i32 -> vector<56x128xf32>
    %65 = vector.extract_strided_slice %51 {offsets = [2, 0], sizes = [1, 128], strides = [1, 1]} : vector<9x128xf32> to vector<1x128xf32>
    %66 = vector.broadcast %65 : vector<1x128xf32> to vector<56x128xf32>
    %67 = arith.mulf %64, %66 : vector<56x128xf32>
    %68 = arith.addf %62, %67 : vector<56x128xf32>
    %69 = vector.extract_strided_slice %50 {offsets = [168, 0], sizes = [56, 128], strides = [1, 1]} : vector<504x128xf32> to vector<56x128xf32>
    %c1_i32 = arith.constant 1 : i32
    %70 = tpu.dynamic_rotate %69 by %c1_i32 dim 1 : vector<56x128xf32>, i32 -> vector<56x128xf32>
    %71 = vector.extract_strided_slice %51 {offsets = [3, 0], sizes = [1, 128], strides = [1, 1]} : vector<9x128xf32> to vector<1x128xf32>
    %72 = vector.broadcast %71 : vector<1x128xf32> to vector<56x128xf32>
    %73 = arith.mulf %70, %72 : vector<56x128xf32>
    %74 = arith.addf %68, %73 : vector<56x128xf32>
    %75 = vector.extract_strided_slice %50 {offsets = [224, 0], sizes = [56, 128], strides = [1, 1]} : vector<504x128xf32> to vector<56x128xf32>
    %76 = vector.extract_strided_slice %51 {offsets = [4, 0], sizes = [1, 128], strides = [1, 1]} : vector<9x128xf32> to vector<1x128xf32>
    %77 = vector.broadcast %76 : vector<1x128xf32> to vector<56x128xf32>
    %78 = arith.mulf %75, %77 : vector<56x128xf32>
    %79 = arith.addf %74, %78 : vector<56x128xf32>
    %80 = vector.extract_strided_slice %50 {offsets = [280, 0], sizes = [56, 128], strides = [1, 1]} : vector<504x128xf32> to vector<56x128xf32>
    %c127_i32 = arith.constant 127 : i32
    %81 = tpu.dynamic_rotate %80 by %c127_i32 dim 1 : vector<56x128xf32>, i32 -> vector<56x128xf32>
    %82 = vector.extract_strided_slice %51 {offsets = [5, 0], sizes = [1, 128], strides = [1, 1]} : vector<9x128xf32> to vector<1x128xf32>
    %83 = vector.broadcast %82 : vector<1x128xf32> to vector<56x128xf32>
    %84 = arith.mulf %81, %83 : vector<56x128xf32>
    %85 = arith.addf %79, %84 : vector<56x128xf32>
    %86 = vector.extract_strided_slice %50 {offsets = [336, 0], sizes = [56, 128], strides = [1, 1]} : vector<504x128xf32> to vector<56x128xf32>
    %c125_i32 = arith.constant 125 : i32
    %87 = tpu.dynamic_rotate %86 by %c125_i32 dim 1 : vector<56x128xf32>, i32 -> vector<56x128xf32>
    %88 = vector.extract_strided_slice %51 {offsets = [6, 0], sizes = [1, 128], strides = [1, 1]} : vector<9x128xf32> to vector<1x128xf32>
    %89 = vector.broadcast %88 : vector<1x128xf32> to vector<56x128xf32>
    %90 = arith.mulf %87, %89 : vector<56x128xf32>
    %91 = arith.addf %85, %90 : vector<56x128xf32>
    %92 = vector.extract_strided_slice %50 {offsets = [392, 0], sizes = [56, 128], strides = [1, 1]} : vector<504x128xf32> to vector<56x128xf32>
    %c124_i32 = arith.constant 124 : i32
    %93 = tpu.dynamic_rotate %92 by %c124_i32 dim 1 : vector<56x128xf32>, i32 -> vector<56x128xf32>
    %94 = vector.extract_strided_slice %51 {offsets = [7, 0], sizes = [1, 128], strides = [1, 1]} : vector<9x128xf32> to vector<1x128xf32>
    %95 = vector.broadcast %94 : vector<1x128xf32> to vector<56x128xf32>
    %96 = arith.mulf %93, %95 : vector<56x128xf32>
    %97 = arith.addf %91, %96 : vector<56x128xf32>
    %98 = vector.extract_strided_slice %50 {offsets = [448, 0], sizes = [56, 128], strides = [1, 1]} : vector<504x128xf32> to vector<56x128xf32>
    %c123_i32 = arith.constant 123 : i32
    %99 = tpu.dynamic_rotate %98 by %c123_i32 dim 1 : vector<56x128xf32>, i32 -> vector<56x128xf32>
    %100 = vector.extract_strided_slice %51 {offsets = [8, 0], sizes = [1, 128], strides = [1, 1]} : vector<9x128xf32> to vector<1x128xf32>
    %101 = vector.broadcast %100 : vector<1x128xf32> to vector<56x128xf32>
    %102 = arith.mulf %99, %101 : vector<56x128xf32>
    %103 = arith.addf %97, %102 : vector<56x128xf32>
    %104 = vector.extract_strided_slice %103 {offsets = [0, 0], sizes = [52, 128], strides = [1, 1]} : vector<56x128xf32> to vector<52x128xf32>
    %105 = vector.broadcast %17 : vector<52x1xf32> to vector<52x128xf32>
    %106 = arith.addf %104, %105 : vector<52x128xf32>
    %cst_28 = arith.constant dense<0.000000e+00> : vector<52x128xf32>
    %107 = tpu.matmul %48, %1, %cst_28 {dimension_numbers = #tpu.dot_dimension_numbers<[1], [0], [0], [1], [0, 0, 1, 1], [], []>} : vector<52x128xf32>, vector<128x128xf32>, vector<52x128xf32> -> vector<52x128xf32>
    %cst_29 = arith.constant dense<0.000000e+00> : vector<52x128xf32>
    %108 = tpu.matmul %106, %1, %cst_29 {dimension_numbers = #tpu.dot_dimension_numbers<[1], [0], [0], [1], [0, 0, 1, 1], [], []>} : vector<52x128xf32>, vector<128x128xf32>, vector<52x128xf32> -> vector<52x128xf32>
    %cst_30 = arith.constant dense<0xFF800000> : vector<128xf32>
    %109 = vector.multi_reduction <maximumf>, %107, %cst_30 [0] : vector<52x128xf32> to vector<128xf32>
    %110 = vector.shape_cast %109 : vector<128xf32> to vector<1x128xf32>
    %111 = vector.broadcast %110 : vector<1x128xf32> to vector<52x128xf32>
    %112 = arith.subf %107, %111 : vector<52x128xf32>
    %113 = math.exp %112 : vector<52x128xf32>
    %cst_31 = arith.constant dense<0.000000e+00> : vector<128xf32>
    %114 = vector.multi_reduction <add>, %113, %cst_31 [0] : vector<52x128xf32> to vector<128xf32>
    %115 = vector.shape_cast %114 : vector<128xf32> to vector<1x128xf32>
    %116 = tpu.reciprocal %115 {approx = true} : vector<1x128xf32> -> vector<1x128xf32>
    %117 = vector.broadcast %116 : vector<1x128xf32> to vector<52x128xf32>
    %118 = arith.mulf %113, %117 : vector<52x128xf32>
    %cst_32 = arith.constant dense<0xFF800000> : vector<128xf32>
    %119 = vector.multi_reduction <maximumf>, %108, %cst_32 [0] : vector<52x128xf32> to vector<128xf32>
    %120 = vector.shape_cast %119 : vector<128xf32> to vector<1x128xf32>
    %121 = vector.broadcast %120 : vector<1x128xf32> to vector<52x128xf32>
    %122 = arith.subf %108, %121 : vector<52x128xf32>
    %123 = math.exp %122 : vector<52x128xf32>
    %cst_33 = arith.constant dense<0.000000e+00> : vector<128xf32>
    %124 = vector.multi_reduction <add>, %123, %cst_33 [0] : vector<52x128xf32> to vector<128xf32>
    %125 = vector.shape_cast %124 : vector<128xf32> to vector<1x128xf32>
    %126 = tpu.reciprocal %125 {approx = true} : vector<1x128xf32> -> vector<1x128xf32>
    %127 = vector.broadcast %126 : vector<1x128xf32> to vector<52x128xf32>
    %128 = arith.mulf %123, %127 : vector<52x128xf32>
    %129 = arith.mulf %118, %106 : vector<52x128xf32>
    %130 = arith.mulf %128, %48 : vector<52x128xf32>
    %131 = arith.addf %129, %130 : vector<52x128xf32>
    %cst_34 = arith.constant dense<0.000000e+00> : vector<128xf32>
    %132 = vector.multi_reduction <add>, %131, %cst_34 [0] : vector<52x128xf32> to vector<128xf32>
    %133 = vector.shape_cast %132 : vector<128xf32> to vector<1x128xf32>
    %134 = arith.negf %133 : vector<1x128xf32>
    %135 = math.exp %134 : vector<1x128xf32>
    %cst_35 = arith.constant 1.000000e+00 : f32
    %136 = vector.broadcast %cst_35 : f32 to vector<1x128xf32>
    %137 = arith.addf %136, %135 : vector<1x128xf32>
    %138 = arith.divf %136, %137 : vector<1x128xf32>
    %139 = vector.broadcast %138 : vector<1x128xf32> to vector<52x128xf32>
    %140 = arith.mulf %14, %139 : vector<52x128xf32>
    %cst_36 = arith.constant 0.000000e+00 : f32
    %141 = vector.broadcast %cst_36 : f32 to vector<52x128xf32>
    %142 = arith.maximumf %140, %141 : vector<52x128xf32>
    %c0_37 = arith.constant 0 : index
    %c0_38 = arith.constant 0 : index
    %143 = vector.load %arg4[%c0_37, %c0_38] : memref<176x52xf32, #tpu.memory_space<vmem>>, vector<176x52xf32>
    %cst_39 = arith.constant dense<0.000000e+00> : vector<176x128xf32>
    %144 = tpu.matmul %143, %142, %cst_39 {dimension_numbers = #tpu.dot_dimension_numbers<[1], [0], [0], [1], [0, 0, 1, 1], [], []>} : vector<176x52xf32>, vector<52x128xf32>, vector<176x128xf32> -> vector<176x128xf32>
    %c0_40 = arith.constant 0 : index
    %c0_41 = arith.constant 0 : index
    %145 = vector.load %arg5[%c0_40, %c0_41] : memref<176x1xf32, #tpu.memory_space<vmem>>, vector<176x1xf32>
    %146 = vector.broadcast %145 : vector<176x1xf32> to vector<176x128xf32>
    %147 = arith.addf %144, %146 : vector<176x128xf32>
    %148 = vector.extract_strided_slice %147 {offsets = [0, 0], sizes = [88, 128], strides = [1, 1]} : vector<176x128xf32> to vector<88x128xf32>
    %149 = vector.extract_strided_slice %147 {offsets = [88, 0], sizes = [88, 128], strides = [1, 1]} : vector<176x128xf32> to vector<88x128xf32>
    %150 = arith.negf %149 : vector<88x128xf32>
    %151 = math.exp %150 : vector<88x128xf32>
    %cst_42 = arith.constant 1.000000e+00 : f32
    %152 = vector.broadcast %cst_42 : f32 to vector<88x128xf32>
    %153 = arith.addf %152, %151 : vector<88x128xf32>
    %154 = arith.divf %152, %153 : vector<88x128xf32>
    %155 = arith.mulf %148, %154 : vector<88x128xf32>
    %156 = arith.mulf %155, %155 : vector<88x128xf32>
    %157 = tpu.concatenate %155, %156 in 0 : vector<88x128xf32>, vector<88x128xf32> -> vector<176x128xf32>
    %cst_43 = arith.constant dense<0.000000e+00> : vector<176x128xf32>
    %158 = tpu.matmul %157, %1, %cst_43 {dimension_numbers = #tpu.dot_dimension_numbers<[1], [0], [0], [1], [0, 0, 1, 1], [], []>} : vector<176x128xf32>, vector<128x128xf32>, vector<176x128xf32> -> vector<176x128xf32>
    %c0_44 = arith.constant 0 : index
    %c0_45 = arith.constant 0 : index
    %159 = vector.load %arg13[%c0_44, %c0_45] : memref<88x88xf32, #tpu.memory_space<vmem>>, vector<88x88xf32>
    %160 = vector.extract_strided_slice %158 {offsets = [0, 0], sizes = [88, 128], strides = [1, 1]} : vector<176x128xf32> to vector<88x128xf32>
    %cst_46 = arith.constant dense<0.000000e+00> : vector<88x128xf32>
    %161 = tpu.matmul %159, %160, %cst_46 {dimension_numbers = #tpu.dot_dimension_numbers<[1], [0], [0], [1], [0, 0, 1, 1], [], []>} : vector<88x88xf32>, vector<88x128xf32>, vector<88x128xf32> -> vector<88x128xf32>
    %162 = vector.extract_strided_slice %158 {offsets = [88, 0], sizes = [88, 128], strides = [1, 1]} : vector<176x128xf32> to vector<88x128xf32>
    %cst_47 = arith.constant dense<0.000000e+00> : vector<88x128xf32>
    %163 = tpu.matmul %159, %162, %cst_47 {dimension_numbers = #tpu.dot_dimension_numbers<[1], [0], [0], [1], [0, 0, 1, 1], [], []>} : vector<88x88xf32>, vector<88x128xf32>, vector<88x128xf32> -> vector<88x128xf32>
    %164 = arith.mulf %161, %161 : vector<88x128xf32>
    %165 = arith.subf %163, %164 : vector<88x128xf32>
    %cst_48 = arith.constant 0.000000e+00 : f32
    %166 = vector.broadcast %cst_48 : f32 to vector<88x128xf32>
    %167 = arith.maximumf %165, %166 : vector<88x128xf32>
    %168 = arith.subf %155, %161 : vector<88x128xf32>
    %cst_49 = arith.constant 9.99999974E-6 : f32
    %169 = vector.broadcast %cst_49 : f32 to vector<88x128xf32>
    %170 = arith.addf %167, %169 : vector<88x128xf32>
    %171 = math.rsqrt %170 : vector<88x128xf32>
    %172 = arith.mulf %168, %171 : vector<88x128xf32>
    %c0_50 = arith.constant 0 : index
    %c0_51 = arith.constant 0 : index
    %173 = vector.load %arg14[%c0_50, %c0_51] : memref<88x128xf32, #tpu.memory_space<vmem>>, vector<88x128xf32>
    %174 = arith.mulf %172, %173 : vector<88x128xf32>
    %c0_52 = arith.constant 0 : index
    %c0_53 = arith.constant 0 : index
    %175 = vector.load %arg15[%c0_52, %c0_53] : memref<88x128xf32, #tpu.memory_space<vmem>>, vector<88x128xf32>
    %176 = arith.addf %174, %175 : vector<88x128xf32>
    %c0_54 = arith.constant 0 : index
    %c0_55 = arith.constant 0 : index
    %177 = vector.load %arg16[%c0_54, %c0_55] : memref<88x128xf32, #tpu.memory_space<vmem>>, vector<88x128xf32>
    tpu.vector_store %arg16[%c0_54, %c0_55], %176 {strides = array<i32>} : memref<88x128xf32, #tpu.memory_space<vmem>>, vector<88x128xf32>,
    return
  }
  func.func @transform_0(%arg0: i32) -> (i32, i32) {
    %c0_i32 = arith.constant 0 : i32
    %c0_i32_0 = arith.constant 0 : i32
    return %c0_i32, %arg0 : i32, i32
  }
  func.func @transform_1(%arg0: i32) -> (i32, i32) {
    %c0_i32 = arith.constant 0 : i32
    %c0_i32_0 = arith.constant 0 : i32
    %c0_i32_1 = arith.constant 0 : i32
    return %c0_i32, %c0_i32_0 : i32, i32
  }
  func.func @transform_2(%arg0: i32) -> (i32, i32) {
    %c0_i32 = arith.constant 0 : i32
    %c0_i32_0 = arith.constant 0 : i32
    %c0_i32_1 = arith.constant 0 : i32
    return %c0_i32, %c0_i32_0 : i32, i32
  }
  func.func @transform_3(%arg0: i32) -> (i32, i32) {
    %c0_i32 = arith.constant 0 : i32
    %c0_i32_0 = arith.constant 0 : i32
    %c0_i32_1 = arith.constant 0 : i32
    return %c0_i32, %c0_i32_0 : i32, i32
  }
  func.func @transform_4(%arg0: i32) -> (i32, i32) {
    %c0_i32 = arith.constant 0 : i32
    %c0_i32_0 = arith.constant 0 : i32
    %c0_i32_1 = arith.constant 0 : i32
    return %c0_i32, %c0_i32_0 : i32, i32
  }
  func.func @transform_5(%arg0: i32) -> (i32, i32) {
    %c0_i32 = arith.constant 0 : i32
    %c0_i32_0 = arith.constant 0 : i32
    %c0_i32_1 = arith.constant 0 : i32
    return %c0_i32, %c0_i32_0 : i32, i32
  }
  func.func @transform_6(%arg0: i32) -> (i32, i32) {
    %c0_i32 = arith.constant 0 : i32
    %c0_i32_0 = arith.constant 0 : i32
    %c0_i32_1 = arith.constant 0 : i32
    return %c0_i32, %c0_i32_0 : i32, i32
  }
  func.func @transform_7(%arg0: i32) -> (i32, i32) {
    %c0_i32 = arith.constant 0 : i32
    %c0_i32_0 = arith.constant 0 : i32
    %c0_i32_1 = arith.constant 0 : i32
    return %c0_i32, %c0_i32_0 : i32, i32
  }
  func.func @transform_8(%arg0: i32) -> (i32, i32) {
    %c0_i32 = arith.constant 0 : i32
    %c0_i32_0 = arith.constant 0 : i32
    %c0_i32_1 = arith.constant 0 : i32
    return %c0_i32, %c0_i32_0 : i32, i32
  }
  func.func @transform_9(%arg0: i32) -> (i32, i32) {
    %c0_i32 = arith.constant 0 : i32
    %c0_i32_0 = arith.constant 0 : i32
    %c0_i32_1 = arith.constant 0 : i32
    return %c0_i32, %c0_i32_0 : i32, i32
  }
  func.func @transform_10(%arg0: i32) -> (i32, i32) {
    %c0_i32 = arith.constant 0 : i32
    %c0_i32_0 = arith.constant 0 : i32
    %c0_i32_1 = arith.constant 0 : i32
    return %c0_i32, %c0_i32_0 : i32, i32
  }
  func.func @transform_11(%arg0: i32) -> (i32, i32) {
    %c0_i32 = arith.constant 0 : i32
    %c0_i32_0 = arith.constant 0 : i32
    %c0_i32_1 = arith.constant 0 : i32
    return %c0_i32, %c0_i32_0 : i32, i32
  }
  func.func @transform_12(%arg0: i32) -> (i32, i32) {
    %c0_i32 = arith.constant 0 : i32
    %c0_i32_0 = arith.constant 0 : i32
    %c0_i32_1 = arith.constant 0 : i32
    return %c0_i32, %c0_i32_0 : i32, i32
  }
  func.func @transform_13(%arg0: i32) -> (i32, i32) {
    %c0_i32 = arith.constant 0 : i32
    %c0_i32_0 = arith.constant 0 : i32
    %c0_i32_1 = arith.constant 0 : i32
    return %c0_i32, %c0_i32_0 : i32, i32
  }
  func.func @transform_14(%arg0: i32) -> (i32, i32) {
    %c0_i32 = arith.constant 0 : i32
    %c0_i32_0 = arith.constant 0 : i32
    %c0_i32_1 = arith.constant 0 : i32
    return %c0_i32, %c0_i32_0 : i32, i32
  }
  func.func @transform_15(%arg0: i32) -> (i32, i32) {
    %c0_i32 = arith.constant 0 : i32
    %c0_i32_0 = arith.constant 0 : i32
    return %c0_i32, %arg0 : i32, i32
  }
}

</mosaic_0001>

<llo_original>
// kernel: tpu_custom_call.1
$region0: #{tpu_custom_call.1}
  #allocation0 [shape = 'u32[]', space=smem, size = 0x4, offset = 0x4, fixed_abs, tag = 'smem constant byte address 0x4 - core index']
  #allocation1 [shape = 'u32[144,128]{1,0:T(1,128)}', space=vmem, size = 0x12000, scoped, tag = 'internal scratch']
  %s0 = inlined_call_operand.vmem [shape: f32[30,256], index: 0, kind: input, shape index: {}]
  %s1 = inlined_call_operand.vmem [shape: f32[112,30], index: 1, kind: input, shape index: {}]
  %s2 = inlined_call_operand.vmem [shape: f32[112,1], index: 2, kind: input, shape index: {}]
  %s3 = inlined_call_operand.vmem [shape: f32[176,52], index: 3, kind: input, shape index: {}]
  %s4 = inlined_call_operand.vmem [shape: f32[176,1], index: 4, kind: input, shape index: {}]
  %s5 = inlined_call_operand.vmem [shape: f32[52,52], index: 5, kind: input, shape index: {}]
  %s6 = inlined_call_operand.vmem [shape: f32[504,52], index: 6, kind: input, shape index: {}]
  %s7 = inlined_call_operand.vmem [shape: f32[128,64], index: 7, kind: input, shape index: {}]
  %s8 = inlined_call_operand.vmem [shape: f32[64,256], index: 8, kind: input, shape index: {}]
  %s9 = inlined_call_operand.vmem [shape: f32[9,128], index: 9, kind: input, shape index: {}]
  %s10 = inlined_call_operand.vmem [shape: f32[128,128], index: 10, kind: input, shape index: {}]
  %s11 = inlined_call_operand.vmem [shape: f32[52,4], index: 11, kind: input, shape index: {}]
  %s12 = inlined_call_operand.vmem [shape: f32[88,88], index: 12, kind: input, shape index: {}]
  %s13 = inlined_call_operand.vmem [shape: f32[88,128], index: 13, kind: input, shape index: {}]
  %s14 = inlined_call_operand.vmem [shape: f32[88,128], index: 14, kind: input, shape index: {}]
  %s15 = inlined_call_operand.hbm [shape: f32[88,256], index: 15, kind: output, shape index: {}]
  %s16 = sld [smem:[#allocation0]]
  $region131: #{tpu_custom_call.1} parent=0
    _
  %s18 = ssub.s32 1, %s16
  %s19 = scalar_select 0, %s18, %s16
  $region1: #{tpu_custom_call.1} parent=0
    #allocation2 [shape = 'u8[32768]{0}', space=vmem, size = 0x8000, scoped, tag = 'input window, operand 0']
    #allocation3 [shape = 'u8[90112]{0}', space=vmem, size = 0x16000, scoped, tag = 'output window, operand 0']
    #allocation4 [shape = 's32[2]{0}', space=sflag, size = 0x8, scoped, tag = 'scoped memory for tpu_custom_call.1']
    %20 = vsyncpa [#allocation4], 0
    %s21 = scalar_lea.sflag [#allocation4], 1
    %22 = vsyncpa %s21, 0
    loop: start=0, step=1, limit=4
    $region2: #{tpu_custom_call.1} parent=1 // loop_pre_header
      _
    $region3: #{tpu_custom_call.1} parent=1 // loop_header
      %s24 = sphi 0, %s28
      %p25 = scmp.ge.s32.totalorder %s24, 4
      %s34 = sphi 0, %s36
      %s37 = sphi 0, %s34
      %s38 = sphi 0, %s37
      %s54 = sphi 0, %s38
      %s58 = sphi 0, %s58
      %s60 = sphi 0, %s58
      %s61 = sphi 0, %s60
      %s75 = sphi 0, %s61
      %s79 = sphi 0, %s79
      %s81 = sphi 0, %s79
      %s82 = sphi 0, %s81
      %s96 = sphi 0, %s82
      %s100 = sphi 0, %s100
      %s102 = sphi 0, %s100
      %s103 = sphi 0, %s102
      %s117 = sphi 0, %s103
      %s121 = sphi 0, %s121
      %s123 = sphi 0, %s121
      %s124 = sphi 0, %s123
      %s138 = sphi 0, %s124
      %s142 = sphi 0, %s142
      %s144 = sphi 0, %s142
      %s145 = sphi 0, %s144
      %s159 = sphi 0, %s145
      %s163 = sphi 0, %s163
      %s165 = sphi 0, %s163
      %s166 = sphi 0, %s165
      %s180 = sphi 0, %s166
      %s184 = sphi 0, %s184
      %s186 = sphi 0, %s184
      %s187 = sphi 0, %s186
      %s201 = sphi 0, %s187
      %s205 = sphi 0, %s205
      %s207 = sphi 0, %s205
      %s208 = sphi 0, %s207
      %s222 = sphi 0, %s208
      %s226 = sphi 0, %s226
      %s228 = sphi 0, %s226
      %s229 = sphi 0, %s228
      %s243 = sphi 0, %s229
      %s247 = sphi 0, %s247
      %s249 = sphi 0, %s247
      %s250 = sphi 0, %s249
      %s264 = sphi 0, %s250
      %s268 = sphi 0, %s268
      %s270 = sphi 0, %s268
      %s271 = sphi 0, %s270
      %s285 = sphi 0, %s271
      %s289 = sphi 0, %s289
      %s291 = sphi 0, %s289
      %s292 = sphi 0, %s291
      %s306 = sphi 0, %s292
      %s310 = sphi 0, %s310
      %s312 = sphi 0, %s310
      %s313 = sphi 0, %s312
      %s327 = sphi 0, %s313
      %s331 = sphi 0, %s331
      %s333 = sphi 0, %s331
      %s334 = sphi 0, %s333
      %s348 = sphi 0, %s334
      %s354 = sphi 0, %s356
      %s357 = sphi 0, %s354
      %s358 = sphi 0, %s357
      %s374 = sphi 0, %s358
    $region4: #{tpu_custom_call.1} parent=1 // loop_header_branch
      %27 = sbr.rel (%p25) target = $region8
    $region5: #{tpu_custom_call.1} parent=1 // loop_body
      %s29 = ssub.s32 %s24, 1
      %s30 = ssub.s32 %s24, 2
      %s31 = sadd.s32 %s24, 1
      %s32 = ssub.s32 %s24, %s31
      %p33 = scmp.eq.s32.totalorder %s32, 0
      %s35 = sadd.s32 %s34, 1
      %s36 = scalar_select %p33, %s34, %s35
      %p39 = pneg %p33
      %p40 = scmp.eq.s32.totalorder %s24, 1
      %p41 = por %p39, %p40
      %p42 = scmp.ne.s32.totalorder %s34, %s37
      %p43 = scmp.eq.s32.totalorder %s24, 0
      %p44 = por %p42, %p43
      %p45 = scmp.ne.s32.totalorder %s34, %s37
      %p46 = scmp.eq.s32.totalorder %s29, 1
      %p47 = por %p45, %p46
      %p48 = scmp.ne.s32.totalorder %s37, %s38
      %p49 = scmp.eq.s32.totalorder %s29, 0
      %p50 = por %p48, %p49
      %p51 = scmp.ne.s32.totalorder %s37, %s38
      %p52 = scmp.eq.s32.totalorder %s30, 1
      %p53 = por %p51, %p52
      %p55 = scmp.ne.s32.totalorder %s38, %s54
      %p56 = scmp.eq.s32.totalorder %s30, 0
      %p57 = por %p55, %p56
      %s59 = sadd.s32 %s58, 1
      %p62 = scmp.eq.s32.totalorder %s24, 1
      %p63 = scmp.ne.s32.totalorder %s58, %s60
      %p64 = scmp.eq.s32.totalorder %s24, 0
      %p65 = por %p63, %p64
      %p66 = scmp.ne.s32.totalorder %s58, %s60
      %p67 = scmp.eq.s32.totalorder %s29, 1
      %p68 = por %p66, %p67
      %p69 = scmp.ne.s32.totalorder %s60, %s61
      %p70 = scmp.eq.s32.totalorder %s29, 0
      %p71 = por %p69, %p70
      %p72 = scmp.ne.s32.totalorder %s60, %s61
      %p73 = scmp.eq.s32.totalorder %s30, 1
      %p74 = por %p72, %p73
      %p76 = scmp.ne.s32.totalorder %s61, %s75
      %p77 = scmp.eq.s32.totalorder %s30, 0
      %p78 = por %p76, %p77
      %s80 = sadd.s32 %s79, 1
      %p83 = scmp.eq.s32.totalorder %s24, 1
      %p84 = scmp.ne.s32.totalorder %s79, %s81
      %p85 = scmp.eq.s32.totalorder %s24, 0
      %p86 = por %p84, %p85
      %p87 = scmp.ne.s32.totalorder %s79, %s81
      %p88 = scmp.eq.s32.totalorder %s29, 1
      %p89 = por %p87, %p88
      %p90 = scmp.ne.s32.totalorder %s81, %s82
      %p91 = scmp.eq.s32.totalorder %s29, 0
      %p92 = por %p90, %p91
      %p93 = scmp.ne.s32.totalorder %s81, %s82
      %p94 = scmp.eq.s32.totalorder %s30, 1
      %p95 = por %p93, %p94
      %p97 = scmp.ne.s32.totalorder %s82, %s96
      %p98 = scmp.eq.s32.totalorder %s30, 0
      %p99 = por %p97, %p98
      %s101 = sadd.s32 %s100, 1
      %p104 = scmp.eq.s32.totalorder %s24, 1
      %p105 = scmp.ne.s32.totalorder %s100, %s102
      %p106 = scmp.eq.s32.totalorder %s24, 0
      %p107 = por %p105, %p106
      %p108 = scmp.ne.s32.totalorder %s100, %s102
      %p109 = scmp.eq.s32.totalorder %s29, 1
      %p110 = por %p108, %p109
      %p111 = scmp.ne.s32.totalorder %s102, %s103
      %p112 = scmp.eq.s32.totalorder %s29, 0
      %p113 = por %p111, %p112
      %p114 = scmp.ne.s32.totalorder %s102, %s103
      %p115 = scmp.eq.s32.totalorder %s30, 1
      %p116 = por %p114, %p115
      %p118 = scmp.ne.s32.totalorder %s103, %s117
      %p119 = scmp.eq.s32.totalorder %s30, 0
      %p120 = por %p118, %p119
      %s122 = sadd.s32 %s121, 1
      %p125 = scmp.eq.s32.totalorder %s24, 1
      %p126 = scmp.ne.s32.totalorder %s121, %s123
      %p127 = scmp.eq.s32.totalorder %s24, 0
      %p128 = por %p126, %p127
      %p129 = scmp.ne.s32.totalorder %s121, %s123
      %p130 = scmp.eq.s32.totalorder %s29, 1
      %p131 = por %p129, %p130
      %p132 = scmp.ne.s32.totalorder %s123, %s124
      %p133 = scmp.eq.s32.totalorder %s29, 0
      %p134 = por %p132, %p133
      %p135 = scmp.ne.s32.totalorder %s123, %s124
      %p136 = scmp.eq.s32.totalorder %s30, 1
      %p137 = por %p135, %p136
      %p139 = scmp.ne.s32.totalorder %s124, %s138
      %p140 = scmp.eq.s32.totalorder %s30, 0
      %p141 = por %p139, %p140
      %s143 = sadd.s32 %s142, 1
      %p146 = scmp.eq.s32.totalorder %s24, 1
      %p147 = scmp.ne.s32.totalorder %s142, %s144
      %p148 = scmp.eq.s32.totalorder %s24, 0
      %p149 = por %p147, %p148
      %p150 = scmp.ne.s32.totalorder %s142, %s144
      %p151 = scmp.eq.s32.totalorder %s29, 1
      %p152 = por %p150, %p151
      %p153 = scmp.ne.s32.totalorder %s144, %s145
      %p154 = scmp.eq.s32.totalorder %s29, 0
      %p155 = por %p153, %p154
      %p156 = scmp.ne.s32.totalorder %s144, %s145
      %p157 = scmp.eq.s32.totalorder %s30, 1
      %p158 = por %p156, %p157
      %p160 = scmp.ne.s32.totalorder %s145, %s159
      %p161 = scmp.eq.s32.totalorder %s30, 0
      %p162 = por %p160, %p161
      %s164 = sadd.s32 %s163, 1
      %p167 = scmp.eq.s32.totalorder %s24, 1
      %p168 = scmp.ne.s32.totalorder %s163, %s165
      %p169 = scmp.eq.s32.totalorder %s24, 0
      %p170 = por %p168, %p169
      %p171 = scmp.ne.s32.totalorder %s163, %s165
      %p172 = scmp.eq.s32.totalorder %s29, 1
      %p173 = por %p171, %p172
      %p174 = scmp.ne.s32.totalorder %s165, %s166
      %p175 = scmp.eq.s32.totalorder %s29, 0
      %p176 = por %p174, %p175
      %p177 = scmp.ne.s32.totalorder %s165, %s166
      %p178 = scmp.eq.s32.totalorder %s30, 1
      %p179 = por %p177, %p178
      %p181 = scmp.ne.s32.totalorder %s166, %s180
      %p182 = scmp.eq.s32.totalorder %s30, 0
      %p183 = por %p181, %p182
      %s185 = sadd.s32 %s184, 1
      %p188 = scmp.eq.s32.totalorder %s24, 1
      %p189 = scmp.ne.s32.totalorder %s184, %s186
      %p190 = scmp.eq.s32.totalorder %s24, 0
      %p191 = por %p189, %p190
      %p192 = scmp.ne.s32.totalorder %s184, %s186
      %p193 = scmp.eq.s32.totalorder %s29, 1
      %p194 = por %p192, %p193
      %p195 = scmp.ne.s32.totalorder %s186, %s187
      %p196 = scmp.eq.s32.totalorder %s29, 0
      %p197 = por %p195, %p196
      %p198 = scmp.ne.s32.totalorder %s186, %s187
      %p199 = scmp.eq.s32.totalorder %s30, 1
      %p200 = por %p198, %p199
      %p202 = scmp.ne.s32.totalorder %s187, %s201
      %p203 = scmp.eq.s32.totalorder %s30, 0
      %p204 = por %p202, %p203
      %s206 = sadd.s32 %s205, 1
      %p209 = scmp.eq.s32.totalorder %s24, 1
      %p210 = scmp.ne.s32.totalorder %s205, %s207
      %p211 = scmp.eq.s32.totalorder %s24, 0
      %p212 = por %p210, %p211
      %p213 = scmp.ne.s32.totalorder %s205, %s207
      %p214 = scmp.eq.s32.totalorder %s29, 1
      %p215 = por %p213, %p214
      %p216 = scmp.ne.s32.totalorder %s207, %s208
      %p217 = scmp.eq.s32.totalorder %s29, 0
      %p218 = por %p216, %p217
      %p219 = scmp.ne.s32.totalorder %s207, %s208
      %p220 = scmp.eq.s32.totalorder %s30, 1
      %p221 = por %p219, %p220
      %p223 = scmp.ne.s32.totalorder %s208, %s222
      %p224 = scmp.eq.s32.totalorder %s30, 0
      %p225 = por %p223, %p224
      %s227 = sadd.s32 %s226, 1
      %p230 = scmp.eq.s32.totalorder %s24, 1
      %p231 = scmp.ne.s32.totalorder %s226, %s228
      %p232 = scmp.eq.s32.totalorder %s24, 0
      %p233 = por %p231, %p232
      %p234 = scmp.ne.s32.totalorder %s226, %s228
      %p235 = scmp.eq.s32.totalorder %s29, 1
      %p236 = por %p234, %p235
      %p237 = scmp.ne.s32.totalorder %s228, %s229
      %p238 = scmp.eq.s32.totalorder %s29, 0
      %p239 = por %p237, %p238
      %p240 = scmp.ne.s32.totalorder %s228, %s229
      %p241 = scmp.eq.s32.totalorder %s30, 1
      %p242 = por %p240, %p241
      %p244 = scmp.ne.s32.totalorder %s229, %s243
      %p245 = scmp.eq.s32.totalorder %s30, 0
      %p246 = por %p244, %p245
      %s248 = sadd.s32 %s247, 1
      %p251 = scmp.eq.s32.totalorder %s24, 1
      %p252 = scmp.ne.s32.totalorder %s247, %s249
      %p253 = scmp.eq.s32.totalorder %s24, 0
      %p254 = por %p252, %p253
      %p255 = scmp.ne.s32.totalorder %s247, %s249
      %p256 = scmp.eq.s32.totalorder %s29, 1
      %p257 = por %p255, %p256
      %p258 = scmp.ne.s32.totalorder %s249, %s250
      %p259 = scmp.eq.s32.totalorder %s29, 0
      %p260 = por %p258, %p259
      %p261 = scmp.ne.s32.totalorder %s249, %s250
      %p262 = scmp.eq.s32.totalorder %s30, 1
      %p263 = por %p261, %p262
      %p265 = scmp.ne.s32.totalorder %s250, %s264
      %p266 = scmp.eq.s32.totalorder %s30, 0
      %p267 = por %p265, %p266
      %s269 = sadd.s32 %s268, 1
      %p272 = scmp.eq.s32.totalorder %s24, 1
      %p273 = scmp.ne.s32.totalorder %s268, %s270
      %p274 = scmp.eq.s32.totalorder %s24, 0
      %p275 = por %p273, %p274
      %p276 = scmp.ne.s32.totalorder %s268, %s270
      %p277 = scmp.eq.s32.totalorder %s29, 1
      %p278 = por %p276, %p277
      %p279 = scmp.ne.s32.totalorder %s270, %s271
      %p280 = scmp.eq.s32.totalorder %s29, 0
      %p281 = por %p279, %p280
      %p282 = scmp.ne.s32.totalorder %s270, %s271
      %p283 = scmp.eq.s32.totalorder %s30, 1
      %p284 = por %p282, %p283
      %p286 = scmp.ne.s32.totalorder %s271, %s285
      %p287 = scmp.eq.s32.totalorder %s30, 0
      %p288 = por %p286, %p287
      %s290 = sadd.s32 %s289, 1
      %p293 = scmp.eq.s32.totalorder %s24, 1
      %p294 = scmp.ne.s32.totalorder %s289, %s291
      %p295 = scmp.eq.s32.totalorder %s24, 0
      %p296 = por %p294, %p295
      %p297 = scmp.ne.s32.totalorder %s289, %s291
      %p298 = scmp.eq.s32.totalorder %s29, 1
      %p299 = por %p297, %p298
      %p300 = scmp.ne.s32.totalorder %s291, %s292
      %p301 = scmp.eq.s32.totalorder %s29, 0
      %p302 = por %p300, %p301
      %p303 = scmp.ne.s32.totalorder %s291, %s292
      %p304 = scmp.eq.s32.totalorder %s30, 1
      %p305 = por %p303, %p304
      %p307 = scmp.ne.s32.totalorder %s292, %s306
      %p308 = scmp.eq.s32.totalorder %s30, 0
      %p309 = por %p307, %p308
      %s311 = sadd.s32 %s310, 1
      %p314 = scmp.eq.s32.totalorder %s24, 1
      %p315 = scmp.ne.s32.totalorder %s310, %s312
      %p316 = scmp.eq.s32.totalorder %s24, 0
      %p317 = por %p315, %p316
      %p318 = scmp.ne.s32.totalorder %s310, %s312
      %p319 = scmp.eq.s32.totalorder %s29, 1
      %p320 = por %p318, %p319
      %p321 = scmp.ne.s32.totalorder %s312, %s313
      %p322 = scmp.eq.s32.totalorder %s29, 0
      %p323 = por %p321, %p322
      %p324 = scmp.ne.s32.totalorder %s312, %s313
      %p325 = scmp.eq.s32.totalorder %s30, 1
      %p326 = por %p324, %p325
      %p328 = scmp.ne.s32.totalorder %s313, %s327
      %p329 = scmp.eq.s32.totalorder %s30, 0
      %p330 = por %p328, %p329
      %s332 = sadd.s32 %s331, 1
      %p335 = scmp.eq.s32.totalorder %s24, 1
      %p336 = scmp.ne.s32.totalorder %s331, %s333
      %p337 = scmp.eq.s32.totalorder %s24, 0
      %p338 = por %p336, %p337
      %p339 = scmp.ne.s32.totalorder %s331, %s333
      %p340 = scmp.eq.s32.totalorder %s29, 1
      %p341 = por %p339, %p340
      %p342 = scmp.ne.s32.totalorder %s333, %s334
      %p343 = scmp.eq.s32.totalorder %s29, 0
      %p344 = por %p342, %p343
      %p345 = scmp.ne.s32.totalorder %s333, %s334
      %p346 = scmp.eq.s32.totalorder %s30, 1
      %p347 = por %p345, %p346
      %p349 = scmp.ne.s32.totalorder %s334, %s348
      %p350 = scmp.eq.s32.totalorder %s30, 0
      %p351 = por %p349, %p350
      %s352 = ssub.s32 %s24, %s31
      %p353 = scmp.eq.s32.totalorder %s352, 0
      %s355 = sadd.s32 %s354, 1
      %s356 = scalar_select %p353, %s354, %s355
      %p359 = pneg %p353
      %p360 = scmp.eq.s32.totalorder %s24, 1
      %p361 = por %p359, %p360
      %p362 = scmp.ne.s32.totalorder %s354, %s357
      %p363 = scmp.eq.s32.totalorder %s24, 0
      %p364 = por %p362, %p363
      %p365 = scmp.ne.s32.totalorder %s354, %s357
      %p366 = scmp.eq.s32.totalorder %s29, 1
      %p367 = por %p365, %p366
      %p368 = scmp.ne.s32.totalorder %s357, %s358
      %p369 = scmp.eq.s32.totalorder %s29, 0
      %p370 = por %p368, %p369
      %p371 = scmp.ne.s32.totalorder %s357, %s358
      %p372 = scmp.eq.s32.totalorder %s30, 1
      %p373 = por %p371, %p372
      %p375 = scmp.ne.s32.totalorder %s358, %s374
      %p376 = scmp.eq.s32.totalorder %s30, 0
      %p377 = por %p375, %p376
      %p378 = scmp.le.s32.totalorder 1, %s24
      %p379 = scmp.lt.s32.totalorder %s24, 3
      %p380 = pnand %p378, %p379
      %p381 = pneg %p380
      // Predicated region
      $region9: #{tpu_custom_call.1} parent=5 // pred_check
        _
      $region10: #{tpu_custom_call.1} parent=5 // pred_check_branch
        %383 = sbr.rel (%p380) target = $region12
      $region11: #{tpu_custom_call.1} parent=5 // pred_region
        %s384 = ssub.s32 %s24, 1
        // Predicated region
        $region13: #{tpu_custom_call.1} parent=11 // pred_check
          %p385 = pneg %p71
        $region14: #{tpu_custom_call.1} parent=11 // pred_check_branch
          %387 = sbr.rel (%p385) target = $region16
        $region15: #{tpu_custom_call.1} parent=11 // pred_region
          _
        $region16: #{tpu_custom_call.1} parent=11 // pred_fallthru
          _
        // Predicated region
        $region17: #{tpu_custom_call.1} parent=11 // pred_check
          %p388 = pneg %p92
        $region18: #{tpu_custom_call.1} parent=11 // pred_check_branch
          %390 = sbr.rel (%p388) target = $region20
        $region19: #{tpu_custom_call.1} parent=11 // pred_region
          _
        $region20: #{tpu_custom_call.1} parent=11 // pred_fallthru
          _
        // Predicated region
        $region21: #{tpu_custom_call.1} parent=11 // pred_check
          %p391 = pneg %p113
        $region22: #{tpu_custom_call.1} parent=11 // pred_check_branch
          %393 = sbr.rel (%p391) target = $region24
        $region23: #{tpu_custom_call.1} parent=11 // pred_region
          _
        $region24: #{tpu_custom_call.1} parent=11 // pred_fallthru
          _
        // Predicated region
        $region25: #{tpu_custom_call.1} parent=11 // pred_check
          %p394 = pneg %p134
        $region26: #{tpu_custom_call.1} parent=11 // pred_check_branch
          %396 = sbr.rel (%p394) target = $region28
        $region27: #{tpu_custom_call.1} parent=11 // pred_region
          _
        $region28: #{tpu_custom_call.1} parent=11 // pred_fallthru
          _
        // Predicated region
        $region29: #{tpu_custom_call.1} parent=11 // pred_check
          %p397 = pneg %p155
        $region30: #{tpu_custom_call.1} parent=11 // pred_check_branch
          %399 = sbr.rel (%p397) target = $region32
        $region31: #{tpu_custom_call.1} parent=11 // pred_region
          _
        $region32: #{tpu_custom_call.1} parent=11 // pred_fallthru
          _
        // Predicated region
        $region33: #{tpu_custom_call.1} parent=11 // pred_check
          %p400 = pneg %p176
        $region34: #{tpu_custom_call.1} parent=11 // pred_check_branch
          %402 = sbr.rel (%p400) target = $region36
        $region35: #{tpu_custom_call.1} parent=11 // pred_region
          _
        $region36: #{tpu_custom_call.1} parent=11 // pred_fallthru
          _
        // Predicated region
        $region37: #{tpu_custom_call.1} parent=11 // pred_check
          %p403 = pneg %p197
        $region38: #{tpu_custom_call.1} parent=11 // pred_check_branch
          %405 = sbr.rel (%p403) target = $region40
        $region39: #{tpu_custom_call.1} parent=11 // pred_region
          _
        $region40: #{tpu_custom_call.1} parent=11 // pred_fallthru
          _
        // Predicated region
        $region41: #{tpu_custom_call.1} parent=11 // pred_check
          %p406 = pneg %p218
        $region42: #{tpu_custom_call.1} parent=11 // pred_check_branch
          %408 = sbr.rel (%p406) target = $region44
        $region43: #{tpu_custom_call.1} parent=11 // pred_region
          _
        $region44: #{tpu_custom_call.1} parent=11 // pred_fallthru
          _
        // Predicated region
        $region45: #{tpu_custom_call.1} parent=11 // pred_check
          %p409 = pneg %p239
        $region46: #{tpu_custom_call.1} parent=11 // pred_check_branch
          %411 = sbr.rel (%p409) target = $region48
        $region47: #{tpu_custom_call.1} parent=11 // pred_region
          _
        $region48: #{tpu_custom_call.1} parent=11 // pred_fallthru
          _
        // Predicated region
        $region49: #{tpu_custom_call.1} parent=11 // pred_check
          %p412 = pneg %p260
        $region50: #{tpu_custom_call.1} parent=11 // pred_check_branch
          %414 = sbr.rel (%p412) target = $region52
        $region51: #{tpu_custom_call.1} parent=11 // pred_region
          _
        $region52: #{tpu_custom_call.1} parent=11 // pred_fallthru
          _
        // Predicated region
        $region53: #{tpu_custom_call.1} parent=11 // pred_check
          %p415 = pneg %p281
        $region54: #{tpu_custom_call.1} parent=11 // pred_check_branch
          %417 = sbr.rel (%p415) target = $region56
        $region55: #{tpu_custom_call.1} parent=11 // pred_region
          _
        $region56: #{tpu_custom_call.1} parent=11 // pred_fallthru
          _
        // Predicated region
        $region57: #{tpu_custom_call.1} parent=11 // pred_check
          %p418 = pneg %p302
        $region58: #{tpu_custom_call.1} parent=11 // pred_check_branch
          %420 = sbr.rel (%p418) target = $region60
        $region59: #{tpu_custom_call.1} parent=11 // pred_region
          _
        $region60: #{tpu_custom_call.1} parent=11 // pred_fallthru
          _
        // Predicated region
        $region61: #{tpu_custom_call.1} parent=11 // pred_check
          %p421 = pneg %p323
        $region62: #{tpu_custom_call.1} parent=11 // pred_check_branch
          %423 = sbr.rel (%p421) target = $region64
        $region63: #{tpu_custom_call.1} parent=11 // pred_region
          _
        $region64: #{tpu_custom_call.1} parent=11 // pred_fallthru
          _
        // Predicated region
        $region65: #{tpu_custom_call.1} parent=11 // pred_check
          %p424 = pneg %p344
        $region66: #{tpu_custom_call.1} parent=11 // pred_check_branch
          %426 = sbr.rel (%p424) target = $region68
        $region67: #{tpu_custom_call.1} parent=11 // pred_region
          _
        $region68: #{tpu_custom_call.1} parent=11 // pred_fallthru
          _
      $region12: #{tpu_custom_call.1} parent=5 // pred_fallthru
        _
      %p427 = scmp.lt.s32.totalorder %s24, 2
      // Predicated region
      $region69: #{tpu_custom_call.1} parent=5 // pred_check
        %p428 = pneg %p427
      $region70: #{tpu_custom_call.1} parent=5 // pred_check_branch
        %430 = sbr.rel (%p428) target = $region72
      $region71: #{tpu_custom_call.1} parent=5 // pred_region
        // Predicated region
        $region73: #{tpu_custom_call.1} parent=71 // pred_check
          %p431 = pneg %p44
        $region74: #{tpu_custom_call.1} parent=71 // pred_check_branch
          %433 = sbr.rel (%p431) target = $region76
        $region75: #{tpu_custom_call.1} parent=71 // pred_region
          %s434 = sand.u32 %s34, 1
          %s435 = sand.u32 %s34, 1
          %s436 = smul.addr %s435, 32
          %s437 = scalar_lea.vmem [#allocation2], %s436
          %s438 = smul.addr %s24, 8
          %s439 = scalar_lea.vmem %s0, %s438
          // Predicated region
          $region77: #{tpu_custom_call.1} parent=75 // pred_check
            _
          $region78: #{tpu_custom_call.1} parent=75 // pred_check_branch
            %441 = sbr.rel (0) target = $region80
          $region79: #{tpu_custom_call.1} parent=75 // pred_region
            // Predicated region
            $region81: #{tpu_custom_call.1} parent=79 // pred_check
              _
            $region82: #{tpu_custom_call.1} parent=79 // pred_check_branch
              %443 = sbr.rel (0) target = $region84
            $region83: #{tpu_custom_call.1} parent=79 // pred_region
              // Predicated region
              $region96: #{tpu_custom_call.1} parent=83 // pred_check
                _
              $region97: #{tpu_custom_call.1} parent=83 // pred_check_branch
                %464 = sbr.rel (0) target = $region99
              $region98: #{tpu_custom_call.1} parent=83 // pred_region
                loop: start=0, step=1, limit=1
                $region100: #{tpu_custom_call.1} parent=98 // loop_pre_header
                  _
                $region101: #{tpu_custom_call.1} parent=98 // loop_header
                  %s466 = sphi 0, %s470
                  %p467 = scmp.ge.s32.totalorder %s466, 1
                  %s471 = sphi %s439, %s439
                  %s472 = sphi %s437, %s437
                $region102: #{tpu_custom_call.1} parent=98 // loop_header_branch
                  %469 = sbr.rel (%p467) target = $region106
                $region103: #{tpu_custom_call.1} parent=98 // loop_body
                  %v473 = vld [vmem:[%s471] sm:$0xff]
                  %474 = vst [vmem:[%s472] sm:$0xff] %v473
                  %v475 = vld [vmem:[%s471 + $0x10] sm:$0xff]
                  %476 = vst [vmem:[%s472 + $0x8] sm:$0xff] %v475
                  %v477 = vld [vmem:[%s471 + $0x20] sm:$0xff]
                  %478 = vst [vmem:[%s472 + $0x10] sm:$0xff] %v477
                  %v479 = vld [vmem:[%s471 + $0x30] sm:$0xff]
                  %480 = vst [vmem:[%s472 + $0x18] sm:$0xff] %v479
                $region104: #{tpu_custom_call.1} parent=98 // loop_footer
                  %s470 = sadd.s32 1, %s466
                $region105: #{tpu_custom_call.1} parent=98 // loop_footer_branch
                  %465 = sbr.rel target = $region101
                $region106: #{tpu_custom_call.1} parent=98 // loop_exit
                  _
              $region99: #{tpu_custom_call.1} parent=83 // pred_fallthru
                _
              // Predicated region
              $region107: #{tpu_custom_call.1} parent=83 // pred_check
                _
              $region108: #{tpu_custom_call.1} parent=83 // pred_check_branch
                %482 = sbr.rel target = $region110
              $region109: #{tpu_custom_call.1} parent=83 // pred_region
                _
              $region110: #{tpu_custom_call.1} parent=83 // pred_fallthru
                _
            $region84: #{tpu_custom_call.1} parent=79 // pred_fallthru
              _
            // Predicated region
            $region85: #{tpu_custom_call.1} parent=79 // pred_check
              _
            $region86: #{tpu_custom_call.1} parent=79 // pred_check_branch
              %445 = sbr.rel target = $region88
            $region87: #{tpu_custom_call.1} parent=79 // pred_region
              loop: start=0, step=1, limit=1
              $region89: #{tpu_custom_call.1} parent=87 // loop_pre_header
                _
              $region90: #{tpu_custom_call.1} parent=87 // loop_header
                %s448 = sphi 0, %s452
                %p449 = scmp.ge.s32.totalorder %s448, 1
                %s453 = sphi %s439, %s439
                %s454 = sphi %s437, %s437
              $region91: #{tpu_custom_call.1} parent=87 // loop_header_branch
                %451 = sbr.rel (%p449) target = $region95
              $region92: #{tpu_custom_call.1} parent=87 // loop_body
                %v455 = vld [vmem:[%s453] sm:$0xff]
                %456 = vst [vmem:[%s454] sm:$0xff] %v455
                %v457 = vld [vmem:[%s453 + $0x10] sm:$0xff]
                %458 = vst [vmem:[%s454 + $0x8] sm:$0xff] %v457
                %v459 = vld [vmem:[%s453 + $0x20] sm:$0xff]
                %460 = vst [vmem:[%s454 + $0x10] sm:$0xff] %v459
                %v461 = vld [vmem:[%s453 + $0x30] sm:$0xff]
                %462 = vst [vmem:[%s454 + $0x18] sm:$0xff] %v461
              $region93: #{tpu_custom_call.1} parent=87 // loop_footer
                %s452 = sadd.s32 1, %s448
              $region94: #{tpu_custom_call.1} parent=87 // loop_footer_branch
                %447 = sbr.rel target = $region90
              $region95: #{tpu_custom_call.1} parent=87 // loop_exit
                _
            $region88: #{tpu_custom_call.1} parent=79 // pred_fallthru
              _
          $region80: #{tpu_custom_call.1} parent=75 // pred_fallthru
            _
          %483 = vnop
        $region76: #{tpu_custom_call.1} parent=71 // pred_fallthru
          _
      $region72: #{tpu_custom_call.1} parent=5 // pred_fallthru
        _
      %p484 = scmp.le.s32.totalorder 1, %s24
      %p485 = scmp.lt.s32.totalorder %s24, 3
      %p486 = pnand %p484, %p485
      %p487 = pneg %p486
      // Predicated region
      $region111: #{tpu_custom_call.1} parent=5 // pred_check
        _
      $region112: #{tpu_custom_call.1} parent=5 // pred_check_branch
        %489 = sbr.rel (%p486) target = $region114
      $region113: #{tpu_custom_call.1} parent=5 // pred_region
        %s490 = ssub.s32 %s24, 1
        %s491 = sand.u32 %s37, 1
        %s492 = sand.u32 %s37, 1
        %s493 = smul.addr %s492, 32
        %s494 = scalar_lea.vmem [#allocation2], %s493
        // Predicated region
        $region115: #{tpu_custom_call.1} parent=113 // pred_check
          %p495 = pneg %p50
        $region116: #{tpu_custom_call.1} parent=113 // pred_check_branch
          %497 = sbr.rel (%p495) target = $region118
        $region117: #{tpu_custom_call.1} parent=113 // pred_region
          _
        $region118: #{tpu_custom_call.1} parent=113 // pred_fallthru
          _
        %s498 = sand.u32 %s37, 1
        %s499 = sand.u32 %s37, 1
        %s500 = smul.addr %s499, 32
        %s501 = scalar_lea.vmem [#allocation2], %s500
        %p502 = pneg %p50
        %p503 = pneg %p47
        %p504 = pneg %p71
        %p505 = pneg %p68
        %p506 = pneg %p92
        %p507 = pneg %p89
        %p508 = pneg %p113
        %p509 = pneg %p110
        %p510 = pneg %p134
        %p511 = pneg %p131
        %p512 = pneg %p155
        %p513 = pneg %p152
        %p514 = pneg %p176
        %p515 = pneg %p173
        %p516 = pneg %p197
        %p517 = pneg %p194
        %p518 = pneg %p218
        %p519 = pneg %p215
        %p520 = pneg %p239
        %p521 = pneg %p236
        %p522 = pneg %p260
        %p523 = pneg %p257
        %p524 = pneg %p281
        %p525 = pneg %p278
        %p526 = pneg %p302
        %p527 = pneg %p299
        %p528 = pneg %p323
        %p529 = pneg %p320
        %p530 = pneg %p344
        %p531 = pneg %p341
        %p532 = pneg %p370
        %p533 = pneg %p367
        %s534 = sand.u32 %s357, 1
        %s535 = scalar_lea.sflag [#allocation4], %s534
        %s536 = sand.u32 %s357, 1
        %s537 = smul.addr %s536, 88
        %s538 = scalar_lea.vmem [#allocation3], %s537
        %v539 = vld [vmem:[%s494] sm:$0xff]
        %v540 = vld [vmem:[%s494 + $0x8] sm:$0xff]
        %v541 = vld [vmem:[%s494 + $0x10] sm:$0xff]
        %v542 = vld [vmem:[%s494 + $0x18] sm:$0x3f]
        %v543 = vld [vmem:[%s10] sm:$0xff]
        %v544 = vld [vmem:[%s10 + $0x8] sm:$0xff]
        %v545 = vld [vmem:[%s10 + $0x10] sm:$0xff]
        %v546 = vld [vmem:[%s10 + $0x18] sm:$0xff]
        %v547 = vld [vmem:[%s10 + $0x20] sm:$0xff]
        %v548 = vld [vmem:[%s10 + $0x28] sm:$0xff]
        %v549 = vld [vmem:[%s10 + $0x30] sm:$0xff]
        %v550 = vld [vmem:[%s10 + $0x38] sm:$0xff]
        %v551 = vld [vmem:[%s10 + $0x40] sm:$0xff]
        %v552 = vld [vmem:[%s10 + $0x48] sm:$0xff]
        %v553 = vld [vmem:[%s10 + $0x50] sm:$0xff]
        %v554 = vld [vmem:[%s10 + $0x58] sm:$0xff]
        %v555 = vld [vmem:[%s10 + $0x60] sm:$0xff]
        %v556 = vld [vmem:[%s10 + $0x68] sm:$0xff]
        %v557 = vld [vmem:[%s10 + $0x70] sm:$0xff]
        %v558 = vld [vmem:[%s10 + $0x78] sm:$0xff]
        %v559 = vld [vmem:[%s1] sm:$0xff]
        %v560 = vld [vmem:[%s1 + $0x8] sm:$0xff]
        %v561 = vld [vmem:[%s1 + $0x10] sm:$0xff]
        %v562 = vld [vmem:[%s1 + $0x18] sm:$0xff]
        %v563 = vld [vmem:[%s1 + $0x20] sm:$0xff]
        %v564 = vld [vmem:[%s1 + $0x28] sm:$0xff]
        %v565 = vld [vmem:[%s1 + $0x30] sm:$0xff]
        %v566 = vld [vmem:[%s1 + $0x38] sm:$0xff]
        %v567 = vld [vmem:[%s1 + $0x40] sm:$0xff]
        %v568 = vld [vmem:[%s1 + $0x48] sm:$0xff]
        %v569 = vld [vmem:[%s1 + $0x50] sm:$0xff]
        %v570 = vld [vmem:[%s1 + $0x58] sm:$0xff]
        %v571 = vld [vmem:[%s1 + $0x60] sm:$0xff]
        %v572 = vld [vmem:[%s1 + $0x68] sm:$0xff]
        %v573 = vld [vmem:[%s2] sm:$0xff]
        %v574 = vld [vmem:[%s2 + $0x8] sm:$0xff]
        %v575 = vld [vmem:[%s2 + $0x10] sm:$0xff]
        %v576 = vld [vmem:[%s2 + $0x18] sm:$0xff]
        %v577 = vld [vmem:[%s2 + $0x20] sm:$0xff]
        %v578 = vld [vmem:[%s2 + $0x28] sm:$0xff]
        %v579 = vld [vmem:[%s2 + $0x30] sm:$0xff]
        %v580 = vld [vmem:[%s2 + $0x38] sm:$0xff]
        %v581 = vld [vmem:[%s2 + $0x40] sm:$0xff]
        %v582 = vld [vmem:[%s2 + $0x48] sm:$0xff]
        %v583 = vld [vmem:[%s2 + $0x50] sm:$0xff]
        %v584 = vld [vmem:[%s2 + $0x58] sm:$0xff]
        %v585 = vld [vmem:[%s2 + $0x60] sm:$0xff]
        %v586 = vld [vmem:[%s2 + $0x68] sm:$0xff]
        %588 = vset.pattern.permute.xlu0 0
        %589 = vperm.xlu0 %588, %v573
        %v590 = vpop.permute.xlu0 %589
        %593 = vset.pattern.permute.xlu0 0
        %594 = vperm.xlu0 %593, %v574
        %v595 = vpop.permute.xlu0 %594
        %598 = vset.pattern.permute.xlu0 0
        %599 = vperm.xlu0 %598, %v575
        %v600 = vpop.permute.xlu0 %599
        %603 = vset.pattern.permute.xlu0 0
        %604 = vperm.xlu0 %603, %v576
        %v605 = vpop.permute.xlu0 %604
        %608 = vset.pattern.permute.xlu0 0
        %609 = vperm.xlu0 %608, %v577
        %v610 = vpop.permute.xlu0 %609
        %613 = vset.pattern.permute.xlu0 0
        %614 = vperm.xlu0 %613, %v578
        %v615 = vpop.permute.xlu0 %614
        %618 = vset.pattern.permute.xlu0 0
        %619 = vperm.xlu0 %618, %v579
        %v620 = vpop.permute.xlu0 %619
        %623 = vset.pattern.permute.xlu0 0
        %624 = vperm.xlu0 %623, %v580
        %v625 = vpop.permute.xlu0 %624
        %628 = vset.pattern.permute.xlu0 0
        %629 = vperm.xlu0 %628, %v581
        %v630 = vpop.permute.xlu0 %629
        %633 = vset.pattern.permute.xlu0 0
        %634 = vperm.xlu0 %633, %v582
        %v635 = vpop.permute.xlu0 %634
        %638 = vset.pattern.permute.xlu0 0
        %639 = vperm.xlu0 %638, %v583
        %v640 = vpop.permute.xlu0 %639
        %643 = vset.pattern.permute.xlu0 0
        %644 = vperm.xlu0 %643, %v584
        %v645 = vpop.permute.xlu0 %644
        %648 = vset.pattern.permute.xlu0 0
        %649 = vperm.xlu0 %648, %v585
        %v650 = vpop.permute.xlu0 %649
        %653 = vset.pattern.permute.xlu0 0
        %654 = vperm.xlu0 %653, %v586
        %v655 = vpop.permute.xlu0 %654
        %vm657 = vcmask 244736
        %v659 = vsel %vm657, %v559, 0
        %v662 = vsel %vm657, %v560, 0
        %v665 = vsel %vm657, %v561, 0
        %v668 = vsel %vm657, %v562, 0
        %v671 = vsel %vm657, %v563, 0
        %v674 = vsel %vm657, %v564, 0
        %v677 = vsel %vm657, %v565, 0
        %v680 = vsel %vm657, %v566, 0
        %v683 = vsel %vm657, %v567, 0
        %v686 = vsel %vm657, %v568, 0
        %v689 = vsel %vm657, %v569, 0
        %v692 = vsel %vm657, %v570, 0
        %v695 = vsel %vm657, %v571, 0
        %v698 = vsel %vm657, %v572, 0
        %vm700 = vcmask 1045504
        %v702 = vsel %vm700, %v542, 0
        %704 = vmatprep.subr.mxu0 0.0
        %705 = vmatpush1.msra.mxu0 %v539
        %706 = vmatprep.subr.mxu0 0.0
        %707 = vmatpush1.msra.mxu0 %v540
        %708 = vmatprep.subr.mxu0 0.0
        %709 = vmatpush1.msra.mxu0 %v541
        %710 = vmatprep.subr.mxu0 0.0
        %711 = vmatpush1.msra.mxu0 %v702
        %712 = vmatprep.subr.mxu0 0.0
        %713 = vmatpush1.msra.mxu0 0.0
        %714 = vmatprep.subr.mxu0 0.0
        %715 = vmatpush1.msra.mxu0 0.0
        %716 = vmatprep.subr.mxu0 0.0
        %717 = vmatpush1.msra.mxu0 0.0
        %718 = vmatprep.subr.mxu0 0.0
        %719 = vmatpush1.msra.mxu0 0.0
        %720 = vmatprep.subr.mxu0 0.0
        %721 = vmatpush1.msra.mxu0 0.0
        %722 = vmatprep.subr.mxu0 0.0
        %723 = vmatpush1.msra.mxu0 0.0
        %724 = vmatprep.subr.mxu0 0.0
        %725 = vmatpush1.msra.mxu0 0.0
        %726 = vmatprep.subr.mxu0 0.0
        %727 = vmatpush1.msra.mxu0 0.0
        %728 = vmatprep.subr.mxu0 0.0
        %729 = vmatpush1.msra.mxu0 0.0
        %730 = vmatprep.subr.mxu0 0.0
        %731 = vmatpush1.msra.mxu0 0.0
        %732 = vmatprep.subr.mxu0 0.0
        %733 = vmatpush1.msra.mxu0 0.0
        %734 = vmatprep.subr.mxu0 0.0
        %735 = vmatpush1.msra.mxu0 0.0
        %736 = vmatprep.subr.mxu0 0.0
        %737 = vmatpush1.msra.mxu0 0.0
        %738 = vmatprep.subr.mxu0 0.0
        %739 = vmatpush1.msra.mxu0 0.0
        %740 = vmatprep.subr.mxu0 0.0
        %741 = vmatpush1.msra.mxu0 0.0
        %742 = vmatprep.subr.mxu0 0.0
        %743 = vmatpush1.msra.mxu0 0.0
        %744 = vmatprep.subr.mxu0 0.0
        %745 = vmatpush1.msra.mxu0 0.0
        %746 = vmatprep.subr.mxu0 0.0
        %747 = vmatpush1.msra.mxu0 0.0
        %748 = vmatprep.subr.mxu0 0.0
        %749 = vmatpush1.msra.mxu0 0.0
        %750 = vmatprep.subr.mxu0 0.0
        %751 = vmatpush1.msra.mxu0 0.0
        %752 = vmatprep.subr.mxu0 0.0
        %753 = vmatpush1.msra.mxu0 0.0
        %754 = vmatprep.subr.mxu0 0.0
        %755 = vmatpush1.msra.mxu0 0.0
        %756 = vmatprep.subr.mxu0 0.0
        %757 = vmatpush1.msra.mxu0 0.0
        %758 = vmatprep.subr.mxu0 0.0
        %759 = vmatpush1.msra.mxu0 0.0
        %760 = vmatprep.subr.mxu0 0.0
        %761 = vmatpush1.msra.mxu0 0.0
        %762 = vmatprep.subr.mxu0 0.0
        %763 = vmatpush1.msra.mxu0 0.0
        %764 = vmatprep.subr.mxu0 0.0
        %765 = vmatpush1.msra.mxu0 0.0
        %766 = vmatprep.subr.mxu0 0.0
        %767 = vmatpush1.msra.mxu0 0.0
        %768 = vmatprep.mubr.f32.mxu0 0.0
        %769 = vmatmul.mubr.f32.gmra.mrb[0].mxu0 %v659
        %v770 = vpop.f32.mrb[0].mxu0
        %v771 = vadd.f32 %v590, %v770
        %v772 = vpop.f32.mrb[0].mxu0
        %773 = vmatprep.mubr.f32.mxu0 0.0
        %774 = vmatmul.mubr.f32.gmra.mrb[0].mxu0 %v662
        %v775 = vpop.f32.mrb[0].mxu0
        %v776 = vadd.f32 %v595, %v775
        %v777 = vpop.f32.mrb[0].mxu0
        %778 = vmatprep.mubr.f32.mxu0 0.0
        %779 = vmatmul.mubr.f32.gmra.mrb[0].mxu0 %v665
        %v780 = vpop.f32.mrb[0].mxu0
        %v781 = vadd.f32 %v600, %v780
        %v782 = vpop.f32.mrb[0].mxu0
        %783 = vmatprep.mubr.f32.mxu0 0.0
        %784 = vmatmul.mubr.f32.gmra.mrb[0].mxu0 %v668
        %v785 = vpop.f32.mrb[0].mxu0
        %v786 = vadd.f32 %v605, %v785
        %v787 = vpop.f32.mrb[0].mxu0
        %788 = vmatprep.mubr.f32.mxu0 0.0
        %789 = vmatmul.mubr.f32.gmra.mrb[0].mxu0 %v671
        %v790 = vpop.f32.mrb[0].mxu0
        %v791 = vadd.f32 %v610, %v790
        %v792 = vpop.f32.mrb[0].mxu0
        %793 = vmatprep.mubr.f32.mxu0 0.0
        %794 = vmatmul.mubr.f32.gmra.mrb[0].mxu0 %v674
        %v795 = vpop.f32.mrb[0].mxu0
        %v796 = vadd.f32 %v615, %v795
        %v797 = vpop.f32.mrb[0].mxu0
        %798 = vmatprep.mubr.f32.mxu0 0.0
        %799 = vmatmul.mubr.f32.gmra.mrb[0].mxu0 %v677
        %v800 = vpop.f32.mrb[0].mxu0
        %v801 = vadd.f32 %v620, %v800
        %v802 = vpop.f32.mrb[0].mxu0
        %803 = vmatprep.mubr.f32.mxu0 0.0
        %804 = vmatmul.mubr.f32.gmra.mrb[0].mxu0 %v680
        %v805 = vpop.f32.mrb[0].mxu0
        %v806 = vadd.f32 %v625, %v805
        %v807 = vpop.f32.mrb[0].mxu0
        %808 = vmatprep.mubr.f32.mxu0 0.0
        %809 = vmatmul.mubr.f32.gmra.mrb[0].mxu0 %v683
        %v810 = vpop.f32.mrb[0].mxu0
        %v811 = vadd.f32 %v630, %v810
        %v812 = vpop.f32.mrb[0].mxu0
        %813 = vmatprep.mubr.f32.mxu0 0.0
        %814 = vmatmul.mubr.f32.gmra.mrb[0].mxu0 %v686
        %v815 = vpop.f32.mrb[0].mxu0
        %v816 = vadd.f32 %v635, %v815
        %v817 = vpop.f32.mrb[0].mxu0
        %818 = vmatprep.mubr.f32.mxu0 0.0
        %819 = vmatmul.mubr.f32.gmra.mrb[0].mxu0 %v689
        %v820 = vpop.f32.mrb[0].mxu0
        %v821 = vadd.f32 %v640, %v820
        %v822 = vpop.f32.mrb[0].mxu0
        %823 = vmatprep.mubr.f32.mxu0 0.0
        %824 = vmatmul.mubr.f32.gmra.mrb[0].mxu0 %v692
        %v825 = vpop.f32.mrb[0].mxu0
        %v826 = vadd.f32 %v645, %v825
        %v827 = vpop.f32.mrb[0].mxu0
        %828 = vmatprep.mubr.f32.mxu0 0.0
        %829 = vmatmul.mubr.f32.gmra.mrb[0].mxu0 %v695
        %v830 = vpop.f32.mrb[0].mxu0
        %v831 = vadd.f32 %v650, %v830
        %v832 = vpop.f32.mrb[0].mxu0
        %833 = vmatprep.mubr.f32.mxu0 0.0
        %834 = vmatmul.mubr.f32.gmra.mrb[0].mxu0 %v698
        %v835 = vpop.f32.mrb[0].mxu0
        %v836 = vadd.f32 %v655, %v835
        %v837 = vpop.f32.mrb[0].mxu0
        %838 = vdwg.mxu0
        %v839 = vxor.u32 %v806, 2147483648
        %v840 = vxor.u32 %v811, 2147483648
        %v841 = vxor.u32 %v816, 2147483648
        %v842 = vxor.u32 %v821, 2147483648
        %v843 = vxor.u32 %v826, 2147483648
        %v844 = vxor.u32 %v831, 2147483648
        %v845 = vxor.u32 %v836, 2147483648
        %v846 = vmul.f32 %v839, 1.442695
        %v847 = vpow.pop %v846
        %v848 = vmul.f32 %v840, 1.442695
        %v849 = vpow.pop %v848
        %v850 = vmul.f32 %v841, 1.442695
        %v851 = vpow.pop %v850
        %v852 = vmul.f32 %v842, 1.442695
        %v853 = vpow.pop %v852
        %v854 = vmul.f32 %v843, 1.442695
        %v855 = vpow.pop %v854
        %v856 = vmul.f32 %v844, 1.442695
        %v857 = vpow.pop %v856
        %v858 = vmul.f32 %v845, 1.442695
        %v859 = vpow.pop %v858
        %v860 = vadd.f32 %v847, 1.0
        %v861 = vadd.f32 %v849, 1.0
        %v862 = vadd.f32 %v851, 1.0
        %v863 = vadd.f32 %v853, 1.0
        %v864 = vadd.f32 %v855, 1.0
        %v865 = vadd.f32 %v857, 1.0
        %v866 = vadd.f32 %v859, 1.0
        %v867 = vrcp.pop %v860
        %v868 = vmul.f32 1.0, %v867
        %v869 = vrcp.pop %v861
        %v870 = vmul.f32 1.0, %v869
        %v871 = vrcp.pop %v862
        %v872 = vmul.f32 1.0, %v871
        %v873 = vrcp.pop %v863
        %v874 = vmul.f32 1.0, %v873
        %v875 = vrcp.pop %v864
        %v876 = vmul.f32 1.0, %v875
        %v877 = vrcp.pop %v865
        %v878 = vmul.f32 1.0, %v877
        %v879 = vrcp.pop %v866
        %v880 = vmul.f32 1.0, %v879
        %v881 = vmul.f32 %v771, %v868
        %v882 = vmul.f32 %v776, %v870
        %v883 = vmul.f32 %v781, %v872
        %v884 = vmul.f32 %v786, %v874
        %v885 = vmul.f32 %v791, %v876
        %v886 = vmul.f32 %v796, %v878
        %v887 = vmul.f32 %v801, %v880
        %v888 = vld [vmem:[%s11] sm:$0xff]
        %v889 = vld [vmem:[%s11 + $0x8] sm:$0xff]
        %v890 = vld [vmem:[%s11 + $0x10] sm:$0xff]
        %v891 = vld [vmem:[%s11 + $0x18] sm:$0xff]
        %v892 = vld [vmem:[%s11 + $0x20] sm:$0xff]
        %v893 = vld [vmem:[%s11 + $0x28] sm:$0xff]
        %v894 = vld [vmem:[%s11 + $0x30] sm:$0xf]
        %v895 = vld [vmem:[%s7] sm:$0xff]
        %v896 = vld [vmem:[%s7 + $0x8] sm:$0xff]
        %v897 = vld [vmem:[%s7 + $0x10] sm:$0xff]
        %v898 = vld [vmem:[%s7 + $0x18] sm:$0xff]
        %v899 = vld [vmem:[%s7 + $0x20] sm:$0xff]
        %v900 = vld [vmem:[%s7 + $0x28] sm:$0xff]
        %v901 = vld [vmem:[%s7 + $0x30] sm:$0xff]
        %v902 = vld [vmem:[%s7 + $0x38] sm:$0xff]
        %v903 = vld [vmem:[%s7 + $0x40] sm:$0xff]
        %v904 = vld [vmem:[%s7 + $0x48] sm:$0xff]
        %v905 = vld [vmem:[%s7 + $0x50] sm:$0xff]
        %v906 = vld [vmem:[%s7 + $0x58] sm:$0xff]
        %v907 = vld [vmem:[%s7 + $0x60] sm:$0xff]
        %v908 = vld [vmem:[%s7 + $0x68] sm:$0xff]
        %v909 = vld [vmem:[%s7 + $0x70] sm:$0xff]
        %v910 = vld [vmem:[%s7 + $0x78] sm:$0xff]
        %911 = vmatprep.subr.mxu0 0.0
        %912 = vmatpush1.msra.mxu0 %v895
        %913 = vmatprep.subr.mxu0 0.0
        %914 = vmatpush1.msra.mxu0 %v896
        %915 = vmatprep.subr.mxu0 0.0
        %916 = vmatpush1.msra.mxu0 %v897
        %917 = vmatprep.subr.mxu0 0.0
        %918 = vmatpush1.msra.mxu0 %v898
        %919 = vmatprep.subr.mxu0 0.0
        %920 = vmatpush1.msra.mxu0 %v899
        %921 = vmatprep.subr.mxu0 0.0
        %922 = vmatpush1.msra.mxu0 %v900
        %923 = vmatprep.subr.mxu0 0.0
        %924 = vmatpush1.msra.mxu0 %v901
        %925 = vmatprep.subr.mxu0 0.0
        %926 = vmatpush1.msra.mxu0 %v902
        %927 = vmatprep.subr.mxu0 0.0
        %928 = vmatpush1.msra.mxu0 %v903
        %929 = vmatprep.subr.mxu0 0.0
        %930 = vmatpush1.msra.mxu0 %v904
        %931 = vmatprep.subr.mxu0 0.0
        %932 = vmatpush1.msra.mxu0 %v905
        %933 = vmatprep.subr.mxu0 0.0
        %934 = vmatpush1.msra.mxu0 %v906
        %935 = vmatprep.subr.mxu0 0.0
        %936 = vmatpush1.msra.mxu0 %v907
        %937 = vmatprep.subr.mxu0 0.0
        %938 = vmatpush1.msra.mxu0 %v908
        %939 = vmatprep.subr.mxu0 0.0
        %940 = vmatpush1.msra.mxu0 %v909
        %941 = vmatprep.subr.mxu0 0.0
        %942 = vmatpush1.msra.mxu0 %v910
        %943 = vmatprep.subr.mxu0 0.0
        %944 = vmatpush1.msra.mxu0 0.0
        %945 = vmatprep.subr.mxu0 0.0
        %946 = vmatpush1.msra.mxu0 0.0
        %947 = vmatprep.subr.mxu0 0.0
        %948 = vmatpush1.msra.mxu0 0.0
        %949 = vmatprep.subr.mxu0 0.0
        %950 = vmatpush1.msra.mxu0 0.0
        %951 = vmatprep.subr.mxu0 0.0
        %952 = vmatpush1.msra.mxu0 0.0
        %953 = vmatprep.subr.mxu0 0.0
        %954 = vmatpush1.msra.mxu0 0.0
        %955 = vmatprep.subr.mxu0 0.0
        %956 = vmatpush1.msra.mxu0 0.0
        %957 = vmatprep.subr.mxu0 0.0
        %958 = vmatpush1.msra.mxu0 0.0
        %959 = vmatprep.subr.mxu0 0.0
        %960 = vmatpush1.msra.mxu0 0.0
        %961 = vmatprep.subr.mxu0 0.0
        %962 = vmatpush1.msra.mxu0 0.0
        %963 = vmatprep.subr.mxu0 0.0
        %964 = vmatpush1.msra.mxu0 0.0
        %965 = vmatprep.subr.mxu0 0.0
        %966 = vmatpush1.msra.mxu0 0.0
        %967 = vmatprep.subr.mxu0 0.0
        %968 = vmatpush1.msra.mxu0 0.0
        %969 = vmatprep.subr.mxu0 0.0
        %970 = vmatpush1.msra.mxu0 0.0
        %971 = vmatprep.subr.mxu0 0.0
        %972 = vmatpush1.msra.mxu0 0.0
        %973 = vmatprep.subr.mxu0 0.0
        %974 = vmatpush1.msra.mxu0 0.0
        %975 = vmatprep.mubr.f32.mxu0 0.0
        %976 = vmatmul.mubr.f32.gmra.mrb[0].mxu0 %v881
        %v977 = vpop.f32.mrb[0].mxu0
        %v978 = vadd.f32 0.0, %v977
        %v979 = vpop.f32.mrb[0].mxu0
        %980 = vmatprep.mubr.f32.mxu0 0.0
        %981 = vmatmul.mubr.f32.gmra.mrb[0].mxu0 %v882
        %v982 = vpop.f32.mrb[0].mxu0
        %v983 = vadd.f32 0.0, %v982
        %v984 = vpop.f32.mrb[0].mxu0
        %985 = vmatprep.mubr.f32.mxu0 0.0
        %986 = vmatmul.mubr.f32.gmra.mrb[0].mxu0 %v883
        %v987 = vpop.f32.mrb[0].mxu0
        %v988 = vadd.f32 0.0, %v987
        %v989 = vpop.f32.mrb[0].mxu0
        %990 = vmatprep.mubr.f32.mxu0 0.0
        %991 = vmatmul.mubr.f32.gmra.mrb[0].mxu0 %v884
        %v992 = vpop.f32.mrb[0].mxu0
        %v993 = vadd.f32 0.0, %v992
        %v994 = vpop.f32.mrb[0].mxu0
        %995 = vmatprep.mubr.f32.mxu0 0.0
        %996 = vmatmul.mubr.f32.gmra.mrb[0].mxu0 %v885
        %v997 = vpop.f32.mrb[0].mxu0
        %v998 = vadd.f32 0.0, %v997
        %v999 = vpop.f32.mrb[0].mxu0
        %1000 = vmatprep.mubr.f32.mxu0 0.0
        %1001 = vmatmul.mubr.f32.gmra.mrb[0].mxu0 %v886
        %v1002 = vpop.f32.mrb[0].mxu0
        %v1003 = vadd.f32 0.0, %v1002
        %v1004 = vpop.f32.mrb[0].mxu0
        %1005 = vmatprep.mubr.f32.mxu0 0.0
        %1006 = vmatmul.mubr.f32.gmra.mrb[0].mxu0 %v887
        %v1007 = vpop.f32.mrb[0].mxu0
        %v1008 = vadd.f32 0.0, %v1007
        %v1009 = vpop.f32.mrb[0].mxu0
        %1010 = vdwg.mxu0
        %v1011 = vld [vmem:[%s5] sm:$0xff]
        %v1012 = vld [vmem:[%s5 + $0x8] sm:$0xff]
        %v1013 = vld [vmem:[%s5 + $0x10] sm:$0xff]
        %v1014 = vld [vmem:[%s5 + $0x18] sm:$0xff]
        %v1015 = vld [vmem:[%s5 + $0x20] sm:$0xff]
        %v1016 = vld [vmem:[%s5 + $0x28] sm:$0xff]
        %v1017 = vld [vmem:[%s5 + $0x30] sm:$0xf]
        %1019 = vset.pattern.permute.xlu0 0
        %1020 = vperm.xlu0 %1019, %v888
        %v1021 = vpop.permute.xlu0 %1020
        %1024 = vset.pattern.permute.xlu0 0
        %1025 = vperm.xlu0 %1024, %v889
        %v1026 = vpop.permute.xlu0 %1025
        %1029 = vset.pattern.permute.xlu0 0
        %1030 = vperm.xlu0 %1029, %v890
        %v1031 = vpop.permute.xlu0 %1030
        %1034 = vset.pattern.permute.xlu0 0
        %1035 = vperm.xlu0 %1034, %v891
        %v1036 = vpop.permute.xlu0 %1035
        %1039 = vset.pattern.permute.xlu0 0
        %1040 = vperm.xlu0 %1039, %v892
        %v1041 = vpop.permute.xlu0 %1040
        %1044 = vset.pattern.permute.xlu0 0
        %1045 = vperm.xlu0 %1044, %v893
        %v1046 = vpop.permute.xlu0 %1045
        %1049 = vset.pattern.permute.xlu0 0
        %1050 = vperm.xlu0 %1049, %v894
        %v1051 = vpop.permute.xlu0 %1050
        %vm1053 = vcmask 424960
        %v1055 = vsel %vm1053, %v1011, 0
        %v1058 = vsel %vm1053, %v1012, 0
        %v1061 = vsel %vm1053, %v1013, 0
        %v1064 = vsel %vm1053, %v1014, 0
        %v1067 = vsel %vm1053, %v1015, 0
        %v1070 = vsel %vm1053, %v1016, 0
        %v1073 = vsel %vm1053, %v1017, 0
        %vm1075 = vcmask 1043456
        %v1077 = vsel %vm1075, %v1008, 0
        %1079 = vmatprep.subr.mxu0 0.0
        %1080 = vmatpush1.msra.mxu0 %v978
        %1081 = vmatprep.subr.mxu0 0.0
        %1082 = vmatpush1.msra.mxu0 %v983
        %1083 = vmatprep.subr.mxu0 0.0
        %1084 = vmatpush1.msra.mxu0 %v988
        %1085 = vmatprep.subr.mxu0 0.0
        %1086 = vmatpush1.msra.mxu0 %v993
        %1087 = vmatprep.subr.mxu0 0.0
        %1088 = vmatpush1.msra.mxu0 %v998
        %1089 = vmatprep.subr.mxu0 0.0
        %1090 = vmatpush1.msra.mxu0 %v1003
        %1091 = vmatprep.subr.mxu0 0.0
        %1092 = vmatpush1.msra.mxu0 %v1077
        %1093 = vmatprep.subr.mxu0 0.0
        %1094 = vmatpush1.msra.mxu0 0.0
        %1095 = vmatprep.subr.mxu0 0.0
        %1096 = vmatpush1.msra.mxu0 0.0
        %1097 = vmatprep.subr.mxu0 0.0
        %1098 = vmatpush1.msra.mxu0 0.0
        %1099 = vmatprep.subr.mxu0 0.0
        %1100 = vmatpush1.msra.mxu0 0.0
        %1101 = vmatprep.subr.mxu0 0.0
        %1102 = vmatpush1.msra.mxu0 0.0
        %1103 = vmatprep.subr.mxu0 0.0
        %1104 = vmatpush1.msra.mxu0 0.0
        %1105 = vmatprep.subr.mxu0 0.0
        %1106 = vmatpush1.msra.mxu0 0.0
        %1107 = vmatprep.subr.mxu0 0.0
        %1108 = vmatpush1.msra.mxu0 0.0
        %1109 = vmatprep.subr.mxu0 0.0
        %1110 = vmatpush1.msra.mxu0 0.0
        %1111 = vmatprep.subr.mxu0 0.0
        %1112 = vmatpush1.msra.mxu0 0.0
        %1113 = vmatprep.subr.mxu0 0.0
        %1114 = vmatpush1.msra.mxu0 0.0
        %1115 = vmatprep.subr.mxu0 0.0
        %1116 = vmatpush1.msra.mxu0 0.0
        %1117 = vmatprep.subr.mxu0 0.0
        %1118 = vmatpush1.msra.mxu0 0.0
        %1119 = vmatprep.subr.mxu0 0.0
        %1120 = vmatpush1.msra.mxu0 0.0
        %1121 = vmatprep.subr.mxu0 0.0
        %1122 = vmatpush1.msra.mxu0 0.0
        %1123 = vmatprep.subr.mxu0 0.0
        %1124 = vmatpush1.msra.mxu0 0.0
        %1125 = vmatprep.subr.mxu0 0.0
        %1126 = vmatpush1.msra.mxu0 0.0
        %1127 = vmatprep.subr.mxu0 0.0
        %1128 = vmatpush1.msra.mxu0 0.0
        %1129 = vmatprep.subr.mxu0 0.0
        %1130 = vmatpush1.msra.mxu0 0.0
        %1131 = vmatprep.subr.mxu0 0.0
        %1132 = vmatpush1.msra.mxu0 0.0
        %1133 = vmatprep.subr.mxu0 0.0
        %1134 = vmatpush1.msra.mxu0 0.0
        %1135 = vmatprep.subr.mxu0 0.0
        %1136 = vmatpush1.msra.mxu0 0.0
        %1137 = vmatprep.subr.mxu0 0.0
        %1138 = vmatpush1.msra.mxu0 0.0
        %1139 = vmatprep.subr.mxu0 0.0
        %1140 = vmatpush1.msra.mxu0 0.0
        %1141 = vmatprep.subr.mxu0 0.0
        %1142 = vmatpush1.msra.mxu0 0.0
        %1143 = vmatprep.mubr.f32.mxu0 0.0
        %1144 = vmatmul.mubr.f32.gmra.mrb[0].mxu0 %v1055
        %v1145 = vpop.f32.mrb[0].mxu0
        %v1146 = vadd.f32 %v1021, %v1145
        %v1147 = vpop.f32.mrb[0].mxu0
        %1148 = vmatprep.mubr.f32.mxu0 0.0
        %1149 = vmatmul.mubr.f32.gmra.mrb[0].mxu0 %v1058
        %v1150 = vpop.f32.mrb[0].mxu0
        %v1151 = vadd.f32 %v1026, %v1150
        %v1152 = vpop.f32.mrb[0].mxu0
        %1153 = vmatprep.mubr.f32.mxu0 0.0
        %1154 = vmatmul.mubr.f32.gmra.mrb[0].mxu0 %v1061
        %v1155 = vpop.f32.mrb[0].mxu0
        %v1156 = vadd.f32 %v1031, %v1155
        %v1157 = vpop.f32.mrb[0].mxu0
        %1158 = vmatprep.mubr.f32.mxu0 0.0
        %1159 = vmatmul.mubr.f32.gmra.mrb[0].mxu0 %v1064
        %v1160 = vpop.f32.mrb[0].mxu0
        %v1161 = vadd.f32 %v1036, %v1160
        %v1162 = vpop.f32.mrb[0].mxu0
        %1163 = vmatprep.mubr.f32.mxu0 0.0
        %1164 = vmatmul.mubr.f32.gmra.mrb[0].mxu0 %v1067
        %v1165 = vpop.f32.mrb[0].mxu0
        %v1166 = vadd.f32 %v1041, %v1165
        %v1167 = vpop.f32.mrb[0].mxu0
        %1168 = vmatprep.mubr.f32.mxu0 0.0
        %1169 = vmatmul.mubr.f32.gmra.mrb[0].mxu0 %v1070
        %v1170 = vpop.f32.mrb[0].mxu0
        %v1171 = vadd.f32 %v1046, %v1170
        %v1172 = vpop.f32.mrb[0].mxu0
        %1173 = vmatprep.mubr.f32.mxu0 0.0
        %1174 = vmatmul.mubr.f32.gmra.mrb[0].mxu0 %v1073
        %v1175 = vpop.f32.mrb[0].mxu0
        %v1176 = vadd.f32 %v1051, %v1175
        %v1177 = vpop.f32.mrb[0].mxu0
        %1178 = vdwg.mxu0
        %v1179 = vxor.u32 %v1146, 2147483648
        %v1180 = vxor.u32 %v1151, 2147483648
        %v1181 = vxor.u32 %v1156, 2147483648
        %v1182 = vxor.u32 %v1161, 2147483648
        %v1183 = vxor.u32 %v1166, 2147483648
        %v1184 = vxor.u32 %v1171, 2147483648
        %v1185 = vxor.u32 %v1176, 2147483648
        %v1186 = vmul.f32 %v1179, 1.442695
        %v1187 = vpow.pop %v1186
        %v1188 = vmul.f32 %v1180, 1.442695
        %v1189 = vpow.pop %v1188
        %v1190 = vmul.f32 %v1181, 1.442695
        %v1191 = vpow.pop %v1190
        %v1192 = vmul.f32 %v1182, 1.442695
        %v1193 = vpow.pop %v1192
        %v1194 = vmul.f32 %v1183, 1.442695
        %v1195 = vpow.pop %v1194
        %v1196 = vmul.f32 %v1184, 1.442695
        %v1197 = vpow.pop %v1196
        %v1198 = vmul.f32 %v1185, 1.442695
        %v1199 = vpow.pop %v1198
        %v1200 = vadd.f32 %v1187, 1.0
        %v1201 = vadd.f32 %v1189, 1.0
        %v1202 = vadd.f32 %v1191, 1.0
        %v1203 = vadd.f32 %v1193, 1.0
        %v1204 = vadd.f32 %v1195, 1.0
        %v1205 = vadd.f32 %v1197, 1.0
        %v1206 = vadd.f32 %v1199, 1.0
        %v1207 = vrcp.pop %v1200
        %v1208 = vmul.f32 1.0, %v1207
        %v1209 = vrcp.pop %v1201
        %v1210 = vmul.f32 1.0, %v1209
        %v1211 = vrcp.pop %v1202
        %v1212 = vmul.f32 1.0, %v1211
        %v1213 = vrcp.pop %v1203
        %v1214 = vmul.f32 1.0, %v1213
        %v1215 = vrcp.pop %v1204
        %v1216 = vmul.f32 1.0, %v1215
        %v1217 = vrcp.pop %v1205
        %v1218 = vmul.f32 1.0, %v1217
        %v1219 = vrcp.pop %v1206
        %v1220 = vmul.f32 1.0, %v1219
        %v1221 = vld [vmem:[%s8] sm:$0xff]
        %v1222 = vld [vmem:[%s8 + $0x8] sm:$0xff]
        %v1223 = vld [vmem:[%s8 + $0x10] sm:$0xff]
        %v1224 = vld [vmem:[%s8 + $0x18] sm:$0xff]
        %v1225 = vld [vmem:[%s8 + $0x20] sm:$0xff]
        %v1226 = vld [vmem:[%s8 + $0x28] sm:$0xff]
        %v1227 = vld [vmem:[%s8 + $0x30] sm:$0xff]
        %v1228 = vld [vmem:[%s8 + $0x38] sm:$0xff]
        %v1229 = vld [vmem:[%s8 + $0x40] sm:$0xff]
        %v1230 = vld [vmem:[%s8 + $0x48] sm:$0xff]
        %v1231 = vld [vmem:[%s8 + $0x50] sm:$0xff]
        %v1232 = vld [vmem:[%s8 + $0x58] sm:$0xff]
        %v1233 = vld [vmem:[%s8 + $0x60] sm:$0xff]
        %v1234 = vld [vmem:[%s8 + $0x68] sm:$0xff]
        %v1235 = vld [vmem:[%s8 + $0x70] sm:$0xff]
        %v1236 = vld [vmem:[%s8 + $0x78] sm:$0xff]
        %vm1237 = vcmask 523264
        %v1239 = vsel %vm1237, %v1208, 0
        %v1242 = vsel %vm1237, %v1210, 0
        %v1245 = vsel %vm1237, %v1212, 0
        %v1248 = vsel %vm1237, %v1214, 0
        %v1251 = vsel %vm1237, %v1216, 0
        %v1254 = vsel %vm1237, %v1218, 0
        %v1257 = vsel %vm1237, %v1220, 0
        %1259 = vmatprep.subr.mxu0 %v1222
        %1260 = vmatpush1.msra.mxu0 %v1221
        %1261 = vmatprep.subr.mxu0 %v1224
        %1262 = vmatpush1.msra.mxu0 %v1223
        %1263 = vmatprep.subr.mxu0 %v1226
        %1264 = vmatpush1.msra.mxu0 %v1225
        %1265 = vmatprep.subr.mxu0 %v1228
        %1266 = vmatpush1.msra.mxu0 %v1227
        %1267 = vmatprep.subr.mxu0 %v1230
        %1268 = vmatpush1.msra.mxu0 %v1229
        %1269 = vmatprep.subr.mxu0 %v1232
        %1270 = vmatpush1.msra.mxu0 %v1231
        %1271 = vmatprep.subr.mxu0 %v1234
        %1272 = vmatpush1.msra.mxu0 %v1233
        %1273 = vmatprep.subr.mxu0 %v1236
        %1274 = vmatpush1.msra.mxu0 %v1235
        %1275 = vmatprep.subr.mxu0 0.0
        %1276 = vmatpush1.msra.mxu0 0.0
        %1277 = vmatprep.subr.mxu0 0.0
        %1278 = vmatpush1.msra.mxu0 0.0
        %1279 = vmatprep.subr.mxu0 0.0
        %1280 = vmatpush1.msra.mxu0 0.0
        %1281 = vmatprep.subr.mxu0 0.0
        %1282 = vmatpush1.msra.mxu0 0.0
        %1283 = vmatprep.subr.mxu0 0.0
        %1284 = vmatpush1.msra.mxu0 0.0
        %1285 = vmatprep.subr.mxu0 0.0
        %1286 = vmatpush1.msra.mxu0 0.0
        %1287 = vmatprep.subr.mxu0 0.0
        %1288 = vmatpush1.msra.mxu0 0.0
        %1289 = vmatprep.subr.mxu0 0.0
        %1290 = vmatpush1.msra.mxu0 0.0
        %1291 = vmatprep.subr.mxu0 0.0
        %1292 = vmatpush1.msra.mxu0 0.0
        %1293 = vmatprep.subr.mxu0 0.0
        %1294 = vmatpush1.msra.mxu0 0.0
        %1295 = vmatprep.subr.mxu0 0.0
        %1296 = vmatpush1.msra.mxu0 0.0
        %1297 = vmatprep.subr.mxu0 0.0
        %1298 = vmatpush1.msra.mxu0 0.0
        %1299 = vmatprep.subr.mxu0 0.0
        %1300 = vmatpush1.msra.mxu0 0.0
        %1301 = vmatprep.subr.mxu0 0.0
        %1302 = vmatpush1.msra.mxu0 0.0
        %1303 = vmatprep.subr.mxu0 0.0
        %1304 = vmatpush1.msra.mxu0 0.0
        %1305 = vmatprep.subr.mxu0 0.0
        %1306 = vmatpush1.msra.mxu0 0.0
        %1307 = vmatprep.subr.mxu0 0.0
        %1308 = vmatpush1.msra.mxu0 0.0
        %1309 = vmatprep.subr.mxu0 0.0
        %1310 = vmatpush1.msra.mxu0 0.0
        %1311 = vmatprep.subr.mxu0 0.0
        %1312 = vmatpush1.msra.mxu0 0.0
        %1313 = vmatprep.subr.mxu0 0.0
        %1314 = vmatpush1.msra.mxu0 0.0
        %1315 = vmatprep.subr.mxu0 0.0
        %1316 = vmatpush1.msra.mxu0 0.0
        %1317 = vmatprep.subr.mxu0 0.0
        %1318 = vmatpush1.msra.mxu0 0.0
        %1319 = vmatprep.subr.mxu0 0.0
        %1320 = vmatpush1.msra.mxu0 0.0
        %1321 = vmatprep.subr.mxu0 0.0
        %1322 = vmatpush1.msra.mxu0 0.0
        %1323 = vmatprep.mubr.f32.mxu0 0.0
        %1324 = vmatmul.mubr.f32.gmra.mrb[0].mxu0 %v1239
        %v1325 = vpop.f32.mrb[0].mxu0
        %v1326 = vadd.f32 0.0, %v1325
        %v1327 = vpop.f32.mrb[0].mxu0
        %v1328 = vadd.f32 0.0, %v1327
        %1329 = vmatprep.mubr.f32.mxu0 0.0
        %1330 = vmatmul.mubr.f32.gmra.mrb[0].mxu0 %v1242
        %v1331 = vpop.f32.mrb[0].mxu0
        %v1332 = vadd.f32 0.0, %v1331
        %v1333 = vpop.f32.mrb[0].mxu0
        %v1334 = vadd.f32 0.0, %v1333
        %1335 = vmatprep.mubr.f32.mxu0 0.0
        %1336 = vmatmul.mubr.f32.gmra.mrb[0].mxu0 %v1245
        %v1337 = vpop.f32.mrb[0].mxu0
        %v1338 = vadd.f32 0.0, %v1337
        %v1339 = vpop.f32.mrb[0].mxu0
        %v1340 = vadd.f32 0.0, %v1339
        %1341 = vmatprep.mubr.f32.mxu0 0.0
        %1342 = vmatmul.mubr.f32.gmra.mrb[0].mxu0 %v1248
        %v1343 = vpop.f32.mrb[0].mxu0
        %v1344 = vadd.f32 0.0, %v1343
        %v1345 = vpop.f32.mrb[0].mxu0
        %v1346 = vadd.f32 0.0, %v1345
        %1347 = vmatprep.mubr.f32.mxu0 0.0
        %1348 = vmatmul.mubr.f32.gmra.mrb[0].mxu0 %v1251
        %v1349 = vpop.f32.mrb[0].mxu0
        %v1350 = vadd.f32 0.0, %v1349
        %v1351 = vpop.f32.mrb[0].mxu0
        %v1352 = vadd.f32 0.0, %v1351
        %1353 = vmatprep.mubr.f32.mxu0 0.0
        %1354 = vmatmul.mubr.f32.gmra.mrb[0].mxu0 %v1254
        %v1355 = vpop.f32.mrb[0].mxu0
        %v1356 = vadd.f32 0.0, %v1355
        %v1357 = vpop.f32.mrb[0].mxu0
        %v1358 = vadd.f32 0.0, %v1357
        %1359 = vmatprep.mubr.f32.mxu0 0.0
        %1360 = vmatmul.mubr.f32.gmra.mrb[0].mxu0 %v1257
        %v1361 = vpop.f32.mrb[0].mxu0
        %v1362 = vadd.f32 0.0, %v1361
        %v1363 = vpop.f32.mrb[0].mxu0
        %v1364 = vadd.f32 0.0, %v1363
        %1365 = vdwg.mxu0
        %v1366 = vmul.f32 %v881, %v1326
        %v1367 = vmul.f32 %v882, %v1332
        %v1368 = vmul.f32 %v883, %v1338
        %v1369 = vmul.f32 %v884, %v1344
        %v1370 = vmul.f32 %v885, %v1350
        %v1371 = vmul.f32 %v886, %v1356
        %v1372 = vmul.f32 %v887, %v1362
        %v1373 = vmul.f32 %v1366, %v1328
        %v1374 = vmul.f32 %v1367, %v1334
        %v1375 = vmul.f32 %v1368, %v1340
        %v1376 = vmul.f32 %v1369, %v1346
        %v1377 = vmul.f32 %v1370, %v1352
        %v1378 = vmul.f32 %v1371, %v1358
        %v1379 = vmul.f32 %v1372, %v1364
        %1380 = vmatprep.subr.mxu0 0.0
        %1381 = vmatpush1.msra.mxu0 %v543
        %1382 = vmatprep.subr.mxu0 0.0
        %1383 = vmatpush1.msra.mxu0 %v544
        %1384 = vmatprep.subr.mxu0 0.0
        %1385 = vmatpush1.msra.mxu0 %v545
        %1386 = vmatprep.subr.mxu0 0.0
        %1387 = vmatpush1.msra.mxu0 %v546
        %1388 = vmatprep.subr.mxu0 0.0
        %1389 = vmatpush1.msra.mxu0 %v547
        %1390 = vmatprep.subr.mxu0 0.0
        %1391 = vmatpush1.msra.mxu0 %v548
        %1392 = vmatprep.subr.mxu0 0.0
        %1393 = vmatpush1.msra.mxu0 %v549
        %1394 = vmatprep.subr.mxu0 0.0
        %1395 = vmatpush1.msra.mxu0 %v550
        %1396 = vmatprep.subr.mxu0 0.0
        %1397 = vmatpush1.msra.mxu0 %v551
        %1398 = vmatprep.subr.mxu0 0.0
        %1399 = vmatpush1.msra.mxu0 %v552
        %1400 = vmatprep.subr.mxu0 0.0
        %1401 = vmatpush1.msra.mxu0 %v553
        %1402 = vmatprep.subr.mxu0 0.0
        %1403 = vmatpush1.msra.mxu0 %v554
        %1404 = vmatprep.subr.mxu0 0.0
        %1405 = vmatpush1.msra.mxu0 %v555
        %1406 = vmatprep.subr.mxu0 0.0
        %1407 = vmatpush1.msra.mxu0 %v556
        %1408 = vmatprep.subr.mxu0 0.0
        %1409 = vmatpush1.msra.mxu0 %v557
        %1410 = vmatprep.subr.mxu0 0.0
        %1411 = vmatpush1.msra.mxu0 %v558
        %1412 = vmatprep.subr.mxu0 0.0
        %1413 = vmatpush1.msra.mxu0 0.0
        %1414 = vmatprep.subr.mxu0 0.0
        %1415 = vmatpush1.msra.mxu0 0.0
        %1416 = vmatprep.subr.mxu0 0.0
        %1417 = vmatpush1.msra.mxu0 0.0
        %1418 = vmatprep.subr.mxu0 0.0
        %1419 = vmatpush1.msra.mxu0 0.0
        %1420 = vmatprep.subr.mxu0 0.0
        %1421 = vmatpush1.msra.mxu0 0.0
        %1422 = vmatprep.subr.mxu0 0.0
        %1423 = vmatpush1.msra.mxu0 0.0
        %1424 = vmatprep.subr.mxu0 0.0
        %1425 = vmatpush1.msra.mxu0 0.0
        %1426 = vmatprep.subr.mxu0 0.0
        %1427 = vmatpush1.msra.mxu0 0.0
        %1428 = vmatprep.subr.mxu0 0.0
        %1429 = vmatpush1.msra.mxu0 0.0
        %1430 = vmatprep.subr.mxu0 0.0
        %1431 = vmatpush1.msra.mxu0 0.0
        %1432 = vmatprep.subr.mxu0 0.0
        %1433 = vmatpush1.msra.mxu0 0.0
        %1434 = vmatprep.subr.mxu0 0.0
        %1435 = vmatpush1.msra.mxu0 0.0
        %1436 = vmatprep.subr.mxu0 0.0
        %1437 = vmatpush1.msra.mxu0 0.0
        %1438 = vmatprep.subr.mxu0 0.0
        %1439 = vmatpush1.msra.mxu0 0.0
        %1440 = vmatprep.subr.mxu0 0.0
        %1441 = vmatpush1.msra.mxu0 0.0
        %1442 = vmatprep.subr.mxu0 0.0
        %1443 = vmatpush1.msra.mxu0 0.0
        %1444 = vmatprep.mubr.f32.mxu0 0.0
        %1445 = vmatmul.mubr.f32.gmra.mrb[0].mxu0 %v1373
        %v1446 = vpop.f32.mrb[0].mxu0
        %v1447 = vadd.f32 0.0, %v1446
        %v1448 = vpop.f32.mrb[0].mxu0
        %1449 = vmatprep.mubr.f32.mxu0 0.0
        %1450 = vmatmul.mubr.f32.gmra.mrb[0].mxu0 %v1374
        %v1451 = vpop.f32.mrb[0].mxu0
        %v1452 = vadd.f32 0.0, %v1451
        %v1453 = vpop.f32.mrb[0].mxu0
        %1454 = vmatprep.mubr.f32.mxu0 0.0
        %1455 = vmatmul.mubr.f32.gmra.mrb[0].mxu0 %v1375
        %v1456 = vpop.f32.mrb[0].mxu0
        %v1457 = vadd.f32 0.0, %v1456
        %v1458 = vpop.f32.mrb[0].mxu0
        %1459 = vmatprep.mubr.f32.mxu0 0.0
        %1460 = vmatmul.mubr.f32.gmra.mrb[0].mxu0 %v1376
        %v1461 = vpop.f32.mrb[0].mxu0
        %v1462 = vadd.f32 0.0, %v1461
        %v1463 = vpop.f32.mrb[0].mxu0
        %1464 = vmatprep.mubr.f32.mxu0 0.0
        %1465 = vmatmul.mubr.f32.gmra.mrb[0].mxu0 %v1377
        %v1466 = vpop.f32.mrb[0].mxu0
        %v1467 = vadd.f32 0.0, %v1466
        %v1468 = vpop.f32.mrb[0].mxu0
        %1469 = vmatprep.mubr.f32.mxu0 0.0
        %1470 = vmatmul.mubr.f32.gmra.mrb[0].mxu0 %v1378
        %v1471 = vpop.f32.mrb[0].mxu0
        %v1472 = vadd.f32 0.0, %v1471
        %v1473 = vpop.f32.mrb[0].mxu0
        %1474 = vmatprep.mubr.f32.mxu0 0.0
        %1475 = vmatmul.mubr.f32.gmra.mrb[0].mxu0 %v1379
        %v1476 = vpop.f32.mrb[0].mxu0
        %v1477 = vadd.f32 0.0, %v1476
        %v1478 = vpop.f32.mrb[0].mxu0
        %1479 = vdwg.mxu0
        %v1480 = vsub.f32 %v1373, %v1447
        %v1481 = vsub.f32 %v1374, %v1452
        %v1482 = vsub.f32 %v1375, %v1457
        %v1483 = vsub.f32 %v1376, %v1462
        %v1484 = vsub.f32 %v1377, %v1467
        %v1485 = vsub.f32 %v1378, %v1472
        %v1486 = vsub.f32 %v1379, %v1477
        %v1487 = vmul.f32 %v1480, %v1480
        %v1488 = vmul.f32 %v1481, %v1481
        %v1489 = vmul.f32 %v1482, %v1482
        %v1490 = vmul.f32 %v1483, %v1483
        %v1491 = vmul.f32 %v1484, %v1484
        %v1492 = vmul.f32 %v1485, %v1485
        %v1493 = vmul.f32 %v1486, %v1486
        %1494 = vmatprep.subr.mxu0 0.0
        %1495 = vmatpush1.msra.mxu0 %v543
        %1496 = vmatprep.subr.mxu0 0.0
        %1497 = vmatpush1.msra.mxu0 %v544
        %1498 = vmatprep.subr.mxu0 0.0
        %1499 = vmatpush1.msra.mxu0 %v545
        %1500 = vmatprep.subr.mxu0 0.0
        %1501 = vmatpush1.msra.mxu0 %v546
        %1502 = vmatprep.subr.mxu0 0.0
        %1503 = vmatpush1.msra.mxu0 %v547
        %1504 = vmatprep.subr.mxu0 0.0
        %1505 = vmatpush1.msra.mxu0 %v548
        %1506 = vmatprep.subr.mxu0 0.0
        %1507 = vmatpush1.msra.mxu0 %v549
        %1508 = vmatprep.subr.mxu0 0.0
        %1509 = vmatpush1.msra.mxu0 %v550
        %1510 = vmatprep.subr.mxu0 0.0
        %1511 = vmatpush1.msra.mxu0 %v551
        %1512 = vmatprep.subr.mxu0 0.0
        %1513 = vmatpush1.msra.mxu0 %v552
        %1514 = vmatprep.subr.mxu0 0.0
        %1515 = vmatpush1.msra.mxu0 %v553
        %1516 = vmatprep.subr.mxu0 0.0
        %1517 = vmatpush1.msra.mxu0 %v554
        %1518 = vmatprep.subr.mxu0 0.0
        %1519 = vmatpush1.msra.mxu0 %v555
        %1520 = vmatprep.subr.mxu0 0.0
        %1521 = vmatpush1.msra.mxu0 %v556
        %1522 = vmatprep.subr.mxu0 0.0
        %1523 = vmatpush1.msra.mxu0 %v557
        %1524 = vmatprep.subr.mxu0 0.0
        %1525 = vmatpush1.msra.mxu0 %v558
        %1526 = vmatprep.subr.mxu0 0.0
        %1527 = vmatpush1.msra.mxu0 0.0
        %1528 = vmatprep.subr.mxu0 0.0
        %1529 = vmatpush1.msra.mxu0 0.0
        %1530 = vmatprep.subr.mxu0 0.0
        %1531 = vmatpush1.msra.mxu0 0.0
        %1532 = vmatprep.subr.mxu0 0.0
        %1533 = vmatpush1.msra.mxu0 0.0
        %1534 = vmatprep.subr.mxu0 0.0
        %1535 = vmatpush1.msra.mxu0 0.0
        %1536 = vmatprep.subr.mxu0 0.0
        %1537 = vmatpush1.msra.mxu0 0.0
        %1538 = vmatprep.subr.mxu0 0.0
        %1539 = vmatpush1.msra.mxu0 0.0
        %1540 = vmatprep.subr.mxu0 0.0
        %1541 = vmatpush1.msra.mxu0 0.0
        %1542 = vmatprep.subr.mxu0 0.0
        %1543 = vmatpush1.msra.mxu0 0.0
        %1544 = vmatprep.subr.mxu0 0.0
        %1545 = vmatpush1.msra.mxu0 0.0
        %1546 = vmatprep.subr.mxu0 0.0
        %1547 = vmatpush1.msra.mxu0 0.0
        %1548 = vmatprep.subr.mxu0 0.0
        %1549 = vmatpush1.msra.mxu0 0.0
        %1550 = vmatprep.subr.mxu0 0.0
        %1551 = vmatpush1.msra.mxu0 0.0
        %1552 = vmatprep.subr.mxu0 0.0
        %1553 = vmatpush1.msra.mxu0 0.0
        %1554 = vmatprep.subr.mxu0 0.0
        %1555 = vmatpush1.msra.mxu0 0.0
        %1556 = vmatprep.subr.mxu0 0.0
        %1557 = vmatpush1.msra.mxu0 0.0
        %1558 = vmatprep.mubr.f32.mxu0 0.0
        %1559 = vmatmul.mubr.f32.gmra.mrb[0].mxu0 %v1487
        %v1560 = vpop.f32.mrb[0].mxu0
        %v1561 = vadd.f32 1e-05, %v1560
        %v1562 = vpop.f32.mrb[0].mxu0
        %1563 = vmatprep.mubr.f32.mxu0 0.0
        %1564 = vmatmul.mubr.f32.gmra.mrb[0].mxu0 %v1488
        %v1565 = vpop.f32.mrb[0].mxu0
        %v1566 = vadd.f32 1e-05, %v1565
        %v1567 = vpop.f32.mrb[0].mxu0
        %1568 = vmatprep.mubr.f32.mxu0 0.0
        %1569 = vmatmul.mubr.f32.gmra.mrb[0].mxu0 %v1489
        %v1570 = vpop.f32.mrb[0].mxu0
        %v1571 = vadd.f32 1e-05, %v1570
        %v1572 = vpop.f32.mrb[0].mxu0
        %1573 = vmatprep.mubr.f32.mxu0 0.0
        %1574 = vmatmul.mubr.f32.gmra.mrb[0].mxu0 %v1490
        %v1575 = vpop.f32.mrb[0].mxu0
        %v1576 = vadd.f32 1e-05, %v1575
        %v1577 = vpop.f32.mrb[0].mxu0
        %1578 = vmatprep.mubr.f32.mxu0 0.0
        %1579 = vmatmul.mubr.f32.gmra.mrb[0].mxu0 %v1491
        %v1580 = vpop.f32.mrb[0].mxu0
        %v1581 = vadd.f32 1e-05, %v1580
        %v1582 = vpop.f32.mrb[0].mxu0
        %1583 = vmatprep.mubr.f32.mxu0 0.0
        %1584 = vmatmul.mubr.f32.gmra.mrb[0].mxu0 %v1492
        %v1585 = vpop.f32.mrb[0].mxu0
        %v1586 = vadd.f32 1e-05, %v1585
        %v1587 = vpop.f32.mrb[0].mxu0
        %1588 = vmatprep.mubr.f32.mxu0 0.0
        %1589 = vmatmul.mubr.f32.gmra.mrb[0].mxu0 %v1493
        %v1590 = vpop.f32.mrb[0].mxu0
        %v1591 = vadd.f32 1e-05, %v1590
        %v1592 = vpop.f32.mrb[0].mxu0
        %1593 = vdwg.mxu0
        %v1594 = vrsqrt.pop %v1561
        %v1595 = vrsqrt.pop %v1566
        %v1596 = vrsqrt.pop %v1571
        %v1597 = vrsqrt.pop %v1576
        %v1598 = vrsqrt.pop %v1581
        %v1599 = vrsqrt.pop %v1586
        %v1600 = vrsqrt.pop %v1591
        %v1601 = vmul.f32 %v1480, %v1594
        %v1602 = vmul.f32 %v1481, %v1595
        %v1603 = vmul.f32 %v1482, %v1596
        %v1604 = vmul.f32 %v1483, %v1597
        %v1605 = vmul.f32 %v1484, %v1598
        %v1606 = vmul.f32 %v1485, %v1599
        %v1607 = vmul.f32 %v1486, %v1600
        %1608 = vset.pattern.permute.xlu0 2
        %1609 = vperm.xlu0 %1608, %v888
        %v1610 = vpop.permute.xlu0 %1609
        %1612 = vset.pattern.permute.xlu0 2
        %1613 = vperm.xlu0 %1612, %v889
        %v1614 = vpop.permute.xlu0 %1613
        %1616 = vset.pattern.permute.xlu0 2
        %1617 = vperm.xlu0 %1616, %v890
        %v1618 = vpop.permute.xlu0 %1617
        %1620 = vset.pattern.permute.xlu0 2
        %1621 = vperm.xlu0 %1620, %v891
        %v1622 = vpop.permute.xlu0 %1621
        %1624 = vset.pattern.permute.xlu0 2
        %1625 = vperm.xlu0 %1624, %v892
        %v1626 = vpop.permute.xlu0 %1625
        %1628 = vset.pattern.permute.xlu0 2
        %1629 = vperm.xlu0 %1628, %v893
        %v1630 = vpop.permute.xlu0 %1629
        %1632 = vset.pattern.permute.xlu0 2
        %1633 = vperm.xlu0 %1632, %v894
        %v1634 = vpop.permute.xlu0 %1633
        %v1636 = vmul.f32 %v1601, %v1610
        %v1637 = vmul.f32 %v1602, %v1614
        %v1638 = vmul.f32 %v1603, %v1618
        %v1639 = vmul.f32 %v1604, %v1622
        %v1640 = vmul.f32 %v1605, %v1626
        %v1641 = vmul.f32 %v1606, %v1630
        %v1642 = vmul.f32 %v1607, %v1634
        %1643 = vset.pattern.permute.xlu0 3
        %1644 = vperm.xlu0 %1643, %v888
        %v1645 = vpop.permute.xlu0 %1644
        %1647 = vset.pattern.permute.xlu0 3
        %1648 = vperm.xlu0 %1647, %v889
        %v1649 = vpop.permute.xlu0 %1648
        %1651 = vset.pattern.permute.xlu0 3
        %1652 = vperm.xlu0 %1651, %v890
        %v1653 = vpop.permute.xlu0 %1652
        %1655 = vset.pattern.permute.xlu0 3
        %1656 = vperm.xlu0 %1655, %v891
        %v1657 = vpop.permute.xlu0 %1656
        %1659 = vset.pattern.permute.xlu0 3
        %1660 = vperm.xlu0 %1659, %v892
        %v1661 = vpop.permute.xlu0 %1660
        %1663 = vset.pattern.permute.xlu0 3
        %1664 = vperm.xlu0 %1663, %v893
        %v1665 = vpop.permute.xlu0 %1664
        %1667 = vset.pattern.permute.xlu0 3
        %1668 = vperm.xlu0 %1667, %v894
        %v1669 = vpop.permute.xlu0 %1668
        %v1671 = vadd.f32 %v1636, %v1645
        %v1672 = vadd.f32 %v1637, %v1649
        %v1673 = vadd.f32 %v1638, %v1653
        %v1674 = vadd.f32 %v1639, %v1657
        %v1675 = vadd.f32 %v1640, %v1661
        %v1676 = vadd.f32 %v1641, %v1665
        %v1677 = vadd.f32 %v1642, %v1669
        %v1678 = vld [vmem:[%s6] sm:$0xff]
        %v1679 = vld [vmem:[%s6 + $0x8] sm:$0xff]
        %v1680 = vld [vmem:[%s6 + $0x10] sm:$0xff]
        %v1681 = vld [vmem:[%s6 + $0x18] sm:$0xff]
        %v1682 = vld [vmem:[%s6 + $0x20] sm:$0xff]
        %v1683 = vld [vmem:[%s6 + $0x28] sm:$0xff]
        %v1684 = vld [vmem:[%s6 + $0x30] sm:$0xff]
        %v1685 = vld [vmem:[%s6 + $0x38] sm:$0xff]
        %v1686 = vld [vmem:[%s6 + $0x40] sm:$0xff]
        %v1687 = vld [vmem:[%s6 + $0x48] sm:$0xff]
        %v1688 = vld [vmem:[%s6 + $0x50] sm:$0xff]
        %v1689 = vld [vmem:[%s6 + $0x58] sm:$0xff]
        %v1690 = vld [vmem:[%s6 + $0x60] sm:$0xff]
        %v1691 = vld [vmem:[%s6 + $0x68] sm:$0xff]
        %v1692 = vld [vmem:[%s6 + $0x70] sm:$0xff]
        %v1693 = vld [vmem:[%s6 + $0x78] sm:$0xff]
        %v1694 = vld [vmem:[%s6 + $0x80] sm:$0xff]
        %v1695 = vld [vmem:[%s6 + $0x88] sm:$0xff]
        %v1696 = vld [vmem:[%s6 + $0x90] sm:$0xff]
        %v1697 = vld [vmem:[%s6 + $0x98] sm:$0xff]
        %v1698 = vld [vmem:[%s6 + $0xa0] sm:$0xff]
        %v1699 = vld [vmem:[%s6 + $0xa8] sm:$0xff]
        %v1700 = vld [vmem:[%s6 + $0xb0] sm:$0xff]
        %v1701 = vld [vmem:[%s6 + $0xb8] sm:$0xff]
        %v1702 = vld [vmem:[%s6 + $0xc0] sm:$0xff]
        %v1703 = vld [vmem:[%s6 + $0xc8] sm:$0xff]
        %v1704 = vld [vmem:[%s6 + $0xd0] sm:$0xff]
        %v1705 = vld [vmem:[%s6 + $0xd8] sm:$0xff]
        %v1706 = vld [vmem:[%s6 + $0xe0] sm:$0xff]
        %v1707 = vld [vmem:[%s6 + $0xe8] sm:$0xff]
        %v1708 = vld [vmem:[%s6 + $0xf0] sm:$0xff]
        %v1709 = vld [vmem:[%s6 + $0xf8] sm:$0xff]
        %v1710 = vld [vmem:[%s6 + $0x100] sm:$0xff]
        %v1711 = vld [vmem:[%s6 + $0x108] sm:$0xff]
        %v1712 = vld [vmem:[%s6 + $0x110] sm:$0xff]
        %v1713 = vld [vmem:[%s6 + $0x118] sm:$0xff]
        %v1714 = vld [vmem:[%s6 + $0x120] sm:$0xff]
        %v1715 = vld [vmem:[%s6 + $0x128] sm:$0xff]
        %v1716 = vld [vmem:[%s6 + $0x130] sm:$0xff]
        %v1717 = vld [vmem:[%s6 + $0x138] sm:$0xff]
        %v1718 = vld [vmem:[%s6 + $0x140] sm:$0xff]
        %v1719 = vld [vmem:[%s6 + $0x148] sm:$0xff]
        %v1720 = vld [vmem:[%s6 + $0x150] sm:$0xff]
        %v1721 = vld [vmem:[%s6 + $0x158] sm:$0xff]
        %v1722 = vld [vmem:[%s6 + $0x160] sm:$0xff]
        %v1723 = vld [vmem:[%s6 + $0x168] sm:$0xff]
        %v1724 = vld [vmem:[%s6 + $0x170] sm:$0xff]
        %v1725 = vld [vmem:[%s6 + $0x178] sm:$0xff]
        %v1726 = vld [vmem:[%s6 + $0x180] sm:$0xff]
        %v1727 = vld [vmem:[%s6 + $0x188] sm:$0xff]
        %v1728 = vld [vmem:[%s6 + $0x190] sm:$0xff]
        %v1729 = vld [vmem:[%s6 + $0x198] sm:$0xff]
        %v1730 = vld [vmem:[%s6 + $0x1a0] sm:$0xff]
        %v1731 = vld [vmem:[%s6 + $0x1a8] sm:$0xff]
        %v1732 = vld [vmem:[%s6 + $0x1b0] sm:$0xff]
        %v1733 = vld [vmem:[%s6 + $0x1b8] sm:$0xff]
        %v1734 = vld [vmem:[%s6 + $0x1c0] sm:$0xff]
        %v1735 = vld [vmem:[%s6 + $0x1c8] sm:$0xff]
        %v1736 = vld [vmem:[%s6 + $0x1d0] sm:$0xff]
        %v1737 = vld [vmem:[%s6 + $0x1d8] sm:$0xff]
        %v1738 = vld [vmem:[%s6 + $0x1e0] sm:$0xff]
        %v1739 = vld [vmem:[%s6 + $0x1e8] sm:$0xff]
        %v1740 = vld [vmem:[%s6 + $0x1f0] sm:$0xff]
        %v1742 = vsel %vm1053, %v1678, 0
        %v1745 = vsel %vm1053, %v1679, 0
        %v1748 = vsel %vm1053, %v1680, 0
        %v1751 = vsel %vm1053, %v1681, 0
        %v1754 = vsel %vm1053, %v1682, 0
        %v1757 = vsel %vm1053, %v1683, 0
        %v1760 = vsel %vm1053, %v1684, 0
        %v1763 = vsel %vm1053, %v1685, 0
        %v1766 = vsel %vm1053, %v1686, 0
        %v1769 = vsel %vm1053, %v1687, 0
        %v1772 = vsel %vm1053, %v1688, 0
        %v1775 = vsel %vm1053, %v1689, 0
        %v1778 = vsel %vm1053, %v1690, 0
        %v1781 = vsel %vm1053, %v1691, 0
        %v1784 = vsel %vm1053, %v1692, 0
        %v1787 = vsel %vm1053, %v1693, 0
        %v1790 = vsel %vm1053, %v1694, 0
        %v1793 = vsel %vm1053, %v1695, 0
        %v1796 = vsel %vm1053, %v1696, 0
        %v1799 = vsel %vm1053, %v1697, 0
        %v1802 = vsel %vm1053, %v1698, 0
        %v1805 = vsel %vm1053, %v1699, 0
        %v1808 = vsel %vm1053, %v1700, 0
        %v1811 = vsel %vm1053, %v1701, 0
        %v1814 = vsel %vm1053, %v1702, 0
        %v1817 = vsel %vm1053, %v1703, 0
        %v1820 = vsel %vm1053, %v1704, 0
        %v1823 = vsel %vm1053, %v1705, 0
        %v1826 = vsel %vm1053, %v1706, 0
        %v1829 = vsel %vm1053, %v1707, 0
        %v1832 = vsel %vm1053, %v1708, 0
        %v1835 = vsel %vm1053, %v1709, 0
        %v1838 = vsel %vm1053, %v1710, 0
        %v1841 = vsel %vm1053, %v1711, 0
        %v1844 = vsel %vm1053, %v1712, 0
        %v1847 = vsel %vm1053, %v1713, 0
        %v1850 = vsel %vm1053, %v1714, 0
        %v1853 = vsel %vm1053, %v1715, 0
        %v1856 = vsel %vm1053, %v1716, 0
        %v1859 = vsel %vm1053, %v1717, 0
        %v1862 = vsel %vm1053, %v1718, 0
        %v1865 = vsel %vm1053, %v1719, 0
        %v1868 = vsel %vm1053, %v1720, 0
        %v1871 = vsel %vm1053, %v1721, 0
        %v1874 = vsel %vm1053, %v1722, 0
        %v1877 = vsel %vm1053, %v1723, 0
        %v1880 = vsel %vm1053, %v1724, 0
        %v1883 = vsel %vm1053, %v1725, 0
        %v1886 = vsel %vm1053, %v1726, 0
        %v1889 = vsel %vm1053, %v1727, 0
        %v1892 = vsel %vm1053, %v1728, 0
        %v1895 = vsel %vm1053, %v1729, 0
        %v1898 = vsel %vm1053, %v1730, 0
        %v1901 = vsel %vm1053, %v1731, 0
        %v1904 = vsel %vm1053, %v1732, 0
        %v1907 = vsel %vm1053, %v1733, 0
        %v1910 = vsel %vm1053, %v1734, 0
        %v1913 = vsel %vm1053, %v1735, 0
        %v1916 = vsel %vm1053, %v1736, 0
        %v1919 = vsel %vm1053, %v1737, 0
        %v1922 = vsel %vm1053, %v1738, 0
        %v1925 = vsel %vm1053, %v1739, 0
        %v1928 = vsel %vm1053, %v1740, 0
        %v1931 = vsel %vm1075, %v887, 0
        %1933 = vmatprep.subr.mxu0 0.0
        %1934 = vmatpush1.msra.mxu0 %v881
        %1935 = vmatprep.subr.mxu0 0.0
        %1936 = vmatpush1.msra.mxu0 %v882
        %1937 = vmatprep.subr.mxu0 0.0
        %1938 = vmatpush1.msra.mxu0 %v883
        %1939 = vmatprep.subr.mxu0 0.0
        %1940 = vmatpush1.msra.mxu0 %v884
        %1941 = vmatprep.subr.mxu0 0.0
        %1942 = vmatpush1.msra.mxu0 %v885
        %1943 = vmatprep.subr.mxu0 0.0
        %1944 = vmatpush1.msra.mxu0 %v886
        %1945 = vmatprep.subr.mxu0 0.0
        %1946 = vmatpush1.msra.mxu0 %v1931
        %1947 = vmatprep.subr.mxu0 0.0
        %1948 = vmatpush1.msra.mxu0 0.0
        %1949 = vmatprep.subr.mxu0 0.0
        %1950 = vmatpush1.msra.mxu0 0.0
        %1951 = vmatprep.subr.mxu0 0.0
        %1952 = vmatpush1.msra.mxu0 0.0
        %1953 = vmatprep.subr.mxu0 0.0
        %1954 = vmatpush1.msra.mxu0 0.0
        %1955 = vmatprep.subr.mxu0 0.0
        %1956 = vmatpush1.msra.mxu0 0.0
        %1957 = vmatprep.subr.mxu0 0.0
        %1958 = vmatpush1.msra.mxu0 0.0
        %1959 = vmatprep.subr.mxu0 0.0
        %1960 = vmatpush1.msra.mxu0 0.0
        %1961 = vmatprep.subr.mxu0 0.0
        %1962 = vmatpush1.msra.mxu0 0.0
        %1963 = vmatprep.subr.mxu0 0.0
        %1964 = vmatpush1.msra.mxu0 0.0
        %1965 = vmatprep.subr.mxu0 0.0
        %1966 = vmatpush1.msra.mxu0 0.0
        %1967 = vmatprep.subr.mxu0 0.0
        %1968 = vmatpush1.msra.mxu0 0.0
        %1969 = vmatprep.subr.mxu0 0.0
        %1970 = vmatpush1.msra.mxu0 0.0
        %1971 = vmatprep.subr.mxu0 0.0
        %1972 = vmatpush1.msra.mxu0 0.0
        %1973 = vmatprep.subr.mxu0 0.0
        %1974 = vmatpush1.msra.mxu0 0.0
        %1975 = vmatprep.subr.mxu0 0.0
        %1976 = vmatpush1.msra.mxu0 0.0
        %1977 = vmatprep.subr.mxu0 0.0
        %1978 = vmatpush1.msra.mxu0 0.0
        %1979 = vmatprep.subr.mxu0 0.0
        %1980 = vmatpush1.msra.mxu0 0.0
        %1981 = vmatprep.subr.mxu0 0.0
        %1982 = vmatpush1.msra.mxu0 0.0
        %1983 = vmatprep.subr.mxu0 0.0
        %1984 = vmatpush1.msra.mxu0 0.0
        %1985 = vmatprep.subr.mxu0 0.0
        %1986 = vmatpush1.msra.mxu0 0.0
        %1987 = vmatprep.subr.mxu0 0.0
        %1988 = vmatpush1.msra.mxu0 0.0
        %1989 = vmatprep.subr.mxu0 0.0
        %1990 = vmatpush1.msra.mxu0 0.0
        %1991 = vmatprep.subr.mxu0 0.0
        %1992 = vmatpush1.msra.mxu0 0.0
        %1993 = vmatprep.subr.mxu0 0.0
        %1994 = vmatpush1.msra.mxu0 0.0
        %1995 = vmatprep.subr.mxu0 0.0
        %1996 = vmatpush1.msra.mxu0 0.0
        %1997 = vmatprep.mubr.f32.mxu0 0.0
        %1998 = vmatmul.mubr.f32.gmra.mrb[0].mxu0 %v1742
        %v1999 = vpop.f32.mrb[0].mxu0
        %v2000 = vadd.f32 0.0, %v1999
        %v2001 = vpop.f32.mrb[0].mxu0
        %2002 = vmatprep.mubr.f32.mxu0 0.0
        %2003 = vmatmul.mubr.f32.gmra.mrb[0].mxu0 %v1745
        %v2004 = vpop.f32.mrb[0].mxu0
        %v2005 = vadd.f32 0.0, %v2004
        %v2006 = vpop.f32.mrb[0].mxu0
        %2007 = vmatprep.mubr.f32.mxu0 0.0
        %2008 = vmatmul.mubr.f32.gmra.mrb[0].mxu0 %v1748
        %v2009 = vpop.f32.mrb[0].mxu0
        %v2010 = vadd.f32 0.0, %v2009
        %v2011 = vpop.f32.mrb[0].mxu0
        %2012 = vmatprep.mubr.f32.mxu0 0.0
        %2013 = vmatmul.mubr.f32.gmra.mrb[0].mxu0 %v1751
        %v2014 = vpop.f32.mrb[0].mxu0
        %v2015 = vadd.f32 0.0, %v2014
        %v2016 = vpop.f32.mrb[0].mxu0
        %2017 = vmatprep.mubr.f32.mxu0 0.0
        %2018 = vmatmul.mubr.f32.gmra.mrb[0].mxu0 %v1754
        %v2019 = vpop.f32.mrb[0].mxu0
        %v2020 = vadd.f32 0.0, %v2019
        %v2021 = vpop.f32.mrb[0].mxu0
        %2022 = vmatprep.mubr.f32.mxu0 0.0
        %2023 = vmatmul.mubr.f32.gmra.mrb[0].mxu0 %v1757
        %v2024 = vpop.f32.mrb[0].mxu0
        %v2025 = vadd.f32 0.0, %v2024
        %v2026 = vpop.f32.mrb[0].mxu0
        %2027 = vmatprep.mubr.f32.mxu0 0.0
        %2028 = vmatmul.mubr.f32.gmra.mrb[0].mxu0 %v1760
        %v2029 = vpop.f32.mrb[0].mxu0
        %v2030 = vadd.f32 0.0, %v2029
        %v2031 = vpop.f32.mrb[0].mxu0
        %2032 = vmatprep.mubr.f32.mxu0 0.0
        %2033 = vmatmul.mubr.f32.gmra.mrb[0].mxu0 %v1763
        %v2034 = vpop.f32.mrb[0].mxu0
        %v2035 = vadd.f32 0.0, %v2034
        %v2036 = vpop.f32.mrb[0].mxu0
        %2037 = vmatprep.mubr.f32.mxu0 0.0
        %2038 = vmatmul.mubr.f32.gmra.mrb[0].mxu0 %v1766
        %v2039 = vpop.f32.mrb[0].mxu0
        %v2040 = vadd.f32 0.0, %v2039
        %v2041 = vpop.f32.mrb[0].mxu0
        %2042 = vmatprep.mubr.f32.mxu0 0.0
        %2043 = vmatmul.mubr.f32.gmra.mrb[0].mxu0 %v1769
        %v2044 = vpop.f32.mrb[0].mxu0
        %v2045 = vadd.f32 0.0, %v2044
        %v2046 = vpop.f32.mrb[0].mxu0
        %2047 = vmatprep.mubr.f32.mxu0 0.0
        %2048 = vmatmul.mubr.f32.gmra.mrb[0].mxu0 %v1772
        %v2049 = vpop.f32.mrb[0].mxu0
        %v2050 = vadd.f32 0.0, %v2049
        %v2051 = vpop.f32.mrb[0].mxu0
        %2052 = vmatprep.mubr.f32.mxu0 0.0
        %2053 = vmatmul.mubr.f32.gmra.mrb[0].mxu0 %v1775
        %v2054 = vpop.f32.mrb[0].mxu0
        %v2055 = vadd.f32 0.0, %v2054
        %v2056 = vpop.f32.mrb[0].mxu0
        %2057 = vmatprep.mubr.f32.mxu0 0.0
        %2058 = vmatmul.mubr.f32.gmra.mrb[0].mxu0 %v1778
        %v2059 = vpop.f32.mrb[0].mxu0
        %v2060 = vadd.f32 0.0, %v2059
        %v2061 = vpop.f32.mrb[0].mxu0
        %2062 = vmatprep.mubr.f32.mxu0 0.0
        %2063 = vmatmul.mubr.f32.gmra.mrb[0].mxu0 %v1781
        %v2064 = vpop.f32.mrb[0].mxu0
        %v2065 = vadd.f32 0.0, %v2064
        %v2066 = vpop.f32.mrb[0].mxu0
        %2067 = vmatprep.mubr.f32.mxu0 0.0
        %2068 = vmatmul.mubr.f32.gmra.mrb[0].mxu0 %v1784
        %v2069 = vpop.f32.mrb[0].mxu0
        %v2070 = vadd.f32 0.0, %v2069
        %v2071 = vpop.f32.mrb[0].mxu0
        %2072 = vmatprep.mubr.f32.mxu0 0.0
        %2073 = vmatmul.mubr.f32.gmra.mrb[0].mxu0 %v1787
        %v2074 = vpop.f32.mrb[0].mxu0
        %v2075 = vadd.f32 0.0, %v2074
        %v2076 = vpop.f32.mrb[0].mxu0
        %2077 = vmatprep.mubr.f32.mxu0 0.0
        %2078 = vmatmul.mubr.f32.gmra.mrb[0].mxu0 %v1790
        %v2079 = vpop.f32.mrb[0].mxu0
        %v2080 = vadd.f32 0.0, %v2079
        %v2081 = vpop.f32.mrb[0].mxu0
        %2082 = vmatprep.mubr.f32.mxu0 0.0
        %2083 = vmatmul.mubr.f32.gmra.mrb[0].mxu0 %v1793
        %v2084 = vpop.f32.mrb[0].mxu0
        %v2085 = vadd.f32 0.0, %v2084
        %v2086 = vpop.f32.mrb[0].mxu0
        %2087 = vmatprep.mubr.f32.mxu0 0.0
        %2088 = vmatmul.mubr.f32.gmra.mrb[0].mxu0 %v1796
        %v2089 = vpop.f32.mrb[0].mxu0
        %v2090 = vadd.f32 0.0, %v2089
        %v2091 = vpop.f32.mrb[0].mxu0
        %2092 = vmatprep.mubr.f32.mxu0 0.0
        %2093 = vmatmul.mubr.f32.gmra.mrb[0].mxu0 %v1799
        %v2094 = vpop.f32.mrb[0].mxu0
        %v2095 = vadd.f32 0.0, %v2094
        %v2096 = vpop.f32.mrb[0].mxu0
        %2097 = vmatprep.mubr.f32.mxu0 0.0
        %2098 = vmatmul.mubr.f32.gmra.mrb[0].mxu0 %v1802
        %v2099 = vpop.f32.mrb[0].mxu0
        %v2100 = vadd.f32 0.0, %v2099
        %v2101 = vpop.f32.mrb[0].mxu0
        %2102 = vmatprep.mubr.f32.mxu0 0.0
        %2103 = vmatmul.mubr.f32.gmra.mrb[0].mxu0 %v1805
        %v2104 = vpop.f32.mrb[0].mxu0
        %v2105 = vadd.f32 0.0, %v2104
        %v2106 = vpop.f32.mrb[0].mxu0
        %2107 = vmatprep.mubr.f32.mxu0 0.0
        %2108 = vmatmul.mubr.f32.gmra.mrb[0].mxu0 %v1808
        %v2109 = vpop.f32.mrb[0].mxu0
        %v2110 = vadd.f32 0.0, %v2109
        %v2111 = vpop.f32.mrb[0].mxu0
        %2112 = vmatprep.mubr.f32.mxu0 0.0
        %2113 = vmatmul.mubr.f32.gmra.mrb[0].mxu0 %v1811
        %v2114 = vpop.f32.mrb[0].mxu0
        %v2115 = vadd.f32 0.0, %v2114
        %v2116 = vpop.f32.mrb[0].mxu0
        %2117 = vmatprep.mubr.f32.mxu0 0.0
        %2118 = vmatmul.mubr.f32.gmra.mrb[0].mxu0 %v1814
        %v2119 = vpop.f32.mrb[0].mxu0
        %v2120 = vadd.f32 0.0, %v2119
        %v2121 = vpop.f32.mrb[0].mxu0
        %2122 = vmatprep.mubr.f32.mxu0 0.0
        %2123 = vmatmul.mubr.f32.gmra.mrb[0].mxu0 %v1817
        %v2124 = vpop.f32.mrb[0].mxu0
        %v2125 = vadd.f32 0.0, %v2124
        %v2126 = vpop.f32.mrb[0].mxu0
        %2127 = vmatprep.mubr.f32.mxu0 0.0
        %2128 = vmatmul.mubr.f32.gmra.mrb[0].mxu0 %v1820
        %v2129 = vpop.f32.mrb[0].mxu0
        %v2130 = vadd.f32 0.0, %v2129
        %v2131 = vpop.f32.mrb[0].mxu0
        %2132 = vmatprep.mubr.f32.mxu0 0.0
        %2133 = vmatmul.mubr.f32.gmra.mrb[0].mxu0 %v1823
        %v2134 = vpop.f32.mrb[0].mxu0
        %v2135 = vadd.f32 0.0, %v2134
        %v2136 = vpop.f32.mrb[0].mxu0
        %2137 = vmatprep.mubr.f32.mxu0 0.0
        %2138 = vmatmul.mubr.f32.gmra.mrb[0].mxu0 %v1826
        %v2139 = vpop.f32.mrb[0].mxu0
        %v2140 = vadd.f32 0.0, %v2139
        %v2141 = vpop.f32.mrb[0].mxu0
        %2142 = vmatprep.mubr.f32.mxu0 0.0
        %2143 = vmatmul.mubr.f32.gmra.mrb[0].mxu0 %v1829
        %v2144 = vpop.f32.mrb[0].mxu0
        %v2145 = vadd.f32 0.0, %v2144
        %v2146 = vpop.f32.mrb[0].mxu0
        %2147 = vmatprep.mubr.f32.mxu0 0.0
        %2148 = vmatmul.mubr.f32.gmra.mrb[0].mxu0 %v1832
        %v2149 = vpop.f32.mrb[0].mxu0
        %v2150 = vadd.f32 0.0, %v2149
        %v2151 = vpop.f32.mrb[0].mxu0
        %2152 = vmatprep.mubr.f32.mxu0 0.0
        %2153 = vmatmul.mubr.f32.gmra.mrb[0].mxu0 %v1835
        %v2154 = vpop.f32.mrb[0].mxu0
        %v2155 = vadd.f32 0.0, %v2154
        %v2156 = vpop.f32.mrb[0].mxu0
        %2157 = vmatprep.mubr.f32.mxu0 0.0
        %2158 = vmatmul.mubr.f32.gmra.mrb[0].mxu0 %v1838
        %v2159 = vpop.f32.mrb[0].mxu0
        %v2160 = vadd.f32 0.0, %v2159
        %v2161 = vpop.f32.mrb[0].mxu0
        %2162 = vmatprep.mubr.f32.mxu0 0.0
        %2163 = vmatmul.mubr.f32.gmra.mrb[0].mxu0 %v1841
        %v2164 = vpop.f32.mrb[0].mxu0
        %v2165 = vadd.f32 0.0, %v2164
        %v2166 = vpop.f32.mrb[0].mxu0
        %2167 = vmatprep.mubr.f32.mxu0 0.0
        %2168 = vmatmul.mubr.f32.gmra.mrb[0].mxu0 %v1844
        %v2169 = vpop.f32.mrb[0].mxu0
        %v2170 = vadd.f32 0.0, %v2169
        %v2171 = vpop.f32.mrb[0].mxu0
        %2172 = vmatprep.mubr.f32.mxu0 0.0
        %2173 = vmatmul.mubr.f32.gmra.mrb[0].mxu0 %v1847
        %v2174 = vpop.f32.mrb[0].mxu0
        %v2175 = vadd.f32 0.0, %v2174
        %v2176 = vpop.f32.mrb[0].mxu0
        %2177 = vmatprep.mubr.f32.mxu0 0.0
        %2178 = vmatmul.mubr.f32.gmra.mrb[0].mxu0 %v1850
        %v2179 = vpop.f32.mrb[0].mxu0
        %v2180 = vadd.f32 0.0, %v2179
        %v2181 = vpop.f32.mrb[0].mxu0
        %2182 = vmatprep.mubr.f32.mxu0 0.0
        %2183 = vmatmul.mubr.f32.gmra.mrb[0].mxu0 %v1853
        %v2184 = vpop.f32.mrb[0].mxu0
        %v2185 = vadd.f32 0.0, %v2184
        %v2186 = vpop.f32.mrb[0].mxu0
        %2187 = vmatprep.mubr.f32.mxu0 0.0
        %2188 = vmatmul.mubr.f32.gmra.mrb[0].mxu0 %v1856
        %v2189 = vpop.f32.mrb[0].mxu0
        %v2190 = vadd.f32 0.0, %v2189
        %v2191 = vpop.f32.mrb[0].mxu0
        %2192 = vmatprep.mubr.f32.mxu0 0.0
        %2193 = vmatmul.mubr.f32.gmra.mrb[0].mxu0 %v1859
        %v2194 = vpop.f32.mrb[0].mxu0
        %v2195 = vadd.f32 0.0, %v2194
        %v2196 = vpop.f32.mrb[0].mxu0
        %2197 = vmatprep.mubr.f32.mxu0 0.0
        %2198 = vmatmul.mubr.f32.gmra.mrb[0].mxu0 %v1862
        %v2199 = vpop.f32.mrb[0].mxu0
        %v2200 = vadd.f32 0.0, %v2199
        %v2201 = vpop.f32.mrb[0].mxu0
        %2202 = vmatprep.mubr.f32.mxu0 0.0
        %2203 = vmatmul.mubr.f32.gmra.mrb[0].mxu0 %v1865
        %v2204 = vpop.f32.mrb[0].mxu0
        %v2205 = vadd.f32 0.0, %v2204
        %v2206 = vpop.f32.mrb[0].mxu0
        %2207 = vmatprep.mubr.f32.mxu0 0.0
        %2208 = vmatmul.mubr.f32.gmra.mrb[0].mxu0 %v1868
        %v2209 = vpop.f32.mrb[0].mxu0
        %v2210 = vadd.f32 0.0, %v2209
        %v2211 = vpop.f32.mrb[0].mxu0
        %2212 = vmatprep.mubr.f32.mxu0 0.0
        %2213 = vmatmul.mubr.f32.gmra.mrb[0].mxu0 %v1871
        %v2214 = vpop.f32.mrb[0].mxu0
        %v2215 = vadd.f32 0.0, %v2214
        %v2216 = vpop.f32.mrb[0].mxu0
        %2217 = vmatprep.mubr.f32.mxu0 0.0
        %2218 = vmatmul.mubr.f32.gmra.mrb[0].mxu0 %v1874
        %v2219 = vpop.f32.mrb[0].mxu0
        %v2220 = vadd.f32 0.0, %v2219
        %v2221 = vpop.f32.mrb[0].mxu0
        %2222 = vmatprep.mubr.f32.mxu0 0.0
        %2223 = vmatmul.mubr.f32.gmra.mrb[0].mxu0 %v1877
        %v2224 = vpop.f32.mrb[0].mxu0
        %v2225 = vadd.f32 0.0, %v2224
        %v2226 = vpop.f32.mrb[0].mxu0
        %2227 = vmatprep.mubr.f32.mxu0 0.0
        %2228 = vmatmul.mubr.f32.gmra.mrb[0].mxu0 %v1880
        %v2229 = vpop.f32.mrb[0].mxu0
        %v2230 = vadd.f32 0.0, %v2229
        %v2231 = vpop.f32.mrb[0].mxu0
        %2232 = vmatprep.mubr.f32.mxu0 0.0
        %2233 = vmatmul.mubr.f32.gmra.mrb[0].mxu0 %v1883
        %v2234 = vpop.f32.mrb[0].mxu0
        %v2235 = vadd.f32 0.0, %v2234
        %v2236 = vpop.f32.mrb[0].mxu0
        %2237 = vmatprep.mubr.f32.mxu0 0.0
        %2238 = vmatmul.mubr.f32.gmra.mrb[0].mxu0 %v1886
        %v2239 = vpop.f32.mrb[0].mxu0
        %v2240 = vadd.f32 0.0, %v2239
        %v2241 = vpop.f32.mrb[0].mxu0
        %2242 = vmatprep.mubr.f32.mxu0 0.0
        %2243 = vmatmul.mubr.f32.gmra.mrb[0].mxu0 %v1889
        %v2244 = vpop.f32.mrb[0].mxu0
        %v2245 = vadd.f32 0.0, %v2244
        %v2246 = vpop.f32.mrb[0].mxu0
        %2247 = vmatprep.mubr.f32.mxu0 0.0
        %2248 = vmatmul.mubr.f32.gmra.mrb[0].mxu0 %v1892
        %v2249 = vpop.f32.mrb[0].mxu0
        %v2250 = vadd.f32 0.0, %v2249
        %v2251 = vpop.f32.mrb[0].mxu0
        %2252 = vmatprep.mubr.f32.mxu0 0.0
        %2253 = vmatmul.mubr.f32.gmra.mrb[0].mxu0 %v1895
        %v2254 = vpop.f32.mrb[0].mxu0
        %v2255 = vadd.f32 0.0, %v2254
        %v2256 = vpop.f32.mrb[0].mxu0
        %2257 = vmatprep.mubr.f32.mxu0 0.0
        %2258 = vmatmul.mubr.f32.gmra.mrb[0].mxu0 %v1898
        %v2259 = vpop.f32.mrb[0].mxu0
        %v2260 = vadd.f32 0.0, %v2259
        %v2261 = vpop.f32.mrb[0].mxu0
        %2262 = vmatprep.mubr.f32.mxu0 0.0
        %2263 = vmatmul.mubr.f32.gmra.mrb[0].mxu0 %v1901
        %v2264 = vpop.f32.mrb[0].mxu0
        %v2265 = vadd.f32 0.0, %v2264
        %v2266 = vpop.f32.mrb[0].mxu0
        %2267 = vmatprep.mubr.f32.mxu0 0.0
        %2268 = vmatmul.mubr.f32.gmra.mrb[0].mxu0 %v1904
        %v2269 = vpop.f32.mrb[0].mxu0
        %v2270 = vadd.f32 0.0, %v2269
        %v2271 = vpop.f32.mrb[0].mxu0
        %2272 = vmatprep.mubr.f32.mxu0 0.0
        %2273 = vmatmul.mubr.f32.gmra.mrb[0].mxu0 %v1907
        %v2274 = vpop.f32.mrb[0].mxu0
        %v2275 = vadd.f32 0.0, %v2274
        %v2276 = vpop.f32.mrb[0].mxu0
        %2277 = vmatprep.mubr.f32.mxu0 0.0
        %2278 = vmatmul.mubr.f32.gmra.mrb[0].mxu0 %v1910
        %v2279 = vpop.f32.mrb[0].mxu0
        %v2280 = vadd.f32 0.0, %v2279
        %v2281 = vpop.f32.mrb[0].mxu0
        %2282 = vmatprep.mubr.f32.mxu0 0.0
        %2283 = vmatmul.mubr.f32.gmra.mrb[0].mxu0 %v1913
        %v2284 = vpop.f32.mrb[0].mxu0
        %v2285 = vadd.f32 0.0, %v2284
        %v2286 = vpop.f32.mrb[0].mxu0
        %2287 = vmatprep.mubr.f32.mxu0 0.0
        %2288 = vmatmul.mubr.f32.gmra.mrb[0].mxu0 %v1916
        %v2289 = vpop.f32.mrb[0].mxu0
        %v2290 = vadd.f32 0.0, %v2289
        %v2291 = vpop.f32.mrb[0].mxu0
        %2292 = vmatprep.mubr.f32.mxu0 0.0
        %2293 = vmatmul.mubr.f32.gmra.mrb[0].mxu0 %v1919
        %v2294 = vpop.f32.mrb[0].mxu0
        %v2295 = vadd.f32 0.0, %v2294
        %v2296 = vpop.f32.mrb[0].mxu0
        %2297 = vmatprep.mubr.f32.mxu0 0.0
        %2298 = vmatmul.mubr.f32.gmra.mrb[0].mxu0 %v1922
        %v2299 = vpop.f32.mrb[0].mxu0
        %v2300 = vadd.f32 0.0, %v2299
        %v2301 = vpop.f32.mrb[0].mxu0
        %2302 = vmatprep.mubr.f32.mxu0 0.0
        %2303 = vmatmul.mubr.f32.gmra.mrb[0].mxu0 %v1925
        %v2304 = vpop.f32.mrb[0].mxu0
        %v2305 = vadd.f32 0.0, %v2304
        %v2306 = vpop.f32.mrb[0].mxu0
        %2307 = vmatprep.mubr.f32.mxu0 0.0
        %2308 = vmatmul.mubr.f32.gmra.mrb[0].mxu0 %v1928
        %v2309 = vpop.f32.mrb[0].mxu0
        %v2310 = vadd.f32 0.0, %v2309
        %v2311 = vpop.f32.mrb[0].mxu0
        %2312 = vdwg.mxu0
        %v2313 = vld [vmem:[%s9] sm:$0xff]
        %v2314 = vld [vmem:[%s9 + $0x8] sm:$0x1]
        %2315 = vrot.lane.b32.xlu0 %v2000, 5
        %v2316 = vpop.permute.xlu0 %2315
        %2317 = vrot.lane.b32.xlu0 %v2005, 5
        %v2318 = vpop.permute.xlu0 %2317
        %2319 = vrot.lane.b32.xlu0 %v2010, 5
        %v2320 = vpop.permute.xlu0 %2319
        %2321 = vrot.lane.b32.xlu0 %v2015, 5
        %v2322 = vpop.permute.xlu0 %2321
        %2323 = vrot.lane.b32.xlu0 %v2020, 5
        %v2324 = vpop.permute.xlu0 %2323
        %2325 = vrot.lane.b32.xlu0 %v2025, 5
        %v2326 = vpop.permute.xlu0 %2325
        %2327 = vrot.lane.b32.xlu0 %v2030, 5
        %v2328 = vpop.permute.xlu0 %2327
        %v2329 = vlaneseq
        %v2330 = vshrl.u32 %v2329, 7
        %v2331 = vsub.s32 0, %v2330
        %v2332 = vrot.slane %v2313, %v2331
        %v2333 = vmul.f32 %v2316, %v2332
        %v2334 = vmul.f32 %v2318, %v2332
        %v2335 = vmul.f32 %v2320, %v2332
        %v2336 = vmul.f32 %v2322, %v2332
        %v2337 = vmul.f32 %v2324, %v2332
        %v2338 = vmul.f32 %v2326, %v2332
        %v2339 = vmul.f32 %v2328, %v2332
        %2340 = vrot.lane.b32.xlu0 %v2035, 4
        %v2341 = vpop.permute.xlu0 %2340
        %2342 = vrot.lane.b32.xlu0 %v2040, 4
        %v2343 = vpop.permute.xlu0 %2342
        %2344 = vrot.lane.b32.xlu0 %v2045, 4
        %v2345 = vpop.permute.xlu0 %2344
        %2346 = vrot.lane.b32.xlu0 %v2050, 4
        %v2347 = vpop.permute.xlu0 %2346
        %2348 = vrot.lane.b32.xlu0 %v2055, 4
        %v2349 = vpop.permute.xlu0 %2348
        %2350 = vrot.lane.b32.xlu0 %v2060, 4
        %v2351 = vpop.permute.xlu0 %2350
        %2352 = vrot.lane.b32.xlu0 %v2065, 4
        %v2353 = vpop.permute.xlu0 %2352
        %v2354 = vlaneseq
        %v2355 = vshrl.u32 %v2354, 7
        %v2356 = vsub.s32 1, %v2355
        %v2357 = vrot.slane %v2313, %v2356
        %v2358 = vmul.f32 %v2341, %v2357
        %v2359 = vmul.f32 %v2343, %v2357
        %v2360 = vmul.f32 %v2345, %v2357
        %v2361 = vmul.f32 %v2347, %v2357
        %v2362 = vmul.f32 %v2349, %v2357
        %v2363 = vmul.f32 %v2351, %v2357
        %v2364 = vmul.f32 %v2353, %v2357
        %v2365 = vadd.f32 %v2333, %v2358
        %v2366 = vadd.f32 %v2334, %v2359
        %v2367 = vadd.f32 %v2335, %v2360
        %v2368 = vadd.f32 %v2336, %v2361
        %v2369 = vadd.f32 %v2337, %v2362
        %v2370 = vadd.f32 %v2338, %v2363
        %v2371 = vadd.f32 %v2339, %v2364
        %2372 = vrot.lane.b32.xlu0 %v2070, 3
        %v2373 = vpop.permute.xlu0 %2372
        %2374 = vrot.lane.b32.xlu0 %v2075, 3
        %v2375 = vpop.permute.xlu0 %2374
        %2376 = vrot.lane.b32.xlu0 %v2080, 3
        %v2377 = vpop.permute.xlu0 %2376
        %2378 = vrot.lane.b32.xlu0 %v2085, 3
        %v2379 = vpop.permute.xlu0 %2378
        %2380 = vrot.lane.b32.xlu0 %v2090, 3
        %v2381 = vpop.permute.xlu0 %2380
        %2382 = vrot.lane.b32.xlu0 %v2095, 3
        %v2383 = vpop.permute.xlu0 %2382
        %2384 = vrot.lane.b32.xlu0 %v2100, 3
        %v2385 = vpop.permute.xlu0 %2384
        %v2386 = vlaneseq
        %v2387 = vshrl.u32 %v2386, 7
        %v2388 = vsub.s32 2, %v2387
        %v2389 = vrot.slane %v2313, %v2388
        %v2390 = vmul.f32 %v2373, %v2389
        %v2391 = vmul.f32 %v2375, %v2389
        %v2392 = vmul.f32 %v2377, %v2389
        %v2393 = vmul.f32 %v2379, %v2389
        %v2394 = vmul.f32 %v2381, %v2389
        %v2395 = vmul.f32 %v2383, %v2389
        %v2396 = vmul.f32 %v2385, %v2389
        %v2397 = vadd.f32 %v2365, %v2390
        %v2398 = vadd.f32 %v2366, %v2391
        %v2399 = vadd.f32 %v2367, %v2392
        %v2400 = vadd.f32 %v2368, %v2393
        %v2401 = vadd.f32 %v2369, %v2394
        %v2402 = vadd.f32 %v2370, %v2395
        %v2403 = vadd.f32 %v2371, %v2396
        %2404 = vrot.lane.b32.xlu0 %v2105, 1
        %v2405 = vpop.permute.xlu0 %2404
        %2406 = vrot.lane.b32.xlu0 %v2110, 1
        %v2407 = vpop.permute.xlu0 %2406
        %2408 = vrot.lane.b32.xlu0 %v2115, 1
        %v2409 = vpop.permute.xlu0 %2408
        %2410 = vrot.lane.b32.xlu0 %v2120, 1
        %v2411 = vpop.permute.xlu0 %2410
        %2412 = vrot.lane.b32.xlu0 %v2125, 1
        %v2413 = vpop.permute.xlu0 %2412
        %2414 = vrot.lane.b32.xlu0 %v2130, 1
        %v2415 = vpop.permute.xlu0 %2414
        %2416 = vrot.lane.b32.xlu0 %v2135, 1
        %v2417 = vpop.permute.xlu0 %2416
        %v2418 = vlaneseq
        %v2419 = vshrl.u32 %v2418, 7
        %v2420 = vsub.s32 3, %v2419
        %v2421 = vrot.slane %v2313, %v2420
        %v2422 = vmul.f32 %v2405, %v2421
        %v2423 = vmul.f32 %v2407, %v2421
        %v2424 = vmul.f32 %v2409, %v2421
        %v2425 = vmul.f32 %v2411, %v2421
        %v2426 = vmul.f32 %v2413, %v2421
        %v2427 = vmul.f32 %v2415, %v2421
        %v2428 = vmul.f32 %v2417, %v2421
        %v2429 = vadd.f32 %v2397, %v2422
        %v2430 = vadd.f32 %v2398, %v2423
        %v2431 = vadd.f32 %v2399, %v2424
        %v2432 = vadd.f32 %v2400, %v2425
        %v2433 = vadd.f32 %v2401, %v2426
        %v2434 = vadd.f32 %v2402, %v2427
        %v2435 = vadd.f32 %v2403, %v2428
        %v2436 = vlaneseq
        %v2437 = vshrl.u32 %v2436, 7
        %v2438 = vsub.s32 4, %v2437
        %v2439 = vrot.slane %v2313, %v2438
        %v2440 = vmul.f32 %v2140, %v2439
        %v2441 = vmul.f32 %v2145, %v2439
        %v2442 = vmul.f32 %v2150, %v2439
        %v2443 = vmul.f32 %v2155, %v2439
        %v2444 = vmul.f32 %v2160, %v2439
        %v2445 = vmul.f32 %v2165, %v2439
        %v2446 = vmul.f32 %v2170, %v2439
        %v2447 = vadd.f32 %v2429, %v2440
        %v2448 = vadd.f32 %v2430, %v2441
        %v2449 = vadd.f32 %v2431, %v2442
        %v2450 = vadd.f32 %v2432, %v2443
        %v2451 = vadd.f32 %v2433, %v2444
        %v2452 = vadd.f32 %v2434, %v2445
        %v2453 = vadd.f32 %v2435, %v2446
        %2454 = vrot.lane.b32.xlu0 %v2175, 127
        %v2455 = vpop.permute.xlu0 %2454
        %2456 = vrot.lane.b32.xlu0 %v2180, 127
        %v2457 = vpop.permute.xlu0 %2456
        %2458 = vrot.lane.b32.xlu0 %v2185, 127
        %v2459 = vpop.permute.xlu0 %2458
        %2460 = vrot.lane.b32.xlu0 %v2190, 127
        %v2461 = vpop.permute.xlu0 %2460
        %2462 = vrot.lane.b32.xlu0 %v2195, 127
        %v2463 = vpop.permute.xlu0 %2462
        %2464 = vrot.lane.b32.xlu0 %v2200, 127
        %v2465 = vpop.permute.xlu0 %2464
        %2466 = vrot.lane.b32.xlu0 %v2205, 127
        %v2467 = vpop.permute.xlu0 %2466
        %v2468 = vlaneseq
        %v2469 = vshrl.u32 %v2468, 7
        %v2470 = vsub.s32 5, %v2469
        %v2471 = vrot.slane %v2313, %v2470
        %v2472 = vmul.f32 %v2455, %v2471
        %v2473 = vmul.f32 %v2457, %v2471
        %v2474 = vmul.f32 %v2459, %v2471
        %v2475 = vmul.f32 %v2461, %v2471
        %v2476 = vmul.f32 %v2463, %v2471
        %v2477 = vmul.f32 %v2465, %v2471
        %v2478 = vmul.f32 %v2467, %v2471
        %v2479 = vadd.f32 %v2447, %v2472
        %v2480 = vadd.f32 %v2448, %v2473
        %v2481 = vadd.f32 %v2449, %v2474
        %v2482 = vadd.f32 %v2450, %v2475
        %v2483 = vadd.f32 %v2451, %v2476
        %v2484 = vadd.f32 %v2452, %v2477
        %v2485 = vadd.f32 %v2453, %v2478
        %2486 = vrot.lane.b32.xlu0 %v2210, 125
        %v2487 = vpop.permute.xlu0 %2486
        %2488 = vrot.lane.b32.xlu0 %v2215, 125
        %v2489 = vpop.permute.xlu0 %2488
        %2490 = vrot.lane.b32.xlu0 %v2220, 125
        %v2491 = vpop.permute.xlu0 %2490
        %2492 = vrot.lane.b32.xlu0 %v2225, 125
        %v2493 = vpop.permute.xlu0 %2492
        %2494 = vrot.lane.b32.xlu0 %v2230, 125
        %v2495 = vpop.permute.xlu0 %2494
        %2496 = vrot.lane.b32.xlu0 %v2235, 125
        %v2497 = vpop.permute.xlu0 %2496
        %2498 = vrot.lane.b32.xlu0 %v2240, 125
        %v2499 = vpop.permute.xlu0 %2498
        %v2500 = vlaneseq
        %v2501 = vshrl.u32 %v2500, 7
        %v2502 = vsub.s32 6, %v2501
        %v2503 = vrot.slane %v2313, %v2502
        %v2504 = vmul.f32 %v2487, %v2503
        %v2505 = vmul.f32 %v2489, %v2503
        %v2506 = vmul.f32 %v2491, %v2503
        %v2507 = vmul.f32 %v2493, %v2503
        %v2508 = vmul.f32 %v2495, %v2503
        %v2509 = vmul.f32 %v2497, %v2503
        %v2510 = vmul.f32 %v2499, %v2503
        %v2511 = vadd.f32 %v2479, %v2504
        %v2512 = vadd.f32 %v2480, %v2505
        %v2513 = vadd.f32 %v2481, %v2506
        %v2514 = vadd.f32 %v2482, %v2507
        %v2515 = vadd.f32 %v2483, %v2508
        %v2516 = vadd.f32 %v2484, %v2509
        %v2517 = vadd.f32 %v2485, %v2510
        %2518 = vrot.lane.b32.xlu0 %v2245, 124
        %v2519 = vpop.permute.xlu0 %2518
        %2520 = vrot.lane.b32.xlu0 %v2250, 124
        %v2521 = vpop.permute.xlu0 %2520
        %2522 = vrot.lane.b32.xlu0 %v2255, 124
        %v2523 = vpop.permute.xlu0 %2522
        %2524 = vrot.lane.b32.xlu0 %v2260, 124
        %v2525 = vpop.permute.xlu0 %2524
        %2526 = vrot.lane.b32.xlu0 %v2265, 124
        %v2527 = vpop.permute.xlu0 %2526
        %2528 = vrot.lane.b32.xlu0 %v2270, 124
        %v2529 = vpop.permute.xlu0 %2528
        %2530 = vrot.lane.b32.xlu0 %v2275, 124
        %v2531 = vpop.permute.xlu0 %2530
        %v2532 = vlaneseq
        %v2533 = vshrl.u32 %v2532, 7
        %v2534 = vsub.s32 7, %v2533
        %v2535 = vrot.slane %v2313, %v2534
        %v2536 = vmul.f32 %v2519, %v2535
        %v2537 = vmul.f32 %v2521, %v2535
        %v2538 = vmul.f32 %v2523, %v2535
        %v2539 = vmul.f32 %v2525, %v2535
        %v2540 = vmul.f32 %v2527, %v2535
        %v2541 = vmul.f32 %v2529, %v2535
        %v2542 = vmul.f32 %v2531, %v2535
        %v2543 = vadd.f32 %v2511, %v2536
        %v2544 = vadd.f32 %v2512, %v2537
        %v2545 = vadd.f32 %v2513, %v2538
        %v2546 = vadd.f32 %v2514, %v2539
        %v2547 = vadd.f32 %v2515, %v2540
        %v2548 = vadd.f32 %v2516, %v2541
        %v2549 = vadd.f32 %v2517, %v2542
        %2550 = vrot.lane.b32.xlu0 %v2280, 123
        %v2551 = vpop.permute.xlu0 %2550
        %2552 = vrot.lane.b32.xlu0 %v2285, 123
        %v2553 = vpop.permute.xlu0 %2552
        %2554 = vrot.lane.b32.xlu0 %v2290, 123
        %v2555 = vpop.permute.xlu0 %2554
        %2556 = vrot.lane.b32.xlu0 %v2295, 123
        %v2557 = vpop.permute.xlu0 %2556
        %2558 = vrot.lane.b32.xlu0 %v2300, 123
        %v2559 = vpop.permute.xlu0 %2558
        %2560 = vrot.lane.b32.xlu0 %v2305, 123
        %v2561 = vpop.permute.xlu0 %2560
        %2562 = vrot.lane.b32.xlu0 %v2310, 123
        %v2563 = vpop.permute.xlu0 %2562
        %v2564 = vlaneseq
        %v2565 = vshrl.u32 %v2564, 7
        %v2566 = vsub.s32 0, %v2565
        %v2567 = vrot.slane %v2314, %v2566
        %v2568 = vmul.f32 %v2551, %v2567
        %v2569 = vmul.f32 %v2553, %v2567
        %v2570 = vmul.f32 %v2555, %v2567
        %v2571 = vmul.f32 %v2557, %v2567
        %v2572 = vmul.f32 %v2559, %v2567
        %v2573 = vmul.f32 %v2561, %v2567
        %v2574 = vmul.f32 %v2563, %v2567
        %v2575 = vadd.f32 %v2543, %v2568
        %v2576 = vadd.f32 %v2544, %v2569
        %v2577 = vadd.f32 %v2545, %v2570
        %v2578 = vadd.f32 %v2546, %v2571
        %v2579 = vadd.f32 %v2547, %v2572
        %v2580 = vadd.f32 %v2548, %v2573
        %v2581 = vadd.f32 %v2549, %v2574
        %2582 = vset.pattern.permute.xlu0 1
        %2583 = vperm.xlu0 %2582, %v888
        %v2584 = vpop.permute.xlu0 %2583
        %2586 = vset.pattern.permute.xlu0 1
        %2587 = vperm.xlu0 %2586, %v889
        %v2588 = vpop.permute.xlu0 %2587
        %2590 = vset.pattern.permute.xlu0 1
        %2591 = vperm.xlu0 %2590, %v890
        %v2592 = vpop.permute.xlu0 %2591
        %2594 = vset.pattern.permute.xlu0 1
        %2595 = vperm.xlu0 %2594, %v891
        %v2596 = vpop.permute.xlu0 %2595
        %2598 = vset.pattern.permute.xlu0 1
        %2599 = vperm.xlu0 %2598, %v892
        %v2600 = vpop.permute.xlu0 %2599
        %2602 = vset.pattern.permute.xlu0 1
        %2603 = vperm.xlu0 %2602, %v893
        %v2604 = vpop.permute.xlu0 %2603
        %2606 = vset.pattern.permute.xlu0 1
        %2607 = vperm.xlu0 %2606, %v894
        %v2608 = vpop.permute.xlu0 %2607
        %v2610 = vadd.f32 %v2575, %v2584
        %v2611 = vadd.f32 %v2576, %v2588
        %v2612 = vadd.f32 %v2577, %v2592
        %v2613 = vadd.f32 %v2578, %v2596
        %v2614 = vadd.f32 %v2579, %v2600
        %v2615 = vadd.f32 %v2580, %v2604
        %v2616 = vadd.f32 %v2581, %v2608
        %2617 = vmatprep.subr.mxu0 0.0
        %2618 = vmatpush1.msra.mxu0 %v543
        %2619 = vmatprep.subr.mxu0 0.0
        %2620 = vmatpush1.msra.mxu0 %v544
        %2621 = vmatprep.subr.mxu0 0.0
        %2622 = vmatpush1.msra.mxu0 %v545
        %2623 = vmatprep.subr.mxu0 0.0
        %2624 = vmatpush1.msra.mxu0 %v546
        %2625 = vmatprep.subr.mxu0 0.0
        %2626 = vmatpush1.msra.mxu0 %v547
        %2627 = vmatprep.subr.mxu0 0.0
        %2628 = vmatpush1.msra.mxu0 %v548
        %2629 = vmatprep.subr.mxu0 0.0
        %2630 = vmatpush1.msra.mxu0 %v549
        %2631 = vmatprep.subr.mxu0 0.0
        %2632 = vmatpush1.msra.mxu0 %v550
        %2633 = vmatprep.subr.mxu0 0.0
        %2634 = vmatpush1.msra.mxu0 %v551
        %2635 = vmatprep.subr.mxu0 0.0
        %2636 = vmatpush1.msra.mxu0 %v552
        %2637 = vmatprep.subr.mxu0 0.0
        %2638 = vmatpush1.msra.mxu0 %v553
        %2639 = vmatprep.subr.mxu0 0.0
        %2640 = vmatpush1.msra.mxu0 %v554
        %2641 = vmatprep.subr.mxu0 0.0
        %2642 = vmatpush1.msra.mxu0 %v555
        %2643 = vmatprep.subr.mxu0 0.0
        %2644 = vmatpush1.msra.mxu0 %v556
        %2645 = vmatprep.subr.mxu0 0.0
        %2646 = vmatpush1.msra.mxu0 %v557
        %2647 = vmatprep.subr.mxu0 0.0
        %2648 = vmatpush1.msra.mxu0 %v558
        %2649 = vmatprep.subr.mxu0 0.0
        %2650 = vmatpush1.msra.mxu0 0.0
        %2651 = vmatprep.subr.mxu0 0.0
        %2652 = vmatpush1.msra.mxu0 0.0
        %2653 = vmatprep.subr.mxu0 0.0
        %2654 = vmatpush1.msra.mxu0 0.0
        %2655 = vmatprep.subr.mxu0 0.0
        %2656 = vmatpush1.msra.mxu0 0.0
        %2657 = vmatprep.subr.mxu0 0.0
        %2658 = vmatpush1.msra.mxu0 0.0
        %2659 = vmatprep.subr.mxu0 0.0
        %2660 = vmatpush1.msra.mxu0 0.0
        %2661 = vmatprep.subr.mxu0 0.0
        %2662 = vmatpush1.msra.mxu0 0.0
        %2663 = vmatprep.subr.mxu0 0.0
        %2664 = vmatpush1.msra.mxu0 0.0
        %2665 = vmatprep.subr.mxu0 0.0
        %2666 = vmatpush1.msra.mxu0 0.0
        %2667 = vmatprep.subr.mxu0 0.0
        %2668 = vmatpush1.msra.mxu0 0.0
        %2669 = vmatprep.subr.mxu0 0.0
        %2670 = vmatpush1.msra.mxu0 0.0
        %2671 = vmatprep.subr.mxu0 0.0
        %2672 = vmatpush1.msra.mxu0 0.0
        %2673 = vmatprep.subr.mxu0 0.0
        %2674 = vmatpush1.msra.mxu0 0.0
        %2675 = vmatprep.subr.mxu0 0.0
        %2676 = vmatpush1.msra.mxu0 0.0
        %2677 = vmatprep.subr.mxu0 0.0
        %2678 = vmatpush1.msra.mxu0 0.0
        %2679 = vmatprep.subr.mxu0 0.0
        %2680 = vmatpush1.msra.mxu0 0.0
        %2681 = vmatprep.mubr.f32.mxu0 0.0
        %2682 = vmatmul.mubr.f32.gmra.mrb[0].mxu0 %v1671
        %v2683 = vpop.f32.mrb[0].mxu0
        %v2684 = vadd.f32 0.0, %v2683
        %v2685 = vpop.f32.mrb[0].mxu0
        %2686 = vmatprep.mubr.f32.mxu0 0.0
        %2687 = vmatmul.mubr.f32.gmra.mrb[0].mxu0 %v1672
        %v2688 = vpop.f32.mrb[0].mxu0
        %v2689 = vadd.f32 0.0, %v2688
        %v2690 = vpop.f32.mrb[0].mxu0
        %2691 = vmatprep.mubr.f32.mxu0 0.0
        %2692 = vmatmul.mubr.f32.gmra.mrb[0].mxu0 %v1673
        %v2693 = vpop.f32.mrb[0].mxu0
        %v2694 = vadd.f32 0.0, %v2693
        %v2695 = vpop.f32.mrb[0].mxu0
        %2696 = vmatprep.mubr.f32.mxu0 0.0
        %2697 = vmatmul.mubr.f32.gmra.mrb[0].mxu0 %v1674
        %v2698 = vpop.f32.mrb[0].mxu0
        %v2699 = vadd.f32 0.0, %v2698
        %v2700 = vpop.f32.mrb[0].mxu0
        %2701 = vmatprep.mubr.f32.mxu0 0.0
        %2702 = vmatmul.mubr.f32.gmra.mrb[0].mxu0 %v1675
        %v2703 = vpop.f32.mrb[0].mxu0
        %v2704 = vadd.f32 0.0, %v2703
        %v2705 = vpop.f32.mrb[0].mxu0
        %2706 = vmatprep.mubr.f32.mxu0 0.0
        %2707 = vmatmul.mubr.f32.gmra.mrb[0].mxu0 %v1676
        %v2708 = vpop.f32.mrb[0].mxu0
        %v2709 = vadd.f32 0.0, %v2708
        %v2710 = vpop.f32.mrb[0].mxu0
        %2711 = vmatprep.mubr.f32.mxu0 0.0
        %2712 = vmatmul.mubr.f32.gmra.mrb[0].mxu0 %v1677
        %v2713 = vpop.f32.mrb[0].mxu0
        %v2714 = vadd.f32 0.0, %v2713
        %v2715 = vpop.f32.mrb[0].mxu0
        %2716 = vdwg.mxu0
        %2717 = vmatprep.subr.mxu0 0.0
        %2718 = vmatpush1.msra.mxu0 %v543
        %2719 = vmatprep.subr.mxu0 0.0
        %2720 = vmatpush1.msra.mxu0 %v544
        %2721 = vmatprep.subr.mxu0 0.0
        %2722 = vmatpush1.msra.mxu0 %v545
        %2723 = vmatprep.subr.mxu0 0.0
        %2724 = vmatpush1.msra.mxu0 %v546
        %2725 = vmatprep.subr.mxu0 0.0
        %2726 = vmatpush1.msra.mxu0 %v547
        %2727 = vmatprep.subr.mxu0 0.0
        %2728 = vmatpush1.msra.mxu0 %v548
        %2729 = vmatprep.subr.mxu0 0.0
        %2730 = vmatpush1.msra.mxu0 %v549
        %2731 = vmatprep.subr.mxu0 0.0
        %2732 = vmatpush1.msra.mxu0 %v550
        %2733 = vmatprep.subr.mxu0 0.0
        %2734 = vmatpush1.msra.mxu0 %v551
        %2735 = vmatprep.subr.mxu0 0.0
        %2736 = vmatpush1.msra.mxu0 %v552
        %2737 = vmatprep.subr.mxu0 0.0
        %2738 = vmatpush1.msra.mxu0 %v553
        %2739 = vmatprep.subr.mxu0 0.0
        %2740 = vmatpush1.msra.mxu0 %v554
        %2741 = vmatprep.subr.mxu0 0.0
        %2742 = vmatpush1.msra.mxu0 %v555
        %2743 = vmatprep.subr.mxu0 0.0
        %2744 = vmatpush1.msra.mxu0 %v556
        %2745 = vmatprep.subr.mxu0 0.0
        %2746 = vmatpush1.msra.mxu0 %v557
        %2747 = vmatprep.subr.mxu0 0.0
        %2748 = vmatpush1.msra.mxu0 %v558
        %2749 = vmatprep.subr.mxu0 0.0
        %2750 = vmatpush1.msra.mxu0 0.0
        %2751 = vmatprep.subr.mxu0 0.0
        %2752 = vmatpush1.msra.mxu0 0.0
        %2753 = vmatprep.subr.mxu0 0.0
        %2754 = vmatpush1.msra.mxu0 0.0
        %2755 = vmatprep.subr.mxu0 0.0
        %2756 = vmatpush1.msra.mxu0 0.0
        %2757 = vmatprep.subr.mxu0 0.0
        %2758 = vmatpush1.msra.mxu0 0.0
        %2759 = vmatprep.subr.mxu0 0.0
        %2760 = vmatpush1.msra.mxu0 0.0
        %2761 = vmatprep.subr.mxu0 0.0
        %2762 = vmatpush1.msra.mxu0 0.0
        %2763 = vmatprep.subr.mxu0 0.0
        %2764 = vmatpush1.msra.mxu0 0.0
        %2765 = vmatprep.subr.mxu0 0.0
        %2766 = vmatpush1.msra.mxu0 0.0
        %2767 = vmatprep.subr.mxu0 0.0
        %2768 = vmatpush1.msra.mxu0 0.0
        %2769 = vmatprep.subr.mxu0 0.0
        %2770 = vmatpush1.msra.mxu0 0.0
        %2771 = vmatprep.subr.mxu0 0.0
        %2772 = vmatpush1.msra.mxu0 0.0
        %2773 = vmatprep.subr.mxu0 0.0
        %2774 = vmatpush1.msra.mxu0 0.0
        %2775 = vmatprep.subr.mxu0 0.0
        %2776 = vmatpush1.msra.mxu0 0.0
        %2777 = vmatprep.subr.mxu0 0.0
        %2778 = vmatpush1.msra.mxu0 0.0
        %2779 = vmatprep.subr.mxu0 0.0
        %2780 = vmatpush1.msra.mxu0 0.0
        %2781 = vmatprep.mubr.f32.mxu0 0.0
        %2782 = vmatmul.mubr.f32.gmra.mrb[0].mxu0 %v2610
        %v2783 = vpop.f32.mrb[0].mxu0
        %v2784 = vadd.f32 0.0, %v2783
        %v2785 = vpop.f32.mrb[0].mxu0
        %2786 = vmatprep.mubr.f32.mxu0 0.0
        %2787 = vmatmul.mubr.f32.gmra.mrb[0].mxu0 %v2611
        %v2788 = vpop.f32.mrb[0].mxu0
        %v2789 = vadd.f32 0.0, %v2788
        %v2790 = vpop.f32.mrb[0].mxu0
        %2791 = vmatprep.mubr.f32.mxu0 0.0
        %2792 = vmatmul.mubr.f32.gmra.mrb[0].mxu0 %v2612
        %v2793 = vpop.f32.mrb[0].mxu0
        %v2794 = vadd.f32 0.0, %v2793
        %v2795 = vpop.f32.mrb[0].mxu0
        %2796 = vmatprep.mubr.f32.mxu0 0.0
        %2797 = vmatmul.mubr.f32.gmra.mrb[0].mxu0 %v2613
        %v2798 = vpop.f32.mrb[0].mxu0
        %v2799 = vadd.f32 0.0, %v2798
        %v2800 = vpop.f32.mrb[0].mxu0
        %2801 = vmatprep.mubr.f32.mxu0 0.0
        %2802 = vmatmul.mubr.f32.gmra.mrb[0].mxu0 %v2614
        %v2803 = vpop.f32.mrb[0].mxu0
        %v2804 = vadd.f32 0.0, %v2803
        %v2805 = vpop.f32.mrb[0].mxu0
        %2806 = vmatprep.mubr.f32.mxu0 0.0
        %2807 = vmatmul.mubr.f32.gmra.mrb[0].mxu0 %v2615
        %v2808 = vpop.f32.mrb[0].mxu0
        %v2809 = vadd.f32 0.0, %v2808
        %v2810 = vpop.f32.mrb[0].mxu0
        %2811 = vmatprep.mubr.f32.mxu0 0.0
        %2812 = vmatmul.mubr.f32.gmra.mrb[0].mxu0 %v2616
        %v2813 = vpop.f32.mrb[0].mxu0
        %v2814 = vadd.f32 0.0, %v2813
        %v2815 = vpop.f32.mrb[0].mxu0
        %2816 = vdwg.mxu0
        %v2817 = vmax.f32 %v2684, %v2704
        %v2818 = vmax.f32 %v2689, %v2709
        %v2819 = vsel %vm1075, %v2714, -inf
        %v2820 = vmax.f32 %v2694, %v2819
        %v2821 = vmax.f32 %v2817, %v2818
        %v2822 = vmax.f32 %v2820, %v2699
        %v2823 = vmax.f32 %v2821, %v2822
        %v2824 = vrot.slane %v2823, 4
        %v2825 = vmax.f32 %v2823, %v2824
        %v2826 = vrot.slane %v2825, 2
        %v2827 = vmax.f32 %v2825, %v2826
        %v2828 = vrot.slane %v2827, 1
        %v2829 = vmax.f32 %v2827, %v2828
        %v2830 = vsub.f32 %v2684, %v2829
        %v2831 = vsub.f32 %v2689, %v2829
        %v2832 = vsub.f32 %v2694, %v2829
        %v2833 = vsub.f32 %v2699, %v2829
        %v2834 = vsub.f32 %v2704, %v2829
        %v2835 = vsub.f32 %v2709, %v2829
        %v2836 = vsub.f32 %v2714, %v2829
        %v2837 = vmul.f32 %v2830, 1.442695
        %v2838 = vpow.pop %v2837
        %v2839 = vmul.f32 %v2831, 1.442695
        %v2840 = vpow.pop %v2839
        %v2841 = vmul.f32 %v2832, 1.442695
        %v2842 = vpow.pop %v2841
        %v2843 = vmul.f32 %v2833, 1.442695
        %v2844 = vpow.pop %v2843
        %v2845 = vmul.f32 %v2834, 1.442695
        %v2846 = vpow.pop %v2845
        %v2847 = vmul.f32 %v2835, 1.442695
        %v2848 = vpow.pop %v2847
        %v2849 = vmul.f32 %v2836, 1.442695
        %v2850 = vpow.pop %v2849
        %v2851 = vadd.f32 %v2838, %v2840
        %v2852 = vadd.f32 %v2851, %v2842
        %v2853 = vadd.f32 %v2852, %v2844
        %v2854 = vadd.f32 %v2853, %v2846
        %v2855 = vadd.f32 %v2854, %v2848
        %v2856 = vsel %vm1075, %v2850, 0.0
        %v2857 = vadd.f32 %v2855, %v2856
        %v2858 = vrot.slane %v2857, 4
        %v2859 = vadd.f32 %v2857, %v2858
        %v2860 = vrot.slane %v2859, 2
        %v2861 = vadd.f32 %v2859, %v2860
        %v2862 = vrot.slane %v2861, 1
        %v2863 = vadd.f32 %v2861, %v2862
        %v2864 = vrcp.pop %v2863
        %v2865 = vmul.f32 %v2838, %v2864
        %v2866 = vmul.f32 %v2840, %v2864
        %v2867 = vmul.f32 %v2842, %v2864
        %v2868 = vmul.f32 %v2844, %v2864
        %v2869 = vmul.f32 %v2846, %v2864
        %v2870 = vmul.f32 %v2848, %v2864
        %v2871 = vmul.f32 %v2850, %v2864
        %v2872 = vmax.f32 %v2784, %v2804
        %v2873 = vmax.f32 %v2789, %v2809
        %v2874 = vsel %vm1075, %v2814, -inf
        %v2875 = vmax.f32 %v2794, %v2874
        %v2876 = vmax.f32 %v2872, %v2873
        %v2877 = vmax.f32 %v2875, %v2799
        %v2878 = vmax.f32 %v2876, %v2877
        %v2879 = vrot.slane %v2878, 4
        %v2880 = vmax.f32 %v2878, %v2879
        %v2881 = vrot.slane %v2880, 2
        %v2882 = vmax.f32 %v2880, %v2881
        %v2883 = vrot.slane %v2882, 1
        %v2884 = vmax.f32 %v2882, %v2883
        %v2885 = vsub.f32 %v2784, %v2884
        %v2886 = vsub.f32 %v2789, %v2884
        %v2887 = vsub.f32 %v2794, %v2884
        %v2888 = vsub.f32 %v2799, %v2884
        %v2889 = vsub.f32 %v2804, %v2884
        %v2890 = vsub.f32 %v2809, %v2884
        %v2891 = vsub.f32 %v2814, %v2884
        %v2892 = vmul.f32 %v2885, 1.442695
        %v2893 = vpow.pop %v2892
        %v2894 = vmul.f32 %v2886, 1.442695
        %v2895 = vpow.pop %v2894
        %v2896 = vmul.f32 %v2887, 1.442695
        %v2897 = vpow.pop %v2896
        %v2898 = vmul.f32 %v2888, 1.442695
        %v2899 = vpow.pop %v2898
        %v2900 = vmul.f32 %v2889, 1.442695
        %v2901 = vpow.pop %v2900
        %v2902 = vmul.f32 %v2890, 1.442695
        %v2903 = vpow.pop %v2902
        %v2904 = vmul.f32 %v2891, 1.442695
        %v2905 = vpow.pop %v2904
        %v2906 = vadd.f32 %v2893, %v2895
        %v2907 = vadd.f32 %v2906, %v2897
        %v2908 = vadd.f32 %v2907, %v2899
        %v2909 = vadd.f32 %v2908, %v2901
        %v2910 = vadd.f32 %v2909, %v2903
        %v2911 = vsel %vm1075, %v2905, 0.0
        %v2912 = vadd.f32 %v2910, %v2911
        %v2913 = vrot.slane %v2912, 4
        %v2914 = vadd.f32 %v2912, %v2913
        %v2915 = vrot.slane %v2914, 2
        %v2916 = vadd.f32 %v2914, %v2915
        %v2917 = vrot.slane %v2916, 1
        %v2918 = vadd.f32 %v2916, %v2917
        %v2919 = vrcp.pop %v2918
        %v2920 = vmul.f32 %v2893, %v2919
        %v2921 = vmul.f32 %v2895, %v2919
        %v2922 = vmul.f32 %v2897, %v2919
        %v2923 = vmul.f32 %v2899, %v2919
        %v2924 = vmul.f32 %v2901, %v2919
        %v2925 = vmul.f32 %v2903, %v2919
        %v2926 = vmul.f32 %v2905, %v2919
        %v2927 = vmul.f32 %v2865, %v2610
        %v2928 = vmul.f32 %v2866, %v2611
        %v2929 = vmul.f32 %v2867, %v2612
        %v2930 = vmul.f32 %v2868, %v2613
        %v2931 = vmul.f32 %v2869, %v2614
        %v2932 = vmul.f32 %v2870, %v2615
        %v2933 = vmul.f32 %v2871, %v2616
        %v2934 = vmul.f32 %v2920, %v1671
        %v2935 = vmul.f32 %v2921, %v1672
        %v2936 = vmul.f32 %v2922, %v1673
        %v2937 = vmul.f32 %v2923, %v1674
        %v2938 = vmul.f32 %v2924, %v1675
        %v2939 = vmul.f32 %v2925, %v1676
        %v2940 = vmul.f32 %v2926, %v1677
        %v2941 = vadd.f32 %v2927, %v2934
        %v2942 = vadd.f32 %v2928, %v2935
        %v2943 = vadd.f32 %v2929, %v2936
        %v2944 = vadd.f32 %v2930, %v2937
        %v2945 = vadd.f32 %v2931, %v2938
        %v2946 = vadd.f32 %v2932, %v2939
        %v2947 = vadd.f32 %v2933, %v2940
        %v2948 = vadd.f32 %v2941, %v2942
        %v2949 = vadd.f32 %v2948, %v2943
        %v2950 = vadd.f32 %v2949, %v2944
        %v2951 = vadd.f32 %v2950, %v2945
        %v2952 = vadd.f32 %v2951, %v2946
        %v2953 = vsel %vm1075, %v2947, 0.0
        %v2954 = vadd.f32 %v2952, %v2953
        %v2955 = vrot.slane %v2954, 4
        %v2956 = vadd.f32 %v2954, %v2955
        %v2957 = vrot.slane %v2956, 2
        %v2958 = vadd.f32 %v2956, %v2957
        %v2959 = vrot.slane %v2958, 1
        %v2960 = vadd.f32 %v2958, %v2959
        %v2961 = vxor.u32 %v2960, 2147483648
        %v2962 = vmul.f32 %v2961, 1.442695
        %v2963 = vpow.pop %v2962
        %v2964 = vadd.f32 %v2963, 1.0
        %v2965 = vrcp.pop %v2964
        %v2966 = vmul.f32 1.0, %v2965
        %v2967 = vmul.f32 %v881, %v2966
        %v2968 = vmul.f32 %v882, %v2966
        %v2969 = vmul.f32 %v883, %v2966
        %v2970 = vmul.f32 %v884, %v2966
        %v2971 = vmul.f32 %v885, %v2966
        %v2972 = vmul.f32 %v886, %v2966
        %v2973 = vmul.f32 %v887, %v2966
        %v2974 = vmax.f32 %v2967, 0.0
        %v2975 = vmax.f32 %v2968, 0.0
        %v2976 = vmax.f32 %v2969, 0.0
        %v2977 = vmax.f32 %v2970, 0.0
        %v2978 = vmax.f32 %v2971, 0.0
        %v2979 = vmax.f32 %v2972, 0.0
        %v2980 = vmax.f32 %v2973, 0.0
        %v2981 = vld [vmem:[%s3] sm:$0xff]
        %v2982 = vld [vmem:[%s3 + $0x8] sm:$0xff]
        %v2983 = vld [vmem:[%s3 + $0x10] sm:$0xff]
        %v2984 = vld [vmem:[%s3 + $0x18] sm:$0xff]
        %v2985 = vld [vmem:[%s3 + $0x20] sm:$0xff]
        %v2986 = vld [vmem:[%s3 + $0x28] sm:$0xff]
        %v2987 = vld [vmem:[%s3 + $0x30] sm:$0xff]
        %v2988 = vld [vmem:[%s3 + $0x38] sm:$0xff]
        %v2989 = vld [vmem:[%s3 + $0x40] sm:$0xff]
        %v2990 = vld [vmem:[%s3 + $0x48] sm:$0xff]
        %v2991 = vld [vmem:[%s3 + $0x50] sm:$0xff]
        %v2992 = vld [vmem:[%s3 + $0x58] sm:$0xff]
        %v2993 = vld [vmem:[%s3 + $0x60] sm:$0xff]
        %v2994 = vld [vmem:[%s3 + $0x68] sm:$0xff]
        %v2995 = vld [vmem:[%s3 + $0x70] sm:$0xff]
        %v2996 = vld [vmem:[%s3 + $0x78] sm:$0xff]
        %v2997 = vld [vmem:[%s3 + $0x80] sm:$0xff]
        %v2998 = vld [vmem:[%s3 + $0x88] sm:$0xff]
        %v2999 = vld [vmem:[%s3 + $0x90] sm:$0xff]
        %v3000 = vld [vmem:[%s3 + $0x98] sm:$0xff]
        %v3001 = vld [vmem:[%s3 + $0xa0] sm:$0xff]
        %v3002 = vld [vmem:[%s3 + $0xa8] sm:$0xff]
        %v3003 = vld [vmem:[%s4] sm:$0xff]
        %v3004 = vld [vmem:[%s4 + $0x8] sm:$0xff]
        %v3005 = vld [vmem:[%s4 + $0x10] sm:$0xff]
        %v3006 = vld [vmem:[%s4 + $0x18] sm:$0xff]
        %v3007 = vld [vmem:[%s4 + $0x20] sm:$0xff]
        %v3008 = vld [vmem:[%s4 + $0x28] sm:$0xff]
        %v3009 = vld [vmem:[%s4 + $0x30] sm:$0xff]
        %v3010 = vld [vmem:[%s4 + $0x38] sm:$0xff]
        %v3011 = vld [vmem:[%s4 + $0x40] sm:$0xff]
        %v3012 = vld [vmem:[%s4 + $0x48] sm:$0xff]
        %v3013 = vld [vmem:[%s4 + $0x50] sm:$0xff]
        %v3014 = vld [vmem:[%s4 + $0x58] sm:$0xff]
        %v3015 = vld [vmem:[%s4 + $0x60] sm:$0xff]
        %v3016 = vld [vmem:[%s4 + $0x68] sm:$0xff]
        %v3017 = vld [vmem:[%s4 + $0x70] sm:$0xff]
        %v3018 = vld [vmem:[%s4 + $0x78] sm:$0xff]
        %v3019 = vld [vmem:[%s4 + $0x80] sm:$0xff]
        %v3020 = vld [vmem:[%s4 + $0x88] sm:$0xff]
        %v3021 = vld [vmem:[%s4 + $0x90] sm:$0xff]
        %v3022 = vld [vmem:[%s4 + $0x98] sm:$0xff]
        %v3023 = vld [vmem:[%s4 + $0xa0] sm:$0xff]
        %v3024 = vld [vmem:[%s4 + $0xa8] sm:$0xff]
        %3026 = vset.pattern.permute.xlu0 0
        %3027 = vperm.xlu0 %3026, %v3003
        %v3028 = vpop.permute.xlu0 %3027
        %3031 = vset.pattern.permute.xlu0 0
        %3032 = vperm.xlu0 %3031, %v3004
        %v3033 = vpop.permute.xlu0 %3032
        %3036 = vset.pattern.permute.xlu0 0
        %3037 = vperm.xlu0 %3036, %v3005
        %v3038 = vpop.permute.xlu0 %3037
        %3041 = vset.pattern.permute.xlu0 0
        %3042 = vperm.xlu0 %3041, %v3006
        %v3043 = vpop.permute.xlu0 %3042
        %3046 = vset.pattern.permute.xlu0 0
        %3047 = vperm.xlu0 %3046, %v3007
        %v3048 = vpop.permute.xlu0 %3047
        %3051 = vset.pattern.permute.xlu0 0
        %3052 = vperm.xlu0 %3051, %v3008
        %v3053 = vpop.permute.xlu0 %3052
        %3056 = vset.pattern.permute.xlu0 0
        %3057 = vperm.xlu0 %3056, %v3009
        %v3058 = vpop.permute.xlu0 %3057
        %3061 = vset.pattern.permute.xlu0 0
        %3062 = vperm.xlu0 %3061, %v3010
        %v3063 = vpop.permute.xlu0 %3062
        %3066 = vset.pattern.permute.xlu0 0
        %3067 = vperm.xlu0 %3066, %v3011
        %v3068 = vpop.permute.xlu0 %3067
        %3071 = vset.pattern.permute.xlu0 0
        %3072 = vperm.xlu0 %3071, %v3012
        %v3073 = vpop.permute.xlu0 %3072
        %3076 = vset.pattern.permute.xlu0 0
        %3077 = vperm.xlu0 %3076, %v3013
        %v3078 = vpop.permute.xlu0 %3077
        %3081 = vset.pattern.permute.xlu0 0
        %3082 = vperm.xlu0 %3081, %v3014
        %v3083 = vpop.permute.xlu0 %3082
        %3086 = vset.pattern.permute.xlu0 0
        %3087 = vperm.xlu0 %3086, %v3015
        %v3088 = vpop.permute.xlu0 %3087
        %3091 = vset.pattern.permute.xlu0 0
        %3092 = vperm.xlu0 %3091, %v3016
        %v3093 = vpop.permute.xlu0 %3092
        %3096 = vset.pattern.permute.xlu0 0
        %3097 = vperm.xlu0 %3096, %v3017
        %v3098 = vpop.permute.xlu0 %3097
        %3101 = vset.pattern.permute.xlu0 0
        %3102 = vperm.xlu0 %3101, %v3018
        %v3103 = vpop.permute.xlu0 %3102
        %3106 = vset.pattern.permute.xlu0 0
        %3107 = vperm.xlu0 %3106, %v3019
        %v3108 = vpop.permute.xlu0 %3107
        %3111 = vset.pattern.permute.xlu0 0
        %3112 = vperm.xlu0 %3111, %v3020
        %v3113 = vpop.permute.xlu0 %3112
        %3116 = vset.pattern.permute.xlu0 0
        %3117 = vperm.xlu0 %3116, %v3021
        %v3118 = vpop.permute.xlu0 %3117
        %3121 = vset.pattern.permute.xlu0 0
        %3122 = vperm.xlu0 %3121, %v3022
        %v3123 = vpop.permute.xlu0 %3122
        %3126 = vset.pattern.permute.xlu0 0
        %3127 = vperm.xlu0 %3126, %v3023
        %v3128 = vpop.permute.xlu0 %3127
        %3131 = vset.pattern.permute.xlu0 0
        %3132 = vperm.xlu0 %3131, %v3024
        %v3133 = vpop.permute.xlu0 %3132
        %v3136 = vsel %vm1053, %v2981, 0
        %v3139 = vsel %vm1053, %v2982, 0
        %v3142 = vsel %vm1053, %v2983, 0
        %v3145 = vsel %vm1053, %v2984, 0
        %v3148 = vsel %vm1053, %v2985, 0
        %v3151 = vsel %vm1053, %v2986, 0
        %v3154 = vsel %vm1053, %v2987, 0
        %v3157 = vsel %vm1053, %v2988, 0
        %v3160 = vsel %vm1053, %v2989, 0
        %v3163 = vsel %vm1053, %v2990, 0
        %v3166 = vsel %vm1053, %v2991, 0
        %v3169 = vsel %vm1053, %v2992, 0
        %v3172 = vsel %vm1053, %v2993, 0
        %v3175 = vsel %vm1053, %v2994, 0
        %v3178 = vsel %vm1053, %v2995, 0
        %v3181 = vsel %vm1053, %v2996, 0
        %v3184 = vsel %vm1053, %v2997, 0
        %v3187 = vsel %vm1053, %v2998, 0
        %v3190 = vsel %vm1053, %v2999, 0
        %v3193 = vsel %vm1053, %v3000, 0
        %v3196 = vsel %vm1053, %v3001, 0
        %v3199 = vsel %vm1053, %v3002, 0
        %v3202 = vsel %vm1075, %v2980, 0
        %3204 = vmatprep.subr.mxu0 0.0
        %3205 = vmatpush1.msra.mxu0 %v2974
        %3206 = vmatprep.subr.mxu0 0.0
        %3207 = vmatpush1.msra.mxu0 %v2975
        %3208 = vmatprep.subr.mxu0 0.0
        %3209 = vmatpush1.msra.mxu0 %v2976
        %3210 = vmatprep.subr.mxu0 0.0
        %3211 = vmatpush1.msra.mxu0 %v2977
        %3212 = vmatprep.subr.mxu0 0.0
        %3213 = vmatpush1.msra.mxu0 %v2978
        %3214 = vmatprep.subr.mxu0 0.0
        %3215 = vmatpush1.msra.mxu0 %v2979
        %3216 = vmatprep.subr.mxu0 0.0
        %3217 = vmatpush1.msra.mxu0 %v3202
        %3218 = vmatprep.subr.mxu0 0.0
        %3219 = vmatpush1.msra.mxu0 0.0
        %3220 = vmatprep.subr.mxu0 0.0
        %3221 = vmatpush1.msra.mxu0 0.0
        %3222 = vmatprep.subr.mxu0 0.0
        %3223 = vmatpush1.msra.mxu0 0.0
        %3224 = vmatprep.subr.mxu0 0.0
        %3225 = vmatpush1.msra.mxu0 0.0
        %3226 = vmatprep.subr.mxu0 0.0
        %3227 = vmatpush1.msra.mxu0 0.0
        %3228 = vmatprep.subr.mxu0 0.0
        %3229 = vmatpush1.msra.mxu0 0.0
        %3230 = vmatprep.subr.mxu0 0.0
        %3231 = vmatpush1.msra.mxu0 0.0
        %3232 = vmatprep.subr.mxu0 0.0
        %3233 = vmatpush1.msra.mxu0 0.0
        %3234 = vmatprep.subr.mxu0 0.0
        %3235 = vmatpush1.msra.mxu0 0.0
        %3236 = vmatprep.subr.mxu0 0.0
        %3237 = vmatpush1.msra.mxu0 0.0
        %3238 = vmatprep.subr.mxu0 0.0
        %3239 = vmatpush1.msra.mxu0 0.0
        %3240 = vmatprep.subr.mxu0 0.0
        %3241 = vmatpush1.msra.mxu0 0.0
        %3242 = vmatprep.subr.mxu0 0.0
        %3243 = vmatpush1.msra.mxu0 0.0
        %3244 = vmatprep.subr.mxu0 0.0
        %3245 = vmatpush1.msra.mxu0 0.0
        %3246 = vmatprep.subr.mxu0 0.0
        %3247 = vmatpush1.msra.mxu0 0.0
        %3248 = vmatprep.subr.mxu0 0.0
        %3249 = vmatpush1.msra.mxu0 0.0
        %3250 = vmatprep.subr.mxu0 0.0
        %3251 = vmatpush1.msra.mxu0 0.0
        %3252 = vmatprep.subr.mxu0 0.0
        %3253 = vmatpush1.msra.mxu0 0.0
        %3254 = vmatprep.subr.mxu0 0.0
        %3255 = vmatpush1.msra.mxu0 0.0
        %3256 = vmatprep.subr.mxu0 0.0
        %3257 = vmatpush1.msra.mxu0 0.0
        %3258 = vmatprep.subr.mxu0 0.0
        %3259 = vmatpush1.msra.mxu0 0.0
        %3260 = vmatprep.subr.mxu0 0.0
        %3261 = vmatpush1.msra.mxu0 0.0
        %3262 = vmatprep.subr.mxu0 0.0
        %3263 = vmatpush1.msra.mxu0 0.0
        %3264 = vmatprep.subr.mxu0 0.0
        %3265 = vmatpush1.msra.mxu0 0.0
        %3266 = vmatprep.subr.mxu0 0.0
        %3267 = vmatpush1.msra.mxu0 0.0
        %3268 = vmatprep.mubr.f32.mxu0 0.0
        %3269 = vmatmul.mubr.f32.gmra.mrb[0].mxu0 %v3136
        %v3270 = vpop.f32.mrb[0].mxu0
        %v3271 = vadd.f32 %v3028, %v3270
        %v3272 = vpop.f32.mrb[0].mxu0
        %3273 = vmatprep.mubr.f32.mxu0 0.0
        %3274 = vmatmul.mubr.f32.gmra.mrb[0].mxu0 %v3139
        %v3275 = vpop.f32.mrb[0].mxu0
        %v3276 = vadd.f32 %v3033, %v3275
        %v3277 = vpop.f32.mrb[0].mxu0
        %3278 = vmatprep.mubr.f32.mxu0 0.0
        %3279 = vmatmul.mubr.f32.gmra.mrb[0].mxu0 %v3142
        %v3280 = vpop.f32.mrb[0].mxu0
        %v3281 = vadd.f32 %v3038, %v3280
        %v3282 = vpop.f32.mrb[0].mxu0
        %3283 = vmatprep.mubr.f32.mxu0 0.0
        %3284 = vmatmul.mubr.f32.gmra.mrb[0].mxu0 %v3145
        %v3285 = vpop.f32.mrb[0].mxu0
        %v3286 = vadd.f32 %v3043, %v3285
        %v3287 = vpop.f32.mrb[0].mxu0
        %3288 = vmatprep.mubr.f32.mxu0 0.0
        %3289 = vmatmul.mubr.f32.gmra.mrb[0].mxu0 %v3148
        %v3290 = vpop.f32.mrb[0].mxu0
        %v3291 = vadd.f32 %v3048, %v3290
        %v3292 = vpop.f32.mrb[0].mxu0
        %3293 = vmatprep.mubr.f32.mxu0 0.0
        %3294 = vmatmul.mubr.f32.gmra.mrb[0].mxu0 %v3151
        %v3295 = vpop.f32.mrb[0].mxu0
        %v3296 = vadd.f32 %v3053, %v3295
        %v3297 = vpop.f32.mrb[0].mxu0
        %3298 = vmatprep.mubr.f32.mxu0 0.0
        %3299 = vmatmul.mubr.f32.gmra.mrb[0].mxu0 %v3154
        %v3300 = vpop.f32.mrb[0].mxu0
        %v3301 = vadd.f32 %v3058, %v3300
        %v3302 = vpop.f32.mrb[0].mxu0
        %3303 = vmatprep.mubr.f32.mxu0 0.0
        %3304 = vmatmul.mubr.f32.gmra.mrb[0].mxu0 %v3157
        %v3305 = vpop.f32.mrb[0].mxu0
        %v3306 = vadd.f32 %v3063, %v3305
        %v3307 = vpop.f32.mrb[0].mxu0
        %3308 = vmatprep.mubr.f32.mxu0 0.0
        %3309 = vmatmul.mubr.f32.gmra.mrb[0].mxu0 %v3160
        %v3310 = vpop.f32.mrb[0].mxu0
        %v3311 = vadd.f32 %v3068, %v3310
        %v3312 = vpop.f32.mrb[0].mxu0
        %3313 = vmatprep.mubr.f32.mxu0 0.0
        %3314 = vmatmul.mubr.f32.gmra.mrb[0].mxu0 %v3163
        %v3315 = vpop.f32.mrb[0].mxu0
        %v3316 = vadd.f32 %v3073, %v3315
        %v3317 = vpop.f32.mrb[0].mxu0
        %3318 = vmatprep.mubr.f32.mxu0 0.0
        %3319 = vmatmul.mubr.f32.gmra.mrb[0].mxu0 %v3166
        %v3320 = vpop.f32.mrb[0].mxu0
        %v3321 = vadd.f32 %v3078, %v3320
        %v3322 = vpop.f32.mrb[0].mxu0
        %3323 = vmatprep.mubr.f32.mxu0 0.0
        %3324 = vmatmul.mubr.f32.gmra.mrb[0].mxu0 %v3169
        %v3325 = vpop.f32.mrb[0].mxu0
        %v3326 = vadd.f32 %v3083, %v3325
        %v3327 = vpop.f32.mrb[0].mxu0
        %3328 = vmatprep.mubr.f32.mxu0 0.0
        %3329 = vmatmul.mubr.f32.gmra.mrb[0].mxu0 %v3172
        %v3330 = vpop.f32.mrb[0].mxu0
        %v3331 = vadd.f32 %v3088, %v3330
        %v3332 = vpop.f32.mrb[0].mxu0
        %3333 = vmatprep.mubr.f32.mxu0 0.0
        %3334 = vmatmul.mubr.f32.gmra.mrb[0].mxu0 %v3175
        %v3335 = vpop.f32.mrb[0].mxu0
        %v3336 = vadd.f32 %v3093, %v3335
        %v3337 = vpop.f32.mrb[0].mxu0
        %3338 = vmatprep.mubr.f32.mxu0 0.0
        %3339 = vmatmul.mubr.f32.gmra.mrb[0].mxu0 %v3178
        %v3340 = vpop.f32.mrb[0].mxu0
        %v3341 = vadd.f32 %v3098, %v3340
        %v3342 = vpop.f32.mrb[0].mxu0
        %3343 = vmatprep.mubr.f32.mxu0 0.0
        %3344 = vmatmul.mubr.f32.gmra.mrb[0].mxu0 %v3181
        %v3345 = vpop.f32.mrb[0].mxu0
        %v3346 = vadd.f32 %v3103, %v3345
        %v3347 = vpop.f32.mrb[0].mxu0
        %3348 = vmatprep.mubr.f32.mxu0 0.0
        %3349 = vmatmul.mubr.f32.gmra.mrb[0].mxu0 %v3184
        %v3350 = vpop.f32.mrb[0].mxu0
        %v3351 = vadd.f32 %v3108, %v3350
        %v3352 = vpop.f32.mrb[0].mxu0
        %3353 = vmatprep.mubr.f32.mxu0 0.0
        %3354 = vmatmul.mubr.f32.gmra.mrb[0].mxu0 %v3187
        %v3355 = vpop.f32.mrb[0].mxu0
        %v3356 = vadd.f32 %v3113, %v3355
        %v3357 = vpop.f32.mrb[0].mxu0
        %3358 = vmatprep.mubr.f32.mxu0 0.0
        %3359 = vmatmul.mubr.f32.gmra.mrb[0].mxu0 %v3190
        %v3360 = vpop.f32.mrb[0].mxu0
        %v3361 = vadd.f32 %v3118, %v3360
        %v3362 = vpop.f32.mrb[0].mxu0
        %3363 = vmatprep.mubr.f32.mxu0 0.0
        %3364 = vmatmul.mubr.f32.gmra.mrb[0].mxu0 %v3193
        %v3365 = vpop.f32.mrb[0].mxu0
        %v3366 = vadd.f32 %v3123, %v3365
        %v3367 = vpop.f32.mrb[0].mxu0
        %3368 = vmatprep.mubr.f32.mxu0 0.0
        %3369 = vmatmul.mubr.f32.gmra.mrb[0].mxu0 %v3196
        %v3370 = vpop.f32.mrb[0].mxu0
        %v3371 = vadd.f32 %v3128, %v3370
        %v3372 = vpop.f32.mrb[0].mxu0
        %3373 = vmatprep.mubr.f32.mxu0 0.0
        %3374 = vmatmul.mubr.f32.gmra.mrb[0].mxu0 %v3199
        %v3375 = vpop.f32.mrb[0].mxu0
        %v3376 = vadd.f32 %v3133, %v3375
        %v3377 = vpop.f32.mrb[0].mxu0
        %3378 = vdwg.mxu0
        %v3379 = vxor.u32 %v3326, 2147483648
        %v3380 = vxor.u32 %v3331, 2147483648
        %v3381 = vxor.u32 %v3336, 2147483648
        %v3382 = vxor.u32 %v3341, 2147483648
        %v3383 = vxor.u32 %v3346, 2147483648
        %v3384 = vxor.u32 %v3351, 2147483648
        %v3385 = vxor.u32 %v3356, 2147483648
        %v3386 = vxor.u32 %v3361, 2147483648
        %v3387 = vxor.u32 %v3366, 2147483648
        %v3388 = vxor.u32 %v3371, 2147483648
        %v3389 = vxor.u32 %v3376, 2147483648
        %v3390 = vmul.f32 %v3379, 1.442695
        %v3391 = vpow.pop %v3390
        %v3392 = vmul.f32 %v3380, 1.442695
        %v3393 = vpow.pop %v3392
        %v3394 = vmul.f32 %v3381, 1.442695
        %v3395 = vpow.pop %v3394
        %v3396 = vmul.f32 %v3382, 1.442695
        %v3397 = vpow.pop %v3396
        %v3398 = vmul.f32 %v3383, 1.442695
        %v3399 = vpow.pop %v3398
        %v3400 = vmul.f32 %v3384, 1.442695
        %v3401 = vpow.pop %v3400
        %v3402 = vmul.f32 %v3385, 1.442695
        %v3403 = vpow.pop %v3402
        %v3404 = vmul.f32 %v3386, 1.442695
        %v3405 = vpow.pop %v3404
        %v3406 = vmul.f32 %v3387, 1.442695
        %v3407 = vpow.pop %v3406
        %v3408 = vmul.f32 %v3388, 1.442695
        %v3409 = vpow.pop %v3408
        %v3410 = vmul.f32 %v3389, 1.442695
        %v3411 = vpow.pop %v3410
        %v3412 = vadd.f32 %v3391, 1.0
        %v3413 = vadd.f32 %v3393, 1.0
        %v3414 = vadd.f32 %v3395, 1.0
        %v3415 = vadd.f32 %v3397, 1.0
        %v3416 = vadd.f32 %v3399, 1.0
        %v3417 = vadd.f32 %v3401, 1.0
        %v3418 = vadd.f32 %v3403, 1.0
        %v3419 = vadd.f32 %v3405, 1.0
        %v3420 = vadd.f32 %v3407, 1.0
        %v3421 = vadd.f32 %v3409, 1.0
        %v3422 = vadd.f32 %v3411, 1.0
        %v3423 = vrcp.pop %v3412
        %v3424 = vmul.f32 1.0, %v3423
        %v3425 = vrcp.pop %v3413
        %v3426 = vmul.f32 1.0, %v3425
        %v3427 = vrcp.pop %v3414
        %v3428 = vmul.f32 1.0, %v3427
        %v3429 = vrcp.pop %v3415
        %v3430 = vmul.f32 1.0, %v3429
        %v3431 = vrcp.pop %v3416
        %v3432 = vmul.f32 1.0, %v3431
        %v3433 = vrcp.pop %v3417
        %v3434 = vmul.f32 1.0, %v3433
        %v3435 = vrcp.pop %v3418
        %v3436 = vmul.f32 1.0, %v3435
        %v3437 = vrcp.pop %v3419
        %v3438 = vmul.f32 1.0, %v3437
        %v3439 = vrcp.pop %v3420
        %v3440 = vmul.f32 1.0, %v3439
        %v3441 = vrcp.pop %v3421
        %v3442 = vmul.f32 1.0, %v3441
        %v3443 = vrcp.pop %v3422
        %v3444 = vmul.f32 1.0, %v3443
        %v3445 = vmul.f32 %v3271, %v3424
        %v3446 = vmul.f32 %v3276, %v3426
        %v3447 = vmul.f32 %v3281, %v3428
        %v3448 = vmul.f32 %v3286, %v3430
        %v3449 = vmul.f32 %v3291, %v3432
        %v3450 = vmul.f32 %v3296, %v3434
        %v3451 = vmul.f32 %v3301, %v3436
        %v3452 = vmul.f32 %v3306, %v3438
        %v3453 = vmul.f32 %v3311, %v3440
        %v3454 = vmul.f32 %v3316, %v3442
        %v3455 = vmul.f32 %v3321, %v3444
        %v3456 = vmul.f32 %v3445, %v3445
        %v3457 = vmul.f32 %v3446, %v3446
        %v3458 = vmul.f32 %v3447, %v3447
        %v3459 = vmul.f32 %v3448, %v3448
        %v3460 = vmul.f32 %v3449, %v3449
        %v3461 = vmul.f32 %v3450, %v3450
        %v3462 = vmul.f32 %v3451, %v3451
        %v3463 = vmul.f32 %v3452, %v3452
        %v3464 = vmul.f32 %v3453, %v3453
        %v3465 = vmul.f32 %v3454, %v3454
        %v3466 = vmul.f32 %v3455, %v3455
        %3467 = vmatprep.subr.mxu0 0.0
        %3468 = vmatpush1.msra.mxu0 %v543
        %3469 = vmatprep.subr.mxu0 0.0
        %3470 = vmatpush1.msra.mxu0 %v544
        %3471 = vmatprep.subr.mxu0 0.0
        %3472 = vmatpush1.msra.mxu0 %v545
        %3473 = vmatprep.subr.mxu0 0.0
        %3474 = vmatpush1.msra.mxu0 %v546
        %3475 = vmatprep.subr.mxu0 0.0
        %3476 = vmatpush1.msra.mxu0 %v547
        %3477 = vmatprep.subr.mxu0 0.0
        %3478 = vmatpush1.msra.mxu0 %v548
        %3479 = vmatprep.subr.mxu0 0.0
        %3480 = vmatpush1.msra.mxu0 %v549
        %3481 = vmatprep.subr.mxu0 0.0
        %3482 = vmatpush1.msra.mxu0 %v550
        %3483 = vmatprep.subr.mxu0 0.0
        %3484 = vmatpush1.msra.mxu0 %v551
        %3485 = vmatprep.subr.mxu0 0.0
        %3486 = vmatpush1.msra.mxu0 %v552
        %3487 = vmatprep.subr.mxu0 0.0
        %3488 = vmatpush1.msra.mxu0 %v553
        %3489 = vmatprep.subr.mxu0 0.0
        %3490 = vmatpush1.msra.mxu0 %v554
        %3491 = vmatprep.subr.mxu0 0.0
        %3492 = vmatpush1.msra.mxu0 %v555
        %3493 = vmatprep.subr.mxu0 0.0
        %3494 = vmatpush1.msra.mxu0 %v556
        %3495 = vmatprep.subr.mxu0 0.0
        %3496 = vmatpush1.msra.mxu0 %v557
        %3497 = vmatprep.subr.mxu0 0.0
        %3498 = vmatpush1.msra.mxu0 %v558
        %3499 = vmatprep.subr.mxu0 0.0
        %3500 = vmatpush1.msra.mxu0 0.0
        %3501 = vmatprep.subr.mxu0 0.0
        %3502 = vmatpush1.msra.mxu0 0.0
        %3503 = vmatprep.subr.mxu0 0.0
        %3504 = vmatpush1.msra.mxu0 0.0
        %3505 = vmatprep.subr.mxu0 0.0
        %3506 = vmatpush1.msra.mxu0 0.0
        %3507 = vmatprep.subr.mxu0 0.0
        %3508 = vmatpush1.msra.mxu0 0.0
        %3509 = vmatprep.subr.mxu0 0.0
        %3510 = vmatpush1.msra.mxu0 0.0
        %3511 = vmatprep.subr.mxu0 0.0
        %3512 = vmatpush1.msra.mxu0 0.0
        %3513 = vmatprep.subr.mxu0 0.0
        %3514 = vmatpush1.msra.mxu0 0.0
        %3515 = vmatprep.subr.mxu0 0.0
        %3516 = vmatpush1.msra.mxu0 0.0
        %3517 = vmatprep.subr.mxu0 0.0
        %3518 = vmatpush1.msra.mxu0 0.0
        %3519 = vmatprep.subr.mxu0 0.0
        %3520 = vmatpush1.msra.mxu0 0.0
        %3521 = vmatprep.subr.mxu0 0.0
        %3522 = vmatpush1.msra.mxu0 0.0
        %3523 = vmatprep.subr.mxu0 0.0
        %3524 = vmatpush1.msra.mxu0 0.0
        %3525 = vmatprep.subr.mxu0 0.0
        %3526 = vmatpush1.msra.mxu0 0.0
        %3527 = vmatprep.subr.mxu0 0.0
        %3528 = vmatpush1.msra.mxu0 0.0
        %3529 = vmatprep.subr.mxu0 0.0
        %3530 = vmatpush1.msra.mxu0 0.0
        %3531 = vmatprep.mubr.f32.mxu0 0.0
        %3532 = vmatmul.mubr.f32.gmra.mrb[0].mxu0 %v3445
        %v3533 = vpop.f32.mrb[0].mxu0
        %v3534 = vadd.f32 0.0, %v3533
        %v3535 = vpop.f32.mrb[0].mxu0
        %3536 = vmatprep.mubr.f32.mxu0 0.0
        %3537 = vmatmul.mubr.f32.gmra.mrb[0].mxu0 %v3446
        %v3538 = vpop.f32.mrb[0].mxu0
        %v3539 = vadd.f32 0.0, %v3538
        %v3540 = vpop.f32.mrb[0].mxu0
        %3541 = vmatprep.mubr.f32.mxu0 0.0
        %3542 = vmatmul.mubr.f32.gmra.mrb[0].mxu0 %v3447
        %v3543 = vpop.f32.mrb[0].mxu0
        %v3544 = vadd.f32 0.0, %v3543
        %v3545 = vpop.f32.mrb[0].mxu0
        %3546 = vmatprep.mubr.f32.mxu0 0.0
        %3547 = vmatmul.mubr.f32.gmra.mrb[0].mxu0 %v3448
        %v3548 = vpop.f32.mrb[0].mxu0
        %v3549 = vadd.f32 0.0, %v3548
        %v3550 = vpop.f32.mrb[0].mxu0
        %3551 = vmatprep.mubr.f32.mxu0 0.0
        %3552 = vmatmul.mubr.f32.gmra.mrb[0].mxu0 %v3449
        %v3553 = vpop.f32.mrb[0].mxu0
        %v3554 = vadd.f32 0.0, %v3553
        %v3555 = vpop.f32.mrb[0].mxu0
        %3556 = vmatprep.mubr.f32.mxu0 0.0
        %3557 = vmatmul.mubr.f32.gmra.mrb[0].mxu0 %v3450
        %v3558 = vpop.f32.mrb[0].mxu0
        %v3559 = vadd.f32 0.0, %v3558
        %v3560 = vpop.f32.mrb[0].mxu0
        %3561 = vmatprep.mubr.f32.mxu0 0.0
        %3562 = vmatmul.mubr.f32.gmra.mrb[0].mxu0 %v3451
        %v3563 = vpop.f32.mrb[0].mxu0
        %v3564 = vadd.f32 0.0, %v3563
        %v3565 = vpop.f32.mrb[0].mxu0
        %3566 = vmatprep.mubr.f32.mxu0 0.0
        %3567 = vmatmul.mubr.f32.gmra.mrb[0].mxu0 %v3452
        %v3568 = vpop.f32.mrb[0].mxu0
        %v3569 = vadd.f32 0.0, %v3568
        %v3570 = vpop.f32.mrb[0].mxu0
        %3571 = vmatprep.mubr.f32.mxu0 0.0
        %3572 = vmatmul.mubr.f32.gmra.mrb[0].mxu0 %v3453
        %v3573 = vpop.f32.mrb[0].mxu0
        %v3574 = vadd.f32 0.0, %v3573
        %v3575 = vpop.f32.mrb[0].mxu0
        %3576 = vmatprep.mubr.f32.mxu0 0.0
        %3577 = vmatmul.mubr.f32.gmra.mrb[0].mxu0 %v3454
        %v3578 = vpop.f32.mrb[0].mxu0
        %v3579 = vadd.f32 0.0, %v3578
        %v3580 = vpop.f32.mrb[0].mxu0
        %3581 = vmatprep.mubr.f32.mxu0 0.0
        %3582 = vmatmul.mubr.f32.gmra.mrb[0].mxu0 %v3455
        %v3583 = vpop.f32.mrb[0].mxu0
        %v3584 = vadd.f32 0.0, %v3583
        %v3585 = vpop.f32.mrb[0].mxu0
        %3586 = vmatprep.mubr.f32.mxu0 0.0
        %3587 = vmatmul.mubr.f32.gmra.mrb[0].mxu0 %v3456
        %v3588 = vpop.f32.mrb[0].mxu0
        %v3589 = vadd.f32 0.0, %v3588
        %v3590 = vpop.f32.mrb[0].mxu0
        %3591 = vmatprep.mubr.f32.mxu0 0.0
        %3592 = vmatmul.mubr.f32.gmra.mrb[0].mxu0 %v3457
        %v3593 = vpop.f32.mrb[0].mxu0
        %v3594 = vadd.f32 0.0, %v3593
        %v3595 = vpop.f32.mrb[0].mxu0
        %3596 = vmatprep.mubr.f32.mxu0 0.0
        %3597 = vmatmul.mubr.f32.gmra.mrb[0].mxu0 %v3458
        %v3598 = vpop.f32.mrb[0].mxu0
        %v3599 = vadd.f32 0.0, %v3598
        %v3600 = vpop.f32.mrb[0].mxu0
        %3601 = vmatprep.mubr.f32.mxu0 0.0
        %3602 = vmatmul.mubr.f32.gmra.mrb[0].mxu0 %v3459
        %v3603 = vpop.f32.mrb[0].mxu0
        %v3604 = vadd.f32 0.0, %v3603
        %v3605 = vpop.f32.mrb[0].mxu0
        %3606 = vmatprep.mubr.f32.mxu0 0.0
        %3607 = vmatmul.mubr.f32.gmra.mrb[0].mxu0 %v3460
        %v3608 = vpop.f32.mrb[0].mxu0
        %v3609 = vadd.f32 0.0, %v3608
        %v3610 = vpop.f32.mrb[0].mxu0
        %3611 = vmatprep.mubr.f32.mxu0 0.0
        %3612 = vmatmul.mubr.f32.gmra.mrb[0].mxu0 %v3461
        %v3613 = vpop.f32.mrb[0].mxu0
        %v3614 = vadd.f32 0.0, %v3613
        %v3615 = vpop.f32.mrb[0].mxu0
        %3616 = vmatprep.mubr.f32.mxu0 0.0
        %3617 = vmatmul.mubr.f32.gmra.mrb[0].mxu0 %v3462
        %v3618 = vpop.f32.mrb[0].mxu0
        %v3619 = vadd.f32 0.0, %v3618
        %v3620 = vpop.f32.mrb[0].mxu0
        %3621 = vmatprep.mubr.f32.mxu0 0.0
        %3622 = vmatmul.mubr.f32.gmra.mrb[0].mxu0 %v3463
        %v3623 = vpop.f32.mrb[0].mxu0
        %v3624 = vadd.f32 0.0, %v3623
        %v3625 = vpop.f32.mrb[0].mxu0
        %3626 = vmatprep.mubr.f32.mxu0 0.0
        %3627 = vmatmul.mubr.f32.gmra.mrb[0].mxu0 %v3464
        %v3628 = vpop.f32.mrb[0].mxu0
        %v3629 = vadd.f32 0.0, %v3628
        %v3630 = vpop.f32.mrb[0].mxu0
        %3631 = vmatprep.mubr.f32.mxu0 0.0
        %3632 = vmatmul.mubr.f32.gmra.mrb[0].mxu0 %v3465
        %v3633 = vpop.f32.mrb[0].mxu0
        %v3634 = vadd.f32 0.0, %v3633
        %v3635 = vpop.f32.mrb[0].mxu0
        %3636 = vmatprep.mubr.f32.mxu0 0.0
        %3637 = vmatmul.mubr.f32.gmra.mrb[0].mxu0 %v3466
        %v3638 = vpop.f32.mrb[0].mxu0
        %v3639 = vadd.f32 0.0, %v3638
        %v3640 = vpop.f32.mrb[0].mxu0
        %3641 = vdwg.mxu0
        %v3642 = vld [vmem:[%s12] sm:$0xff]
        %v3643 = vld [vmem:[%s12 + $0x8] sm:$0xff]
        %v3644 = vld [vmem:[%s12 + $0x10] sm:$0xff]
        %v3645 = vld [vmem:[%s12 + $0x18] sm:$0xff]
        %v3646 = vld [vmem:[%s12 + $0x20] sm:$0xff]
        %v3647 = vld [vmem:[%s12 + $0x28] sm:$0xff]
        %v3648 = vld [vmem:[%s12 + $0x30] sm:$0xff]
        %v3649 = vld [vmem:[%s12 + $0x38] sm:$0xff]
        %v3650 = vld [vmem:[%s12 + $0x40] sm:$0xff]
        %v3651 = vld [vmem:[%s12 + $0x48] sm:$0xff]
        %v3652 = vld [vmem:[%s12 + $0x50] sm:$0xff]
        %vm3653 = vcmask 719872
        %v3655 = vsel %vm3653, %v3642, 0
        %v3658 = vsel %vm3653, %v3643, 0
        %v3661 = vsel %vm3653, %v3644, 0
        %v3664 = vsel %vm3653, %v3645, 0
        %v3667 = vsel %vm3653, %v3646, 0
        %v3670 = vsel %vm3653, %v3647, 0
        %v3673 = vsel %vm3653, %v3648, 0
        %v3676 = vsel %vm3653, %v3649, 0
        %v3679 = vsel %vm3653, %v3650, 0
        %v3682 = vsel %vm3653, %v3651, 0
        %v3685 = vsel %vm3653, %v3652, 0
        %3687 = vmatprep.subr.mxu0 0.0
        %3688 = vmatpush1.msra.mxu0 %v3534
        %3689 = vmatprep.subr.mxu0 0.0
        %3690 = vmatpush1.msra.mxu0 %v3539
        %3691 = vmatprep.subr.mxu0 0.0
        %3692 = vmatpush1.msra.mxu0 %v3544
        %3693 = vmatprep.subr.mxu0 0.0
        %3694 = vmatpush1.msra.mxu0 %v3549
        %3695 = vmatprep.subr.mxu0 0.0
        %3696 = vmatpush1.msra.mxu0 %v3554
        %3697 = vmatprep.subr.mxu0 0.0
        %3698 = vmatpush1.msra.mxu0 %v3559
        %3699 = vmatprep.subr.mxu0 0.0
        %3700 = vmatpush1.msra.mxu0 %v3564
        %3701 = vmatprep.subr.mxu0 0.0
        %3702 = vmatpush1.msra.mxu0 %v3569
        %3703 = vmatprep.subr.mxu0 0.0
        %3704 = vmatpush1.msra.mxu0 %v3574
        %3705 = vmatprep.subr.mxu0 0.0
        %3706 = vmatpush1.msra.mxu0 %v3579
        %3707 = vmatprep.subr.mxu0 0.0
        %3708 = vmatpush1.msra.mxu0 %v3584
        %3709 = vmatprep.subr.mxu0 0.0
        %3710 = vmatpush1.msra.mxu0 0.0
        %3711 = vmatprep.subr.mxu0 0.0
        %3712 = vmatpush1.msra.mxu0 0.0
        %3713 = vmatprep.subr.mxu0 0.0
        %3714 = vmatpush1.msra.mxu0 0.0
        %3715 = vmatprep.subr.mxu0 0.0
        %3716 = vmatpush1.msra.mxu0 0.0
        %3717 = vmatprep.subr.mxu0 0.0
        %3718 = vmatpush1.msra.mxu0 0.0
        %3719 = vmatprep.subr.mxu0 0.0
        %3720 = vmatpush1.msra.mxu0 0.0
        %3721 = vmatprep.subr.mxu0 0.0
        %3722 = vmatpush1.msra.mxu0 0.0
        %3723 = vmatprep.subr.mxu0 0.0
        %3724 = vmatpush1.msra.mxu0 0.0
        %3725 = vmatprep.subr.mxu0 0.0
        %3726 = vmatpush1.msra.mxu0 0.0
        %3727 = vmatprep.subr.mxu0 0.0
        %3728 = vmatpush1.msra.mxu0 0.0
        %3729 = vmatprep.subr.mxu0 0.0
        %3730 = vmatpush1.msra.mxu0 0.0
        %3731 = vmatprep.subr.mxu0 0.0
        %3732 = vmatpush1.msra.mxu0 0.0
        %3733 = vmatprep.subr.mxu0 0.0
        %3734 = vmatpush1.msra.mxu0 0.0
        %3735 = vmatprep.subr.mxu0 0.0
        %3736 = vmatpush1.msra.mxu0 0.0
        %3737 = vmatprep.subr.mxu0 0.0
        %3738 = vmatpush1.msra.mxu0 0.0
        %3739 = vmatprep.subr.mxu0 0.0
        %3740 = vmatpush1.msra.mxu0 0.0
        %3741 = vmatprep.subr.mxu0 0.0
        %3742 = vmatpush1.msra.mxu0 0.0
        %3743 = vmatprep.subr.mxu0 0.0
        %3744 = vmatpush1.msra.mxu0 0.0
        %3745 = vmatprep.subr.mxu0 0.0
        %3746 = vmatpush1.msra.mxu0 0.0
        %3747 = vmatprep.subr.mxu0 0.0
        %3748 = vmatpush1.msra.mxu0 0.0
        %3749 = vmatprep.subr.mxu0 0.0
        %3750 = vmatpush1.msra.mxu0 0.0
        %3751 = vmatprep.mubr.f32.mxu0 0.0
        %3752 = vmatmul.mubr.f32.gmra.mrb[0].mxu0 %v3655
        %v3753 = vpop.f32.mrb[0].mxu0
        %v3754 = vadd.f32 0.0, %v3753
        %v3755 = vpop.f32.mrb[0].mxu0
        %3756 = vmatprep.mubr.f32.mxu0 0.0
        %3757 = vmatmul.mubr.f32.gmra.mrb[0].mxu0 %v3658
        %v3758 = vpop.f32.mrb[0].mxu0
        %v3759 = vadd.f32 0.0, %v3758
        %v3760 = vpop.f32.mrb[0].mxu0
        %3761 = vmatprep.mubr.f32.mxu0 0.0
        %3762 = vmatmul.mubr.f32.gmra.mrb[0].mxu0 %v3661
        %v3763 = vpop.f32.mrb[0].mxu0
        %v3764 = vadd.f32 0.0, %v3763
        %v3765 = vpop.f32.mrb[0].mxu0
        %3766 = vmatprep.mubr.f32.mxu0 0.0
        %3767 = vmatmul.mubr.f32.gmra.mrb[0].mxu0 %v3664
        %v3768 = vpop.f32.mrb[0].mxu0
        %v3769 = vadd.f32 0.0, %v3768
        %v3770 = vpop.f32.mrb[0].mxu0
        %3771 = vmatprep.mubr.f32.mxu0 0.0
        %3772 = vmatmul.mubr.f32.gmra.mrb[0].mxu0 %v3667
        %v3773 = vpop.f32.mrb[0].mxu0
        %v3774 = vadd.f32 0.0, %v3773
        %v3775 = vpop.f32.mrb[0].mxu0
        %3776 = vmatprep.mubr.f32.mxu0 0.0
        %3777 = vmatmul.mubr.f32.gmra.mrb[0].mxu0 %v3670
        %v3778 = vpop.f32.mrb[0].mxu0
        %v3779 = vadd.f32 0.0, %v3778
        %v3780 = vpop.f32.mrb[0].mxu0
        %3781 = vmatprep.mubr.f32.mxu0 0.0
        %3782 = vmatmul.mubr.f32.gmra.mrb[0].mxu0 %v3673
        %v3783 = vpop.f32.mrb[0].mxu0
        %v3784 = vadd.f32 0.0, %v3783
        %v3785 = vpop.f32.mrb[0].mxu0
        %3786 = vmatprep.mubr.f32.mxu0 0.0
        %3787 = vmatmul.mubr.f32.gmra.mrb[0].mxu0 %v3676
        %v3788 = vpop.f32.mrb[0].mxu0
        %v3789 = vadd.f32 0.0, %v3788
        %v3790 = vpop.f32.mrb[0].mxu0
        %3791 = vmatprep.mubr.f32.mxu0 0.0
        %3792 = vmatmul.mubr.f32.gmra.mrb[0].mxu0 %v3679
        %v3793 = vpop.f32.mrb[0].mxu0
        %v3794 = vadd.f32 0.0, %v3793
        %v3795 = vpop.f32.mrb[0].mxu0
        %3796 = vmatprep.mubr.f32.mxu0 0.0
        %3797 = vmatmul.mubr.f32.gmra.mrb[0].mxu0 %v3682
        %v3798 = vpop.f32.mrb[0].mxu0
        %v3799 = vadd.f32 0.0, %v3798
        %v3800 = vpop.f32.mrb[0].mxu0
        %3801 = vmatprep.mubr.f32.mxu0 0.0
        %3802 = vmatmul.mubr.f32.gmra.mrb[0].mxu0 %v3685
        %v3803 = vpop.f32.mrb[0].mxu0
        %v3804 = vadd.f32 0.0, %v3803
        %v3805 = vpop.f32.mrb[0].mxu0
        %3806 = vdwg.mxu0
        %3807 = vmatprep.subr.mxu0 0.0
        %3808 = vmatpush1.msra.mxu0 %v3589
        %3809 = vmatprep.subr.mxu0 0.0
        %3810 = vmatpush1.msra.mxu0 %v3594
        %3811 = vmatprep.subr.mxu0 0.0
        %3812 = vmatpush1.msra.mxu0 %v3599
        %3813 = vmatprep.subr.mxu0 0.0
        %3814 = vmatpush1.msra.mxu0 %v3604
        %3815 = vmatprep.subr.mxu0 0.0
        %3816 = vmatpush1.msra.mxu0 %v3609
        %3817 = vmatprep.subr.mxu0 0.0
        %3818 = vmatpush1.msra.mxu0 %v3614
        %3819 = vmatprep.subr.mxu0 0.0
        %3820 = vmatpush1.msra.mxu0 %v3619
        %3821 = vmatprep.subr.mxu0 0.0
        %3822 = vmatpush1.msra.mxu0 %v3624
        %3823 = vmatprep.subr.mxu0 0.0
        %3824 = vmatpush1.msra.mxu0 %v3629
        %3825 = vmatprep.subr.mxu0 0.0
        %3826 = vmatpush1.msra.mxu0 %v3634
        %3827 = vmatprep.subr.mxu0 0.0
        %3828 = vmatpush1.msra.mxu0 %v3639
        %3829 = vmatprep.subr.mxu0 0.0
        %3830 = vmatpush1.msra.mxu0 0.0
        %3831 = vmatprep.subr.mxu0 0.0
        %3832 = vmatpush1.msra.mxu0 0.0
        %3833 = vmatprep.subr.mxu0 0.0
        %3834 = vmatpush1.msra.mxu0 0.0
        %3835 = vmatprep.subr.mxu0 0.0
        %3836 = vmatpush1.msra.mxu0 0.0
        %3837 = vmatprep.subr.mxu0 0.0
        %3838 = vmatpush1.msra.mxu0 0.0
        %3839 = vmatprep.subr.mxu0 0.0
        %3840 = vmatpush1.msra.mxu0 0.0
        %3841 = vmatprep.subr.mxu0 0.0
        %3842 = vmatpush1.msra.mxu0 0.0
        %3843 = vmatprep.subr.mxu0 0.0
        %3844 = vmatpush1.msra.mxu0 0.0
        %3845 = vmatprep.subr.mxu0 0.0
        %3846 = vmatpush1.msra.mxu0 0.0
        %3847 = vmatprep.subr.mxu0 0.0
        %3848 = vmatpush1.msra.mxu0 0.0
        %3849 = vmatprep.subr.mxu0 0.0
        %3850 = vmatpush1.msra.mxu0 0.0
        %3851 = vmatprep.subr.mxu0 0.0
        %3852 = vmatpush1.msra.mxu0 0.0
        %3853 = vmatprep.subr.mxu0 0.0
        %3854 = vmatpush1.msra.mxu0 0.0
        %3855 = vmatprep.subr.mxu0 0.0
        %3856 = vmatpush1.msra.mxu0 0.0
        %3857 = vmatprep.subr.mxu0 0.0
        %3858 = vmatpush1.msra.mxu0 0.0
        %3859 = vmatprep.subr.mxu0 0.0
        %3860 = vmatpush1.msra.mxu0 0.0
        %3861 = vmatprep.subr.mxu0 0.0
        %3862 = vmatpush1.msra.mxu0 0.0
        %3863 = vmatprep.subr.mxu0 0.0
        %3864 = vmatpush1.msra.mxu0 0.0
        %3865 = vmatprep.subr.mxu0 0.0
        %3866 = vmatpush1.msra.mxu0 0.0
        %3867 = vmatprep.subr.mxu0 0.0
        %3868 = vmatpush1.msra.mxu0 0.0
        %3869 = vmatprep.subr.mxu0 0.0
        %3870 = vmatpush1.msra.mxu0 0.0
        %3871 = vmatprep.mubr.f32.mxu0 0.0
        %3872 = vmatmul.mubr.f32.gmra.mrb[0].mxu0 %v3655
        %v3873 = vpop.f32.mrb[0].mxu0
        %v3874 = vadd.f32 0.0, %v3873
        %v3875 = vpop.f32.mrb[0].mxu0
        %3876 = vmatprep.mubr.f32.mxu0 0.0
        %3877 = vmatmul.mubr.f32.gmra.mrb[0].mxu0 %v3658
        %v3878 = vpop.f32.mrb[0].mxu0
        %v3879 = vadd.f32 0.0, %v3878
        %v3880 = vpop.f32.mrb[0].mxu0
        %3881 = vmatprep.mubr.f32.mxu0 0.0
        %3882 = vmatmul.mubr.f32.gmra.mrb[0].mxu0 %v3661
        %v3883 = vpop.f32.mrb[0].mxu0
        %v3884 = vadd.f32 0.0, %v3883
        %v3885 = vpop.f32.mrb[0].mxu0
        %3886 = vmatprep.mubr.f32.mxu0 0.0
        %3887 = vmatmul.mubr.f32.gmra.mrb[0].mxu0 %v3664
        %v3888 = vpop.f32.mrb[0].mxu0
        %v3889 = vadd.f32 0.0, %v3888
        %v3890 = vpop.f32.mrb[0].mxu0
        %3891 = vmatprep.mubr.f32.mxu0 0.0
        %3892 = vmatmul.mubr.f32.gmra.mrb[0].mxu0 %v3667
        %v3893 = vpop.f32.mrb[0].mxu0
        %v3894 = vadd.f32 0.0, %v3893
        %v3895 = vpop.f32.mrb[0].mxu0
        %3896 = vmatprep.mubr.f32.mxu0 0.0
        %3897 = vmatmul.mubr.f32.gmra.mrb[0].mxu0 %v3670
        %v3898 = vpop.f32.mrb[0].mxu0
        %v3899 = vadd.f32 0.0, %v3898
        %v3900 = vpop.f32.mrb[0].mxu0
        %3901 = vmatprep.mubr.f32.mxu0 0.0
        %3902 = vmatmul.mubr.f32.gmra.mrb[0].mxu0 %v3673
        %v3903 = vpop.f32.mrb[0].mxu0
        %v3904 = vadd.f32 0.0, %v3903
        %v3905 = vpop.f32.mrb[0].mxu0
        %3906 = vmatprep.mubr.f32.mxu0 0.0
        %3907 = vmatmul.mubr.f32.gmra.mrb[0].mxu0 %v3676
        %v3908 = vpop.f32.mrb[0].mxu0
        %v3909 = vadd.f32 0.0, %v3908
        %v3910 = vpop.f32.mrb[0].mxu0
        %3911 = vmatprep.mubr.f32.mxu0 0.0
        %3912 = vmatmul.mubr.f32.gmra.mrb[0].mxu0 %v3679
        %v3913 = vpop.f32.mrb[0].mxu0
        %v3914 = vadd.f32 0.0, %v3913
        %v3915 = vpop.f32.mrb[0].mxu0
        %3916 = vmatprep.mubr.f32.mxu0 0.0
        %3917 = vmatmul.mubr.f32.gmra.mrb[0].mxu0 %v3682
        %v3918 = vpop.f32.mrb[0].mxu0
        %v3919 = vadd.f32 0.0, %v3918
        %v3920 = vpop.f32.mrb[0].mxu0
        %3921 = vmatprep.mubr.f32.mxu0 0.0
        %3922 = vmatmul.mubr.f32.gmra.mrb[0].mxu0 %v3685
        %v3923 = vpop.f32.mrb[0].mxu0
        %v3924 = vadd.f32 0.0, %v3923
        %v3925 = vpop.f32.mrb[0].mxu0
        %3926 = vdwg.mxu0
        %v3927 = vmul.f32 %v3754, %v3754
        %v3928 = vmul.f32 %v3759, %v3759
        %v3929 = vmul.f32 %v3764, %v3764
        %v3930 = vmul.f32 %v3769, %v3769
        %v3931 = vmul.f32 %v3774, %v3774
        %v3932 = vmul.f32 %v3779, %v3779
        %v3933 = vmul.f32 %v3784, %v3784
        %v3934 = vmul.f32 %v3789, %v3789
        %v3935 = vmul.f32 %v3794, %v3794
        %v3936 = vmul.f32 %v3799, %v3799
        %v3937 = vmul.f32 %v3804, %v3804
        %v3938 = vsub.f32 %v3874, %v3927
        %v3939 = vsub.f32 %v3879, %v3928
        %v3940 = vsub.f32 %v3884, %v3929
        %v3941 = vsub.f32 %v3889, %v3930
        %v3942 = vsub.f32 %v3894, %v3931
        %v3943 = vsub.f32 %v3899, %v3932
        %v3944 = vsub.f32 %v3904, %v3933
        %v3945 = vsub.f32 %v3909, %v3934
        %v3946 = vsub.f32 %v3914, %v3935
        %v3947 = vsub.f32 %v3919, %v3936
        %v3948 = vsub.f32 %v3924, %v3937
        %v3949 = vmax.f32 %v3938, 0.0
        %v3950 = vmax.f32 %v3939, 0.0
        %v3951 = vmax.f32 %v3940, 0.0
        %v3952 = vmax.f32 %v3941, 0.0
        %v3953 = vmax.f32 %v3942, 0.0
        %v3954 = vmax.f32 %v3943, 0.0
        %v3955 = vmax.f32 %v3944, 0.0
        %v3956 = vmax.f32 %v3945, 0.0
        %v3957 = vmax.f32 %v3946, 0.0
        %v3958 = vmax.f32 %v3947, 0.0
        %v3959 = vmax.f32 %v3948, 0.0
        %v3960 = vsub.f32 %v3445, %v3754
        %v3961 = vsub.f32 %v3446, %v3759
        %v3962 = vsub.f32 %v3447, %v3764
        %v3963 = vsub.f32 %v3448, %v3769
        %v3964 = vsub.f32 %v3449, %v3774
        %v3965 = vsub.f32 %v3450, %v3779
        %v3966 = vsub.f32 %v3451, %v3784
        %v3967 = vsub.f32 %v3452, %v3789
        %v3968 = vsub.f32 %v3453, %v3794
        %v3969 = vsub.f32 %v3454, %v3799
        %v3970 = vsub.f32 %v3455, %v3804
        %v3971 = vadd.f32 %v3949, 1e-05
        %v3972 = vadd.f32 %v3950, 1e-05
        %v3973 = vadd.f32 %v3951, 1e-05
        %v3974 = vadd.f32 %v3952, 1e-05
        %v3975 = vadd.f32 %v3953, 1e-05
        %v3976 = vadd.f32 %v3954, 1e-05
        %v3977 = vadd.f32 %v3955, 1e-05
        %v3978 = vadd.f32 %v3956, 1e-05
        %v3979 = vadd.f32 %v3957, 1e-05
        %v3980 = vadd.f32 %v3958, 1e-05
        %v3981 = vadd.f32 %v3959, 1e-05
        %v3982 = vrsqrt.pop %v3971
        %v3983 = vrsqrt.pop %v3972
        %v3984 = vrsqrt.pop %v3973
        %v3985 = vrsqrt.pop %v3974
        %v3986 = vrsqrt.pop %v3975
        %v3987 = vrsqrt.pop %v3976
        %v3988 = vrsqrt.pop %v3977
        %v3989 = vrsqrt.pop %v3978
        %v3990 = vrsqrt.pop %v3979
        %v3991 = vrsqrt.pop %v3980
        %v3992 = vrsqrt.pop %v3981
        %v3993 = vmul.f32 %v3960, %v3982
        %v3994 = vmul.f32 %v3961, %v3983
        %v3995 = vmul.f32 %v3962, %v3984
        %v3996 = vmul.f32 %v3963, %v3985
        %v3997 = vmul.f32 %v3964, %v3986
        %v3998 = vmul.f32 %v3965, %v3987
        %v3999 = vmul.f32 %v3966, %v3988
        %v4000 = vmul.f32 %v3967, %v3989
        %v4001 = vmul.f32 %v3968, %v3990
        %v4002 = vmul.f32 %v3969, %v3991
        %v4003 = vmul.f32 %v3970, %v3992
        %v4004 = vld [vmem:[%s13] sm:$0xff]
        %v4005 = vld [vmem:[%s13 + $0x8] sm:$0xff]
        %v4006 = vld [vmem:[%s13 + $0x10] sm:$0xff]
        %v4007 = vld [vmem:[%s13 + $0x18] sm:$0xff]
        %v4008 = vld [vmem:[%s13 + $0x20] sm:$0xff]
        %v4009 = vld [vmem:[%s13 + $0x28] sm:$0xff]
        %v4010 = vld [vmem:[%s13 + $0x30] sm:$0xff]
        %v4011 = vld [vmem:[%s13 + $0x38] sm:$0xff]
        %v4012 = vld [vmem:[%s13 + $0x40] sm:$0xff]
        %v4013 = vld [vmem:[%s13 + $0x48] sm:$0xff]
        %v4014 = vld [vmem:[%s13 + $0x50] sm:$0xff]
        %v4015 = vmul.f32 %v3993, %v4004
        %v4016 = vmul.f32 %v3994, %v4005
        %v4017 = vmul.f32 %v3995, %v4006
        %v4018 = vmul.f32 %v3996, %v4007
        %v4019 = vmul.f32 %v3997, %v4008
        %v4020 = vmul.f32 %v3998, %v4009
        %v4021 = vmul.f32 %v3999, %v4010
        %v4022 = vmul.f32 %v4000, %v4011
        %v4023 = vmul.f32 %v4001, %v4012
        %v4024 = vmul.f32 %v4002, %v4013
        %v4025 = vmul.f32 %v4003, %v4014
        %v4026 = vld [vmem:[%s14] sm:$0xff]
        %v4027 = vld [vmem:[%s14 + $0x8] sm:$0xff]
        %v4028 = vld [vmem:[%s14 + $0x10] sm:$0xff]
        %v4029 = vld [vmem:[%s14 + $0x18] sm:$0xff]
        %v4030 = vld [vmem:[%s14 + $0x20] sm:$0xff]
        %v4031 = vld [vmem:[%s14 + $0x28] sm:$0xff]
        %v4032 = vld [vmem:[%s14 + $0x30] sm:$0xff]
        %v4033 = vld [vmem:[%s14 + $0x38] sm:$0xff]
        %v4034 = vld [vmem:[%s14 + $0x40] sm:$0xff]
        %v4035 = vld [vmem:[%s14 + $0x48] sm:$0xff]
        %v4036 = vld [vmem:[%s14 + $0x50] sm:$0xff]
        %v4037 = vadd.f32 %v4015, %v4026
        %v4038 = vadd.f32 %v4016, %v4027
        %v4039 = vadd.f32 %v4017, %v4028
        %v4040 = vadd.f32 %v4018, %v4029
        %v4041 = vadd.f32 %v4019, %v4030
        %v4042 = vadd.f32 %v4020, %v4031
        %v4043 = vadd.f32 %v4021, %v4032
        %v4044 = vadd.f32 %v4022, %v4033
        %v4045 = vadd.f32 %v4023, %v4034
        %v4046 = vadd.f32 %v4024, %v4035
        %v4047 = vadd.f32 %v4025, %v4036
        %4048 = vst [vmem:[%s538] sm:$0xff] %v4037
        %4049 = vst [vmem:[%s538 + $0x8] sm:$0xff] %v4038
        %4050 = vst [vmem:[%s538 + $0x10] sm:$0xff] %v4039
        %4051 = vst [vmem:[%s538 + $0x18] sm:$0xff] %v4040
        %4052 = vst [vmem:[%s538 + $0x20] sm:$0xff] %v4041
        %4053 = vst [vmem:[%s538 + $0x28] sm:$0xff] %v4042
        %4054 = vst [vmem:[%s538 + $0x30] sm:$0xff] %v4043
        %4055 = vst [vmem:[%s538 + $0x38] sm:$0xff] %v4044
        %4056 = vst [vmem:[%s538 + $0x40] sm:$0xff] %v4045
        %4057 = vst [vmem:[%s538 + $0x48] sm:$0xff] %v4046
        %4058 = vst [vmem:[%s538 + $0x50] sm:$0xff] %v4047
        %s4059 = sand.u32 %s357, 1
        %s4060 = scalar_lea.sflag [#allocation4], %s4059
        %s4061 = sand.u32 %s357, 1
        %s4062 = smul.addr %s4061, 88
        %s4063 = scalar_lea.vmem [#allocation3], %s4062
        // Predicated region
        $region119: #{tpu_custom_call.1} parent=113 // pred_check
          %p4064 = pneg %p367
        $region120: #{tpu_custom_call.1} parent=113 // pred_check_branch
          %4066 = sbr.rel (%p4064) target = $region122
        $region121: #{tpu_custom_call.1} parent=113 // pred_region
          %s4068 = ssub.s32 1408, 1408
          %4069 = vsyncadd %s4060, %s4068
          %s4070 = smul.addr %s29, 128
          %s4071 = scalar_lea.hbm %s15, %s4070
          %s4072 = sshll.u32 %s4063, 4
          %s4073 = int_to_ptr.vmem [resolvable:$true] %s4072
          %4078 = dma.vmem_to_hbm [thread:$0]  %s4073, 1408, %s4071, %s4060, 128, 256, 8
        $region122: #{tpu_custom_call.1} parent=113 // pred_fallthru
          _
      $region114: #{tpu_custom_call.1} parent=5 // pred_fallthru
        _
      %p4079 = scmp.le.s32.totalorder 2, %s24
      // Predicated region
      $region123: #{tpu_custom_call.1} parent=5 // pred_check
        %p4080 = pneg %p4079
      $region124: #{tpu_custom_call.1} parent=5 // pred_check_branch
        %4082 = sbr.rel (%p4080) target = $region126
      $region125: #{tpu_custom_call.1} parent=5 // pred_region
        %s4083 = ssub.s32 %s24, 2
        // Predicated region
        $region127: #{tpu_custom_call.1} parent=125 // pred_check
          %p4084 = pneg %p373
        $region128: #{tpu_custom_call.1} parent=125 // pred_check_branch
          %4086 = sbr.rel (%p4084) target = $region130
        $region129: #{tpu_custom_call.1} parent=125 // pred_region
          %s4087 = sand.u32 %s358, 1
          %s4088 = scalar_lea.sflag [#allocation4], %s4087
          %s4089 = sand.u32 %s358, 1
          %s4090 = smul.addr %s4089, 88
          %s4091 = scalar_lea.vmem [#allocation3], %s4090
          %4092 = dma.done %s4088, 1408
        $region130: #{tpu_custom_call.1} parent=125 // pred_fallthru
          _
      $region126: #{tpu_custom_call.1} parent=5 // pred_fallthru
        _
    $region6: #{tpu_custom_call.1} parent=1 // loop_footer
      %s28 = sadd.s32 1, %s24
    $region7: #{tpu_custom_call.1} parent=1 // loop_footer_branch
      %23 = sbr.rel target = $region3
    $region8: #{tpu_custom_call.1} parent=1 // loop_exit
      _
    %4093 = vsyncpa [#allocation4], 1
    %s4094 = scalar_lea.sflag [#allocation4], 1
    %4095 = vsyncpa %s4094, 1

</llo_original>
